<compile_context>
chip_gen: v7x
topology: tpu7x:2x2x1
jax: 0.10.0
libtpu: 0.0.40
codegen_flags: <defaults>
</compile_context>

<pallas_src>
import math
from functools import partial

import jax
import jax.numpy as jnp
from jax.experimental import pallas as pl
from jax.experimental.pallas import tpu as pltpu

DIM = 32          # model dim
NUM_HEADS = 4
HEAD_DIM = DIM // NUM_HEADS
FF = 128          # dim_feedforward (fixed to 128 in the module)
NUM_LAYERS = 2    # trans_layer_num
LN_EPS = 1e-5     # PyTorch default layer_norm_eps
NEG_BIG = -1e9    # additive mask value (stand-in for -inf)
VEC_LANES = 128   # each per-layer bias / LN vector padded to one vreg row


def _layernorm(x, g, b):
    mu = jnp.mean(x, axis=-1, keepdims=True)
    var = jnp.mean((x - mu) ** 2, axis=-1, keepdims=True)
    return (x - mu) * jax.lax.rsqrt(var + LN_EPS) * g + b


def fused_encoder_kernel(x_ref, mask_ref, wa_ref, w2_ref, vec_ref, out_ref,
                         *, seq_len):
    # x_ref: (T, D) tokens; mask_ref: (1, T) float, 1.0 = padded key.
    # wa_ref:  (L, D, 4D+FF) matrix slab  [w_qv | Wk | Wo^T | W1^T]
    # w2_ref:  (L, FF, D)    linear2 (pre-transposed)
    # vec_ref: (L, 8, 128)   [b_qv, bo, ln1w, ln1b, b1, b2, ln2w, ln2b] (lane-padded)
    x = x_ref[...].astype(jnp.float32)                      # (T, D)
    T, D = x.shape

    # (T, T) additive attention bias built in-kernel:
    # 0 for valid same-batch keys, -1e9 for padded keys or cross-batch pairs.
    inv_s = jnp.float32(1.0 / seq_len)
    row_i = jax.lax.broadcasted_iota(jnp.int32, (T, T), 0).astype(jnp.float32)
    col_i = jax.lax.broadcasted_iota(jnp.int32, (T, T), 1).astype(jnp.float32)
    row_b = jnp.floor((row_i + 0.5) * inv_s)
    col_b = jnp.floor((col_i + 0.5) * inv_s)
    key_pad = mask_ref[...]                                 # (1, T)
    bias = jnp.where(row_b == col_b, key_pad * jnp.float32(NEG_BIG),
                     jnp.float32(NEG_BIG))                  # (T, T)

    num_layers = wa_ref.shape[0]                            # static
    for li in range(num_layers):                            # static unroll over layers
        A = wa_ref[li]                                      # (D, 4D+FF)
        w2 = w2_ref[li]                                     # (FF, D)
        vec = vec_ref[li]                                   # (8, VEC_LANES)

        w_qv = A[:, 0:2 * D]                                # (D, 2D): [scaled Wq^T | Wv^T]
        wk   = A[:, 2 * D:3 * D]                            # (D, D) torch layout (out, in)
        wo   = A[:, 3 * D:4 * D]                            # (D, D) = out_proj.weight^T
        w1   = A[:, 4 * D:4 * D + FF]                       # (D, FF)

        b_qv = vec[0:1, 0:2 * D]
        bo   = vec[1:2, 0:D]
        ln1w = vec[2:3, 0:D]
        ln1b = vec[3:4, 0:D]
        b1   = vec[4:5, 0:FF]
        b2   = vec[5:6, 0:D]
        ln2w = vec[6:7, 0:D]
        ln2b = vec[7:8, 0:D]

        # ---- multi-head self-attention ----
        # Fused Q,V projection (scale pre-folded into the Q half), single MXU pass.
        qv = jnp.dot(x, w_qv, preferred_element_type=jnp.float32) + b_qv   # (T, 2D)
        # K^T produced directly in (D, T) layout (key bias cancels in softmax).
        kT = jnp.dot(wk, x.T, preferred_element_type=jnp.float32)          # (D, T)

        attn = jnp.zeros((T, D), jnp.float32)
        for h in range(NUM_HEADS):                          # static unroll over heads
            q_h = qv[:, h * HEAD_DIM:(h + 1) * HEAD_DIM]              # (T, HD)
            v_h = qv[:, D + h * HEAD_DIM:D + (h + 1) * HEAD_DIM]      # (T, HD)
            kT_h = kT[h * HEAD_DIM:(h + 1) * HEAD_DIM, :]             # (HD, T)

            s = jnp.dot(q_h, kT_h, preferred_element_type=jnp.float32) + bias
            s = s - jnp.max(s, axis=-1, keepdims=True)
            e = jnp.exp(s)
            p = e / jnp.sum(e, axis=-1, keepdims=True)
            ctx = jnp.dot(p, v_h, preferred_element_type=jnp.float32)      # (T, HD)
            # per-head out-projection accumulated into (T, D) (folds the head concat)
            attn = attn + jnp.dot(ctx, wo[h * HEAD_DIM:(h + 1) * HEAD_DIM, :],
                                  preferred_element_type=jnp.float32)
        attn = attn + bo

        # TODO(synk): dropout (p=0.4) omitted -- eval-mode (deterministic) forward.
        y = _layernorm(x + attn, ln1w, ln1b)                # post-norm 1

        # ---- feed-forward: linear1 -> ReLU -> linear2 (weights pre-transposed) ----
        h1 = jnp.maximum(
            jnp.dot(y, w1, preferred_element_type=jnp.float32) + b1, 0.0)
        h2 = jnp.dot(h1, w2, preferred_element_type=jnp.float32) + b2
        x = _layernorm(y + h2, ln2w, ln2b)                  # post-norm 2

    out_ref[...] = x.astype(out_ref.dtype)


def self_att_forward(fea, mask_bool, packed):
    """SelfAtt.forward: fea (B, S, D), mask_bool (B, S) with True = padded key."""
    B, S, D = fea.shape
    T = B * S
    x2 = fea.reshape(T, D)
    # Only host-side prep: one tiny dtype cast (the (T,T) bias is built in-kernel).
    mask_f = mask_bool.reshape(1, T).astype(jnp.float32)

    args = (x2, mask_f, packed["wa"], packed["w2"], packed["vec"])
    out2 = pl.pallas_call(
        partial(fused_encoder_kernel, seq_len=S),
        out_shape=jax.ShapeDtypeStruct((T, D), fea.dtype),
        in_specs=[pl.BlockSpec(memory_space=pltpu.MemorySpace.VMEM)] * len(args),
        out_specs=pl.BlockSpec(memory_space=pltpu.MemorySpace.VMEM),
    )(*args)
    return out2.reshape(B, S, D)


def init_params(key, num_layers=NUM_LAYERS):
    """Deterministic synthetic params in PyTorch nn.TransformerEncoderLayer layout."""
    layers = []
    s = 0.05
    for li in range(num_layers):
        ks = jax.random.split(jax.random.fold_in(key, li), 8)
        layers.append(dict(
            in_proj_weight=jax.random.normal(ks[0], (3 * DIM, DIM), jnp.float32) * s,
            in_proj_bias=jax.random.normal(ks[1], (3 * DIM,), jnp.float32) * s,
            out_proj_weight=jax.random.normal(ks[2], (DIM, DIM), jnp.float32) * s,
            out_proj_bias=jax.random.normal(ks[3], (DIM,), jnp.float32) * s,
            ln1_weight=jnp.ones((DIM,), jnp.float32),
            ln1_bias=jnp.zeros((DIM,), jnp.float32),
            linear1_weight=jax.random.normal(ks[4], (FF, DIM), jnp.float32) * s,
            linear1_bias=jax.random.normal(ks[5], (FF,), jnp.float32) * s,
            linear2_weight=jax.random.normal(ks[6], (DIM, FF), jnp.float32) * s,
            linear2_bias=jax.random.normal(ks[7], (DIM,), jnp.float32) * s,
            ln2_weight=jnp.ones((DIM,), jnp.float32),
            ln2_bias=jnp.zeros((DIM,), jnp.float32),
        ))
    return layers


def pack_params(layers):
    """One-time host prep: fold the attention scale into Q, drop the (softmax-
    cancelling) key bias, pre-transpose everything, and consolidate each layer's
    tensors into 3 lane-dense slabs stacked over layers."""
    scale = 1.0 / math.sqrt(HEAD_DIM)
    wa, w2s, vecs = [], [], []

    def row(v):
        v = jnp.asarray(v, jnp.float32).reshape(1, -1)
        return jnp.pad(v, ((0, 0), (0, VEC_LANES - v.shape[1])))

    for p in layers:
        W, b = p["in_proj_weight"], p["in_proj_bias"]
        Wq, Wk, Wv = W[:DIM], W[DIM:2 * DIM], W[2 * DIM:]
        bq, bv = b[:DIM], b[2 * DIM:]          # key bias dropped (cancels in softmax)

        w_qv = jnp.concatenate([Wq.T * scale, Wv.T], axis=1)            # (D, 2D)
        wo = p["out_proj_weight"].T                                     # (D, D)
        w1 = p["linear1_weight"].T                                      # (D, FF)
        wa.append(jnp.concatenate([w_qv, Wk, wo, w1], axis=1))          # (D, 4D+FF)
        w2s.append(p["linear2_weight"].T)                               # (FF, D)

        b_qv = jnp.concatenate([bq * scale, bv])                        # (2D,)
        vecs.append(jnp.concatenate([
            row(b_qv), row(p["out_proj_bias"]),
            row(p["ln1_weight"]), row(p["ln1_bias"]),
            row(p["linear1_bias"]), row(p["linear2_bias"]),
            row(p["ln2_weight"]), row(p["ln2_bias"]),
        ], axis=0))                                                     # (8, 128)

    return dict(wa=jnp.stack(wa, 0),     # (L, 32, 256)
                w2=jnp.stack(w2s, 0),    # (L, 128, 32)
                vec=jnp.stack(vecs, 0))  # (L, 8, 128)


if __name__ == "__main__":
    key = jax.random.PRNGKey(0)
    B, S = 2, 8
    fea = jax.random.normal(jax.random.fold_in(key, 100), (B, S, DIM), jnp.float32)
    # src_key_padding_mask: True = padded (ignored) key positions
    mask = jnp.zeros((B, S), dtype=jnp.bool_).at[1, 6:].set(True)

    params = init_params(key)
    packed = pack_params(params)
    out = self_att_forward(fea, mask, packed)
    jax.block_until_ready(out)
    assert out.shape == (B, S, DIM)
    assert bool(jnp.all(jnp.isfinite(out)))
    print("KERNEL_OK")
</pallas_src>

<mosaic_0001>
module attributes {stable_mosaic.version = 11 : i64} {
  func.func @fused_encoder_kernel(%arg0: memref<16x32xf32, #tpu.memory_space<vmem>>, %arg1: memref<1x16xf32, #tpu.memory_space<vmem>>, %arg2: memref<2x32x256xf32, #tpu.memory_space<vmem>>, %arg3: memref<2x128x32xf32, #tpu.memory_space<vmem>>, %arg4: memref<2x8x128xf32, #tpu.memory_space<vmem>>, %arg5: memref<16x32xf32, #tpu.memory_space<vmem>>) attributes {dimension_semantics = [], scalar_prefetch = 0 : i64, scratch_operands = 0 : i64, tpu.core_type = #tpu.core_type<tc>} {
    %c0 = arith.constant 0 : index
    %c0_0 = arith.constant 0 : index
    %0 = vector.load %arg0[%c0, %c0_0] : memref<16x32xf32, #tpu.memory_space<vmem>>, vector<16x32xf32>
    %1 = tpu.iota {dimensions = array<i32: 0>} : vector<16x16xi32>
    %2 = arith.sitofp %1 : vector<16x16xi32> to vector<16x16xf32>
    %3 = tpu.iota {dimensions = array<i32: 1>} : vector<16x16xi32>
    %4 = arith.sitofp %3 : vector<16x16xi32> to vector<16x16xf32>
    %cst = arith.constant 5.000000e-01 : f32
    %5 = vector.broadcast %cst : f32 to vector<16x16xf32>
    %6 = arith.addf %2, %5 : vector<16x16xf32>
    %cst_1 = arith.constant 1.250000e-01 : f32
    %7 = vector.broadcast %cst_1 : f32 to vector<16x16xf32>
    %8 = arith.mulf %6, %7 : vector<16x16xf32>
    %9 = math.floor %8 : vector<16x16xf32>
    %cst_2 = arith.constant 5.000000e-01 : f32
    %10 = vector.broadcast %cst_2 : f32 to vector<16x16xf32>
    %11 = arith.addf %4, %10 : vector<16x16xf32>
    %cst_3 = arith.constant 1.250000e-01 : f32
    %12 = vector.broadcast %cst_3 : f32 to vector<16x16xf32>
    %13 = arith.mulf %11, %12 : vector<16x16xf32>
    %14 = math.floor %13 : vector<16x16xf32>
    %c0_4 = arith.constant 0 : index
    %c0_5 = arith.constant 0 : index
    %15 = vector.load %arg1[%c0_4, %c0_5] : memref<1x16xf32, #tpu.memory_space<vmem>>, vector<1x16xf32>
    %16 = arith.cmpf oeq, %9, %14 : vector<16x16xf32>
    %cst_6 = arith.constant -1.000000e+09 : f32
    %17 = vector.broadcast %cst_6 : f32 to vector<1x16xf32>
    %18 = arith.mulf %15, %17 : vector<1x16xf32>
    %cst_7 = arith.constant -1.000000e+09 : f32
    %19 = vector.shape_cast %18 : vector<1x16xf32> to vector<1x16xf32>
    %20 = vector.broadcast %19 : vector<1x16xf32> to vector<16x16xf32>
    %21 = vector.broadcast %cst_7 : f32 to vector<16x16xf32>
    %22 = arith.select %16, %20, %21 : vector<16x16xi1>, vector<16x16xf32>
    %c0_8 = arith.constant 0 : index
    %c0_9 = arith.constant 0 : index
    %c0_10 = arith.constant 0 : index
    %23 = vector.load %arg2[%c0_8, %c0_9, %c0_10] : memref<2x32x256xf32, #tpu.memory_space<vmem>>, vector<1x32x256xf32>
    %24 = vector.shape_cast %23 : vector<1x32x256xf32> to vector<32x256xf32>
    %c0_11 = arith.constant 0 : index
    %c0_12 = arith.constant 0 : index
    %c0_13 = arith.constant 0 : index
    %25 = vector.load %arg3[%c0_11, %c0_12, %c0_13] : memref<2x128x32xf32, #tpu.memory_space<vmem>>, vector<1x128x32xf32>
    %26 = vector.shape_cast %25 : vector<1x128x32xf32> to vector<128x32xf32>
    %c0_14 = arith.constant 0 : index
    %c0_15 = arith.constant 0 : index
    %c0_16 = arith.constant 0 : index
    %27 = vector.load %arg4[%c0_14, %c0_15, %c0_16] : memref<2x8x128xf32, #tpu.memory_space<vmem>>, vector<1x8x128xf32>
    %28 = vector.shape_cast %27 : vector<1x8x128xf32> to vector<8x128xf32>
    %29 = vector.extract_strided_slice %24 {offsets = [0, 0], sizes = [32, 64], strides = [1, 1]} : vector<32x256xf32> to vector<32x64xf32>
    %30 = vector.extract_strided_slice %24 {offsets = [0, 64], sizes = [32, 32], strides = [1, 1]} : vector<32x256xf32> to vector<32x32xf32>
    %31 = vector.extract_strided_slice %24 {offsets = [0, 96], sizes = [32, 32], strides = [1, 1]} : vector<32x256xf32> to vector<32x32xf32>
    %32 = vector.extract_strided_slice %24 {offsets = [0, 128], sizes = [32, 128], strides = [1, 1]} : vector<32x256xf32> to vector<32x128xf32>
    %33 = vector.extract_strided_slice %28 {offsets = [0, 0], sizes = [1, 64], strides = [1, 1]} : vector<8x128xf32> to vector<1x64xf32>
    %34 = vector.extract_strided_slice %28 {offsets = [1, 0], sizes = [1, 32], strides = [1, 1]} : vector<8x128xf32> to vector<1x32xf32>
    %35 = vector.extract_strided_slice %28 {offsets = [2, 0], sizes = [1, 32], strides = [1, 1]} : vector<8x128xf32> to vector<1x32xf32>
    %36 = vector.extract_strided_slice %28 {offsets = [3, 0], sizes = [1, 32], strides = [1, 1]} : vector<8x128xf32> to vector<1x32xf32>
    %37 = vector.extract_strided_slice %28 {offsets = [4, 0], sizes = [1, 128], strides = [1, 1]} : vector<8x128xf32> to vector<1x128xf32>
    %38 = vector.extract_strided_slice %28 {offsets = [5, 0], sizes = [1, 32], strides = [1, 1]} : vector<8x128xf32> to vector<1x32xf32>
    %39 = vector.extract_strided_slice %28 {offsets = [6, 0], sizes = [1, 32], strides = [1, 1]} : vector<8x128xf32> to vector<1x32xf32>
    %40 = vector.extract_strided_slice %28 {offsets = [7, 0], sizes = [1, 32], strides = [1, 1]} : vector<8x128xf32> to vector<1x32xf32>
    %cst_17 = arith.constant dense<0.000000e+00> : vector<16x64xf32>
    %41 = tpu.matmul %0, %29, %cst_17 {dimension_numbers = #tpu.dot_dimension_numbers<[1], [0], [0], [1], [0, 0, 1, 1], [], []>} : vector<16x32xf32>, vector<32x64xf32>, vector<16x64xf32> -> vector<16x64xf32>
    %42 = vector.broadcast %33 : vector<1x64xf32> to vector<16x64xf32>
    %43 = arith.addf %41, %42 : vector<16x64xf32>
    %44 = tpu.transpose %0, [1, 0] : vector<16x32xf32> -> vector<32x16xf32>
    %cst_18 = arith.constant dense<0.000000e+00> : vector<32x16xf32>
    %45 = tpu.matmul %30, %44, %cst_18 {dimension_numbers = #tpu.dot_dimension_numbers<[1], [0], [0], [1], [0, 0, 1, 1], [], []>} : vector<32x32xf32>, vector<32x16xf32>, vector<32x16xf32> -> vector<32x16xf32>
    %cst_19 = arith.constant 0.000000e+00 : f32
    %46 = vector.broadcast %cst_19 : f32 to vector<16x32xf32>
    %47 = vector.extract_strided_slice %43 {offsets = [0, 0], sizes = [16, 8], strides = [1, 1]} : vector<16x64xf32> to vector<16x8xf32>
    %48 = vector.extract_strided_slice %43 {offsets = [0, 32], sizes = [16, 8], strides = [1, 1]} : vector<16x64xf32> to vector<16x8xf32>
    %49 = vector.extract_strided_slice %45 {offsets = [0, 0], sizes = [8, 16], strides = [1, 1]} : vector<32x16xf32> to vector<8x16xf32>
    %cst_20 = arith.constant dense<0.000000e+00> : vector<16x16xf32>
    %50 = tpu.matmul %47, %49, %cst_20 {dimension_numbers = #tpu.dot_dimension_numbers<[1], [0], [0], [1], [0, 0, 1, 1], [], []>} : vector<16x8xf32>, vector<8x16xf32>, vector<16x16xf32> -> vector<16x16xf32>
    %51 = arith.addf %50, %22 : vector<16x16xf32>
    %cst_21 = arith.constant dense<0xFF800000> : vector<16xf32>
    %52 = vector.multi_reduction <maximumf>, %51, %cst_21 [1] : vector<16x16xf32> to vector<16xf32>
    %53 = vector.shape_cast %52 : vector<16xf32> to vector<16x1xf32>
    %54 = vector.broadcast %53 : vector<16x1xf32> to vector<16x16xf32>
    %55 = arith.subf %51, %54 : vector<16x16xf32>
    %56 = math.exp %55 : vector<16x16xf32>
    %cst_22 = arith.constant dense<0.000000e+00> : vector<16xf32>
    %57 = vector.multi_reduction <add>, %56, %cst_22 [1] : vector<16x16xf32> to vector<16xf32>
    %58 = vector.shape_cast %57 : vector<16xf32> to vector<16x1xf32>
    %59 = vector.broadcast %58 : vector<16x1xf32> to vector<16x16xf32>
    %60 = arith.divf %56, %59 : vector<16x16xf32>
    %cst_23 = arith.constant dense<0.000000e+00> : vector<16x8xf32>
    %61 = tpu.matmul %60, %48, %cst_23 {dimension_numbers = #tpu.dot_dimension_numbers<[1], [0], [0], [1], [0, 0, 1, 1], [], []>} : vector<16x16xf32>, vector<16x8xf32>, vector<16x8xf32> -> vector<16x8xf32>
    %62 = vector.extract_strided_slice %31 {offsets = [0, 0], sizes = [8, 32], strides = [1, 1]} : vector<32x32xf32> to vector<8x32xf32>
    %cst_24 = arith.constant dense<0.000000e+00> : vector<16x32xf32>
    %63 = tpu.matmul %61, %62, %cst_24 {dimension_numbers = #tpu.dot_dimension_numbers<[1], [0], [0], [1], [0, 0, 1, 1], [], []>} : vector<16x8xf32>, vector<8x32xf32>, vector<16x32xf32> -> vector<16x32xf32>
    %64 = arith.addf %46, %63 : vector<16x32xf32>
    %65 = vector.extract_strided_slice %43 {offsets = [0, 8], sizes = [16, 8], strides = [1, 1]} : vector<16x64xf32> to vector<16x8xf32>
    %66 = vector.extract_strided_slice %43 {offsets = [0, 40], sizes = [16, 8], strides = [1, 1]} : vector<16x64xf32> to vector<16x8xf32>
    %67 = vector.extract_strided_slice %45 {offsets = [8, 0], sizes = [8, 16], strides = [1, 1]} : vector<32x16xf32> to vector<8x16xf32>
    %cst_25 = arith.constant dense<0.000000e+00> : vector<16x16xf32>
    %68 = tpu.matmul %65, %67, %cst_25 {dimension_numbers = #tpu.dot_dimension_numbers<[1], [0], [0], [1], [0, 0, 1, 1], [], []>} : vector<16x8xf32>, vector<8x16xf32>, vector<16x16xf32> -> vector<16x16xf32>
    %69 = arith.addf %68, %22 : vector<16x16xf32>
    %cst_26 = arith.constant dense<0xFF800000> : vector<16xf32>
    %70 = vector.multi_reduction <maximumf>, %69, %cst_26 [1] : vector<16x16xf32> to vector<16xf32>
    %71 = vector.shape_cast %70 : vector<16xf32> to vector<16x1xf32>
    %72 = vector.broadcast %71 : vector<16x1xf32> to vector<16x16xf32>
    %73 = arith.subf %69, %72 : vector<16x16xf32>
    %74 = math.exp %73 : vector<16x16xf32>
    %cst_27 = arith.constant dense<0.000000e+00> : vector<16xf32>
    %75 = vector.multi_reduction <add>, %74, %cst_27 [1] : vector<16x16xf32> to vector<16xf32>
    %76 = vector.shape_cast %75 : vector<16xf32> to vector<16x1xf32>
    %77 = vector.broadcast %76 : vector<16x1xf32> to vector<16x16xf32>
    %78 = arith.divf %74, %77 : vector<16x16xf32>
    %cst_28 = arith.constant dense<0.000000e+00> : vector<16x8xf32>
    %79 = tpu.matmul %78, %66, %cst_28 {dimension_numbers = #tpu.dot_dimension_numbers<[1], [0], [0], [1], [0, 0, 1, 1], [], []>} : vector<16x16xf32>, vector<16x8xf32>, vector<16x8xf32> -> vector<16x8xf32>
    %80 = vector.extract_strided_slice %31 {offsets = [8, 0], sizes = [8, 32], strides = [1, 1]} : vector<32x32xf32> to vector<8x32xf32>
    %cst_29 = arith.constant dense<0.000000e+00> : vector<16x32xf32>
    %81 = tpu.matmul %79, %80, %cst_29 {dimension_numbers = #tpu.dot_dimension_numbers<[1], [0], [0], [1], [0, 0, 1, 1], [], []>} : vector<16x8xf32>, vector<8x32xf32>, vector<16x32xf32> -> vector<16x32xf32>
    %82 = arith.addf %64, %81 : vector<16x32xf32>
    %83 = vector.extract_strided_slice %43 {offsets = [0, 16], sizes = [16, 8], strides = [1, 1]} : vector<16x64xf32> to vector<16x8xf32>
    %84 = vector.extract_strided_slice %43 {offsets = [0, 48], sizes = [16, 8], strides = [1, 1]} : vector<16x64xf32> to vector<16x8xf32>
    %85 = vector.extract_strided_slice %45 {offsets = [16, 0], sizes = [8, 16], strides = [1, 1]} : vector<32x16xf32> to vector<8x16xf32>
    %cst_30 = arith.constant dense<0.000000e+00> : vector<16x16xf32>
    %86 = tpu.matmul %83, %85, %cst_30 {dimension_numbers = #tpu.dot_dimension_numbers<[1], [0], [0], [1], [0, 0, 1, 1], [], []>} : vector<16x8xf32>, vector<8x16xf32>, vector<16x16xf32> -> vector<16x16xf32>
    %87 = arith.addf %86, %22 : vector<16x16xf32>
    %cst_31 = arith.constant dense<0xFF800000> : vector<16xf32>
    %88 = vector.multi_reduction <maximumf>, %87, %cst_31 [1] : vector<16x16xf32> to vector<16xf32>
    %89 = vector.shape_cast %88 : vector<16xf32> to vector<16x1xf32>
    %90 = vector.broadcast %89 : vector<16x1xf32> to vector<16x16xf32>
    %91 = arith.subf %87, %90 : vector<16x16xf32>
    %92 = math.exp %91 : vector<16x16xf32>
    %cst_32 = arith.constant dense<0.000000e+00> : vector<16xf32>
    %93 = vector.multi_reduction <add>, %92, %cst_32 [1] : vector<16x16xf32> to vector<16xf32>
    %94 = vector.shape_cast %93 : vector<16xf32> to vector<16x1xf32>
    %95 = vector.broadcast %94 : vector<16x1xf32> to vector<16x16xf32>
    %96 = arith.divf %92, %95 : vector<16x16xf32>
    %cst_33 = arith.constant dense<0.000000e+00> : vector<16x8xf32>
    %97 = tpu.matmul %96, %84, %cst_33 {dimension_numbers = #tpu.dot_dimension_numbers<[1], [0], [0], [1], [0, 0, 1, 1], [], []>} : vector<16x16xf32>, vector<16x8xf32>, vector<16x8xf32> -> vector<16x8xf32>
    %98 = vector.extract_strided_slice %31 {offsets = [16, 0], sizes = [8, 32], strides = [1, 1]} : vector<32x32xf32> to vector<8x32xf32>
    %cst_34 = arith.constant dense<0.000000e+00> : vector<16x32xf32>
    %99 = tpu.matmul %97, %98, %cst_34 {dimension_numbers = #tpu.dot_dimension_numbers<[1], [0], [0], [1], [0, 0, 1, 1], [], []>} : vector<16x8xf32>, vector<8x32xf32>, vector<16x32xf32> -> vector<16x32xf32>
    %100 = arith.addf %82, %99 : vector<16x32xf32>
    %101 = vector.extract_strided_slice %43 {offsets = [0, 24], sizes = [16, 8], strides = [1, 1]} : vector<16x64xf32> to vector<16x8xf32>
    %102 = vector.extract_strided_slice %43 {offsets = [0, 56], sizes = [16, 8], strides = [1, 1]} : vector<16x64xf32> to vector<16x8xf32>
    %103 = vector.extract_strided_slice %45 {offsets = [24, 0], sizes = [8, 16], strides = [1, 1]} : vector<32x16xf32> to vector<8x16xf32>
    %cst_35 = arith.constant dense<0.000000e+00> : vector<16x16xf32>
    %104 = tpu.matmul %101, %103, %cst_35 {dimension_numbers = #tpu.dot_dimension_numbers<[1], [0], [0], [1], [0, 0, 1, 1], [], []>} : vector<16x8xf32>, vector<8x16xf32>, vector<16x16xf32> -> vector<16x16xf32>
    %105 = arith.addf %104, %22 : vector<16x16xf32>
    %cst_36 = arith.constant dense<0xFF800000> : vector<16xf32>
    %106 = vector.multi_reduction <maximumf>, %105, %cst_36 [1] : vector<16x16xf32> to vector<16xf32>
    %107 = vector.shape_cast %106 : vector<16xf32> to vector<16x1xf32>
    %108 = vector.broadcast %107 : vector<16x1xf32> to vector<16x16xf32>
    %109 = arith.subf %105, %108 : vector<16x16xf32>
    %110 = math.exp %109 : vector<16x16xf32>
    %cst_37 = arith.constant dense<0.000000e+00> : vector<16xf32>
    %111 = vector.multi_reduction <add>, %110, %cst_37 [1] : vector<16x16xf32> to vector<16xf32>
    %112 = vector.shape_cast %111 : vector<16xf32> to vector<16x1xf32>
    %113 = vector.broadcast %112 : vector<16x1xf32> to vector<16x16xf32>
    %114 = arith.divf %110, %113 : vector<16x16xf32>
    %cst_38 = arith.constant dense<0.000000e+00> : vector<16x8xf32>
    %115 = tpu.matmul %114, %102, %cst_38 {dimension_numbers = #tpu.dot_dimension_numbers<[1], [0], [0], [1], [0, 0, 1, 1], [], []>} : vector<16x16xf32>, vector<16x8xf32>, vector<16x8xf32> -> vector<16x8xf32>
    %116 = vector.extract_strided_slice %31 {offsets = [24, 0], sizes = [8, 32], strides = [1, 1]} : vector<32x32xf32> to vector<8x32xf32>
    %cst_39 = arith.constant dense<0.000000e+00> : vector<16x32xf32>
    %117 = tpu.matmul %115, %116, %cst_39 {dimension_numbers = #tpu.dot_dimension_numbers<[1], [0], [0], [1], [0, 0, 1, 1], [], []>} : vector<16x8xf32>, vector<8x32xf32>, vector<16x32xf32> -> vector<16x32xf32>
    %118 = arith.addf %100, %117 : vector<16x32xf32>
    %119 = vector.broadcast %34 : vector<1x32xf32> to vector<16x32xf32>
    %120 = arith.addf %118, %119 : vector<16x32xf32>
    %121 = arith.addf %0, %120 : vector<16x32xf32>
    %cst_40 = arith.constant dense<0.000000e+00> : vector<16xf32>
    %122 = vector.multi_reduction <add>, %121, %cst_40 [1] : vector<16x32xf32> to vector<16xf32>
    %123 = vector.shape_cast %122 : vector<16xf32> to vector<16x1xf32>
    %cst_41 = arith.constant 3.200000e+01 : f32
    %124 = vector.broadcast %cst_41 : f32 to vector<16x1xf32>
    %125 = arith.divf %123, %124 : vector<16x1xf32>
    %126 = vector.broadcast %125 : vector<16x1xf32> to vector<16x32xf32>
    %127 = arith.subf %121, %126 : vector<16x32xf32>
    %128 = arith.mulf %127, %127 : vector<16x32xf32>
    %cst_42 = arith.constant dense<0.000000e+00> : vector<16xf32>
    %129 = vector.multi_reduction <add>, %128, %cst_42 [1] : vector<16x32xf32> to vector<16xf32>
    %130 = vector.shape_cast %129 : vector<16xf32> to vector<16x1xf32>
    %cst_43 = arith.constant 3.200000e+01 : f32
    %131 = vector.broadcast %cst_43 : f32 to vector<16x1xf32>
    %132 = arith.divf %130, %131 : vector<16x1xf32>
    %133 = vector.broadcast %125 : vector<16x1xf32> to vector<16x32xf32>
    %134 = arith.subf %121, %133 : vector<16x32xf32>
    %cst_44 = arith.constant 9.99999974E-6 : f32
    %135 = vector.broadcast %cst_44 : f32 to vector<16x1xf32>
    %136 = arith.addf %132, %135 : vector<16x1xf32>
    %137 = math.rsqrt %136 : vector<16x1xf32>
    %138 = vector.broadcast %137 : vector<16x1xf32> to vector<16x32xf32>
    %139 = arith.mulf %134, %138 : vector<16x32xf32>
    %140 = vector.broadcast %35 : vector<1x32xf32> to vector<16x32xf32>
    %141 = arith.mulf %139, %140 : vector<16x32xf32>
    %142 = vector.broadcast %36 : vector<1x32xf32> to vector<16x32xf32>
    %143 = arith.addf %141, %142 : vector<16x32xf32>
    %cst_45 = arith.constant dense<0.000000e+00> : vector<16x128xf32>
    %144 = tpu.matmul %143, %32, %cst_45 {dimension_numbers = #tpu.dot_dimension_numbers<[1], [0], [0], [1], [0, 0, 1, 1], [], []>} : vector<16x32xf32>, vector<32x128xf32>, vector<16x128xf32> -> vector<16x128xf32>
    %145 = vector.broadcast %37 : vector<1x128xf32> to vector<16x128xf32>
    %146 = arith.addf %144, %145 : vector<16x128xf32>
    %cst_46 = arith.constant 0.000000e+00 : f32
    %147 = vector.broadcast %cst_46 : f32 to vector<16x128xf32>
    %148 = arith.maximumf %146, %147 : vector<16x128xf32>
    %cst_47 = arith.constant dense<0.000000e+00> : vector<16x32xf32>
    %149 = tpu.matmul %148, %26, %cst_47 {dimension_numbers = #tpu.dot_dimension_numbers<[1], [0], [0], [1], [0, 0, 1, 1], [], []>} : vector<16x128xf32>, vector<128x32xf32>, vector<16x32xf32> -> vector<16x32xf32>
    %150 = vector.broadcast %38 : vector<1x32xf32> to vector<16x32xf32>
    %151 = arith.addf %149, %150 : vector<16x32xf32>
    %152 = arith.addf %143, %151 : vector<16x32xf32>
    %cst_48 = arith.constant dense<0.000000e+00> : vector<16xf32>
    %153 = vector.multi_reduction <add>, %152, %cst_48 [1] : vector<16x32xf32> to vector<16xf32>
    %154 = vector.shape_cast %153 : vector<16xf32> to vector<16x1xf32>
    %cst_49 = arith.constant 3.200000e+01 : f32
    %155 = vector.broadcast %cst_49 : f32 to vector<16x1xf32>
    %156 = arith.divf %154, %155 : vector<16x1xf32>
    %157 = vector.broadcast %156 : vector<16x1xf32> to vector<16x32xf32>
    %158 = arith.subf %152, %157 : vector<16x32xf32>
    %159 = arith.mulf %158, %158 : vector<16x32xf32>
    %cst_50 = arith.constant dense<0.000000e+00> : vector<16xf32>
    %160 = vector.multi_reduction <add>, %159, %cst_50 [1] : vector<16x32xf32> to vector<16xf32>
    %161 = vector.shape_cast %160 : vector<16xf32> to vector<16x1xf32>
    %cst_51 = arith.constant 3.200000e+01 : f32
    %162 = vector.broadcast %cst_51 : f32 to vector<16x1xf32>
    %163 = arith.divf %161, %162 : vector<16x1xf32>
    %164 = vector.broadcast %156 : vector<16x1xf32> to vector<16x32xf32>
    %165 = arith.subf %152, %164 : vector<16x32xf32>
    %cst_52 = arith.constant 9.99999974E-6 : f32
    %166 = vector.broadcast %cst_52 : f32 to vector<16x1xf32>
    %167 = arith.addf %163, %166 : vector<16x1xf32>
    %168 = math.rsqrt %167 : vector<16x1xf32>
    %169 = vector.broadcast %168 : vector<16x1xf32> to vector<16x32xf32>
    %170 = arith.mulf %165, %169 : vector<16x32xf32>
    %171 = vector.broadcast %39 : vector<1x32xf32> to vector<16x32xf32>
    %172 = arith.mulf %170, %171 : vector<16x32xf32>
    %173 = vector.broadcast %40 : vector<1x32xf32> to vector<16x32xf32>
    %174 = arith.addf %172, %173 : vector<16x32xf32>
    %c1 = arith.constant 1 : index
    %c0_53 = arith.constant 0 : index
    %c0_54 = arith.constant 0 : index
    %175 = vector.load %arg2[%c1, %c0_53, %c0_54] : memref<2x32x256xf32, #tpu.memory_space<vmem>>, vector<1x32x256xf32>
    %176 = vector.shape_cast %175 : vector<1x32x256xf32> to vector<32x256xf32>
    %c1_55 = arith.constant 1 : index
    %c0_56 = arith.constant 0 : index
    %c0_57 = arith.constant 0 : index
    %177 = vector.load %arg3[%c1_55, %c0_56, %c0_57] : memref<2x128x32xf32, #tpu.memory_space<vmem>>, vector<1x128x32xf32>
    %178 = vector.shape_cast %177 : vector<1x128x32xf32> to vector<128x32xf32>
    %c1_58 = arith.constant 1 : index
    %c0_59 = arith.constant 0 : index
    %c0_60 = arith.constant 0 : index
    %179 = vector.load %arg4[%c1_58, %c0_59, %c0_60] : memref<2x8x128xf32, #tpu.memory_space<vmem>>, vector<1x8x128xf32>
    %180 = vector.shape_cast %179 : vector<1x8x128xf32> to vector<8x128xf32>
    %181 = vector.extract_strided_slice %176 {offsets = [0, 0], sizes = [32, 64], strides = [1, 1]} : vector<32x256xf32> to vector<32x64xf32>
    %182 = vector.extract_strided_slice %176 {offsets = [0, 64], sizes = [32, 32], strides = [1, 1]} : vector<32x256xf32> to vector<32x32xf32>
    %183 = vector.extract_strided_slice %176 {offsets = [0, 96], sizes = [32, 32], strides = [1, 1]} : vector<32x256xf32> to vector<32x32xf32>
    %184 = vector.extract_strided_slice %176 {offsets = [0, 128], sizes = [32, 128], strides = [1, 1]} : vector<32x256xf32> to vector<32x128xf32>
    %185 = vector.extract_strided_slice %180 {offsets = [0, 0], sizes = [1, 64], strides = [1, 1]} : vector<8x128xf32> to vector<1x64xf32>
    %186 = vector.extract_strided_slice %180 {offsets = [1, 0], sizes = [1, 32], strides = [1, 1]} : vector<8x128xf32> to vector<1x32xf32>
    %187 = vector.extract_strided_slice %180 {offsets = [2, 0], sizes = [1, 32], strides = [1, 1]} : vector<8x128xf32> to vector<1x32xf32>
    %188 = vector.extract_strided_slice %180 {offsets = [3, 0], sizes = [1, 32], strides = [1, 1]} : vector<8x128xf32> to vector<1x32xf32>
    %189 = vector.extract_strided_slice %180 {offsets = [4, 0], sizes = [1, 128], strides = [1, 1]} : vector<8x128xf32> to vector<1x128xf32>
    %190 = vector.extract_strided_slice %180 {offsets = [5, 0], sizes = [1, 32], strides = [1, 1]} : vector<8x128xf32> to vector<1x32xf32>
    %191 = vector.extract_strided_slice %180 {offsets = [6, 0], sizes = [1, 32], strides = [1, 1]} : vector<8x128xf32> to vector<1x32xf32>
    %192 = vector.extract_strided_slice %180 {offsets = [7, 0], sizes = [1, 32], strides = [1, 1]} : vector<8x128xf32> to vector<1x32xf32>
    %cst_61 = arith.constant dense<0.000000e+00> : vector<16x64xf32>
    %193 = tpu.matmul %174, %181, %cst_61 {dimension_numbers = #tpu.dot_dimension_numbers<[1], [0], [0], [1], [0, 0, 1, 1], [], []>} : vector<16x32xf32>, vector<32x64xf32>, vector<16x64xf32> -> vector<16x64xf32>
    %194 = vector.broadcast %185 : vector<1x64xf32> to vector<16x64xf32>
    %195 = arith.addf %193, %194 : vector<16x64xf32>
    %196 = tpu.transpose %174, [1, 0] : vector<16x32xf32> -> vector<32x16xf32>
    %cst_62 = arith.constant dense<0.000000e+00> : vector<32x16xf32>
    %197 = tpu.matmul %182, %196, %cst_62 {dimension_numbers = #tpu.dot_dimension_numbers<[1], [0], [0], [1], [0, 0, 1, 1], [], []>} : vector<32x32xf32>, vector<32x16xf32>, vector<32x16xf32> -> vector<32x16xf32>
    %cst_63 = arith.constant 0.000000e+00 : f32
    %198 = vector.broadcast %cst_63 : f32 to vector<16x32xf32>
    %199 = vector.extract_strided_slice %195 {offsets = [0, 0], sizes = [16, 8], strides = [1, 1]} : vector<16x64xf32> to vector<16x8xf32>
    %200 = vector.extract_strided_slice %195 {offsets = [0, 32], sizes = [16, 8], strides = [1, 1]} : vector<16x64xf32> to vector<16x8xf32>
    %201 = vector.extract_strided_slice %197 {offsets = [0, 0], sizes = [8, 16], strides = [1, 1]} : vector<32x16xf32> to vector<8x16xf32>
    %cst_64 = arith.constant dense<0.000000e+00> : vector<16x16xf32>
    %202 = tpu.matmul %199, %201, %cst_64 {dimension_numbers = #tpu.dot_dimension_numbers<[1], [0], [0], [1], [0, 0, 1, 1], [], []>} : vector<16x8xf32>, vector<8x16xf32>, vector<16x16xf32> -> vector<16x16xf32>
    %203 = arith.addf %202, %22 : vector<16x16xf32>
    %cst_65 = arith.constant dense<0xFF800000> : vector<16xf32>
    %204 = vector.multi_reduction <maximumf>, %203, %cst_65 [1] : vector<16x16xf32> to vector<16xf32>
    %205 = vector.shape_cast %204 : vector<16xf32> to vector<16x1xf32>
    %206 = vector.broadcast %205 : vector<16x1xf32> to vector<16x16xf32>
    %207 = arith.subf %203, %206 : vector<16x16xf32>
    %208 = math.exp %207 : vector<16x16xf32>
    %cst_66 = arith.constant dense<0.000000e+00> : vector<16xf32>
    %209 = vector.multi_reduction <add>, %208, %cst_66 [1] : vector<16x16xf32> to vector<16xf32>
    %210 = vector.shape_cast %209 : vector<16xf32> to vector<16x1xf32>
    %211 = vector.broadcast %210 : vector<16x1xf32> to vector<16x16xf32>
    %212 = arith.divf %208, %211 : vector<16x16xf32>
    %cst_67 = arith.constant dense<0.000000e+00> : vector<16x8xf32>
    %213 = tpu.matmul %212, %200, %cst_67 {dimension_numbers = #tpu.dot_dimension_numbers<[1], [0], [0], [1], [0, 0, 1, 1], [], []>} : vector<16x16xf32>, vector<16x8xf32>, vector<16x8xf32> -> vector<16x8xf32>
    %214 = vector.extract_strided_slice %183 {offsets = [0, 0], sizes = [8, 32], strides = [1, 1]} : vector<32x32xf32> to vector<8x32xf32>
    %cst_68 = arith.constant dense<0.000000e+00> : vector<16x32xf32>
    %215 = tpu.matmul %213, %214, %cst_68 {dimension_numbers = #tpu.dot_dimension_numbers<[1], [0], [0], [1], [0, 0, 1, 1], [], []>} : vector<16x8xf32>, vector<8x32xf32>, vector<16x32xf32> -> vector<16x32xf32>
    %216 = arith.addf %198, %215 : vector<16x32xf32>
    %217 = vector.extract_strided_slice %195 {offsets = [0, 8], sizes = [16, 8], strides = [1, 1]} : vector<16x64xf32> to vector<16x8xf32>
    %218 = vector.extract_strided_slice %195 {offsets = [0, 40], sizes = [16, 8], strides = [1, 1]} : vector<16x64xf32> to vector<16x8xf32>
    %219 = vector.extract_strided_slice %197 {offsets = [8, 0], sizes = [8, 16], strides = [1, 1]} : vector<32x16xf32> to vector<8x16xf32>
    %cst_69 = arith.constant dense<0.000000e+00> : vector<16x16xf32>
    %220 = tpu.matmul %217, %219, %cst_69 {dimension_numbers = #tpu.dot_dimension_numbers<[1], [0], [0], [1], [0, 0, 1, 1], [], []>} : vector<16x8xf32>, vector<8x16xf32>, vector<16x16xf32> -> vector<16x16xf32>
    %221 = arith.addf %220, %22 : vector<16x16xf32>
    %cst_70 = arith.constant dense<0xFF800000> : vector<16xf32>
    %222 = vector.multi_reduction <maximumf>, %221, %cst_70 [1] : vector<16x16xf32> to vector<16xf32>
    %223 = vector.shape_cast %222 : vector<16xf32> to vector<16x1xf32>
    %224 = vector.broadcast %223 : vector<16x1xf32> to vector<16x16xf32>
    %225 = arith.subf %221, %224 : vector<16x16xf32>
    %226 = math.exp %225 : vector<16x16xf32>
    %cst_71 = arith.constant dense<0.000000e+00> : vector<16xf32>
    %227 = vector.multi_reduction <add>, %226, %cst_71 [1] : vector<16x16xf32> to vector<16xf32>
    %228 = vector.shape_cast %227 : vector<16xf32> to vector<16x1xf32>
    %229 = vector.broadcast %228 : vector<16x1xf32> to vector<16x16xf32>
    %230 = arith.divf %226, %229 : vector<16x16xf32>
    %cst_72 = arith.constant dense<0.000000e+00> : vector<16x8xf32>
    %231 = tpu.matmul %230, %218, %cst_72 {dimension_numbers = #tpu.dot_dimension_numbers<[1], [0], [0], [1], [0, 0, 1, 1], [], []>} : vector<16x16xf32>, vector<16x8xf32>, vector<16x8xf32> -> vector<16x8xf32>
    %232 = vector.extract_strided_slice %183 {offsets = [8, 0], sizes = [8, 32], strides = [1, 1]} : vector<32x32xf32> to vector<8x32xf32>
    %cst_73 = arith.constant dense<0.000000e+00> : vector<16x32xf32>
    %233 = tpu.matmul %231, %232, %cst_73 {dimension_numbers = #tpu.dot_dimension_numbers<[1], [0], [0], [1], [0, 0, 1, 1], [], []>} : vector<16x8xf32>, vector<8x32xf32>, vector<16x32xf32> -> vector<16x32xf32>
    %234 = arith.addf %216, %233 : vector<16x32xf32>
    %235 = vector.extract_strided_slice %195 {offsets = [0, 16], sizes = [16, 8], strides = [1, 1]} : vector<16x64xf32> to vector<16x8xf32>
    %236 = vector.extract_strided_slice %195 {offsets = [0, 48], sizes = [16, 8], strides = [1, 1]} : vector<16x64xf32> to vector<16x8xf32>
    %237 = vector.extract_strided_slice %197 {offsets = [16, 0], sizes = [8, 16], strides = [1, 1]} : vector<32x16xf32> to vector<8x16xf32>
    %cst_74 = arith.constant dense<0.000000e+00> : vector<16x16xf32>
    %238 = tpu.matmul %235, %237, %cst_74 {dimension_numbers = #tpu.dot_dimension_numbers<[1], [0], [0], [1], [0, 0, 1, 1], [], []>} : vector<16x8xf32>, vector<8x16xf32>, vector<16x16xf32> -> vector<16x16xf32>
    %239 = arith.addf %238, %22 : vector<16x16xf32>
    %cst_75 = arith.constant dense<0xFF800000> : vector<16xf32>
    %240 = vector.multi_reduction <maximumf>, %239, %cst_75 [1] : vector<16x16xf32> to vector<16xf32>
    %241 = vector.shape_cast %240 : vector<16xf32> to vector<16x1xf32>
    %242 = vector.broadcast %241 : vector<16x1xf32> to vector<16x16xf32>
    %243 = arith.subf %239, %242 : vector<16x16xf32>
    %244 = math.exp %243 : vector<16x16xf32>
    %cst_76 = arith.constant dense<0.000000e+00> : vector<16xf32>
    %245 = vector.multi_reduction <add>, %244, %cst_76 [1] : vector<16x16xf32> to vector<16xf32>
    %246 = vector.shape_cast %245 : vector<16xf32> to vector<16x1xf32>
    %247 = vector.broadcast %246 : vector<16x1xf32> to vector<16x16xf32>
    %248 = arith.divf %244, %247 : vector<16x16xf32>
    %cst_77 = arith.constant dense<0.000000e+00> : vector<16x8xf32>
    %249 = tpu.matmul %248, %236, %cst_77 {dimension_numbers = #tpu.dot_dimension_numbers<[1], [0], [0], [1], [0, 0, 1, 1], [], []>} : vector<16x16xf32>, vector<16x8xf32>, vector<16x8xf32> -> vector<16x8xf32>
    %250 = vector.extract_strided_slice %183 {offsets = [16, 0], sizes = [8, 32], strides = [1, 1]} : vector<32x32xf32> to vector<8x32xf32>
    %cst_78 = arith.constant dense<0.000000e+00> : vector<16x32xf32>
    %251 = tpu.matmul %249, %250, %cst_78 {dimension_numbers = #tpu.dot_dimension_numbers<[1], [0], [0], [1], [0, 0, 1, 1], [], []>} : vector<16x8xf32>, vector<8x32xf32>, vector<16x32xf32> -> vector<16x32xf32>
    %252 = arith.addf %234, %251 : vector<16x32xf32>
    %253 = vector.extract_strided_slice %195 {offsets = [0, 24], sizes = [16, 8], strides = [1, 1]} : vector<16x64xf32> to vector<16x8xf32>
    %254 = vector.extract_strided_slice %195 {offsets = [0, 56], sizes = [16, 8], strides = [1, 1]} : vector<16x64xf32> to vector<16x8xf32>
    %255 = vector.extract_strided_slice %197 {offsets = [24, 0], sizes = [8, 16], strides = [1, 1]} : vector<32x16xf32> to vector<8x16xf32>
    %cst_79 = arith.constant dense<0.000000e+00> : vector<16x16xf32>
    %256 = tpu.matmul %253, %255, %cst_79 {dimension_numbers = #tpu.dot_dimension_numbers<[1], [0], [0], [1], [0, 0, 1, 1], [], []>} : vector<16x8xf32>, vector<8x16xf32>, vector<16x16xf32> -> vector<16x16xf32>
    %257 = arith.addf %256, %22 : vector<16x16xf32>
    %cst_80 = arith.constant dense<0xFF800000> : vector<16xf32>
    %258 = vector.multi_reduction <maximumf>, %257, %cst_80 [1] : vector<16x16xf32> to vector<16xf32>
    %259 = vector.shape_cast %258 : vector<16xf32> to vector<16x1xf32>
    %260 = vector.broadcast %259 : vector<16x1xf32> to vector<16x16xf32>
    %261 = arith.subf %257, %260 : vector<16x16xf32>
    %262 = math.exp %261 : vector<16x16xf32>
    %cst_81 = arith.constant dense<0.000000e+00> : vector<16xf32>
    %263 = vector.multi_reduction <add>, %262, %cst_81 [1] : vector<16x16xf32> to vector<16xf32>
    %264 = vector.shape_cast %263 : vector<16xf32> to vector<16x1xf32>
    %265 = vector.broadcast %264 : vector<16x1xf32> to vector<16x16xf32>
    %266 = arith.divf %262, %265 : vector<16x16xf32>
    %cst_82 = arith.constant dense<0.000000e+00> : vector<16x8xf32>
    %267 = tpu.matmul %266, %254, %cst_82 {dimension_numbers = #tpu.dot_dimension_numbers<[1], [0], [0], [1], [0, 0, 1, 1], [], []>} : vector<16x16xf32>, vector<16x8xf32>, vector<16x8xf32> -> vector<16x8xf32>
    %268 = vector.extract_strided_slice %183 {offsets = [24, 0], sizes = [8, 32], strides = [1, 1]} : vector<32x32xf32> to vector<8x32xf32>
    %cst_83 = arith.constant dense<0.000000e+00> : vector<16x32xf32>
    %269 = tpu.matmul %267, %268, %cst_83 {dimension_numbers = #tpu.dot_dimension_numbers<[1], [0], [0], [1], [0, 0, 1, 1], [], []>} : vector<16x8xf32>, vector<8x32xf32>, vector<16x32xf32> -> vector<16x32xf32>
    %270 = arith.addf %252, %269 : vector<16x32xf32>
    %271 = vector.broadcast %186 : vector<1x32xf32> to vector<16x32xf32>
    %272 = arith.addf %270, %271 : vector<16x32xf32>
    %273 = arith.addf %174, %272 : vector<16x32xf32>
    %cst_84 = arith.constant dense<0.000000e+00> : vector<16xf32>
    %274 = vector.multi_reduction <add>, %273, %cst_84 [1] : vector<16x32xf32> to vector<16xf32>
    %275 = vector.shape_cast %274 : vector<16xf32> to vector<16x1xf32>
    %cst_85 = arith.constant 3.200000e+01 : f32
    %276 = vector.broadcast %cst_85 : f32 to vector<16x1xf32>
    %277 = arith.divf %275, %276 : vector<16x1xf32>
    %278 = vector.broadcast %277 : vector<16x1xf32> to vector<16x32xf32>
    %279 = arith.subf %273, %278 : vector<16x32xf32>
    %280 = arith.mulf %279, %279 : vector<16x32xf32>
    %cst_86 = arith.constant dense<0.000000e+00> : vector<16xf32>
    %281 = vector.multi_reduction <add>, %280, %cst_86 [1] : vector<16x32xf32> to vector<16xf32>
    %282 = vector.shape_cast %281 : vector<16xf32> to vector<16x1xf32>
    %cst_87 = arith.constant 3.200000e+01 : f32
    %283 = vector.broadcast %cst_87 : f32 to vector<16x1xf32>
    %284 = arith.divf %282, %283 : vector<16x1xf32>
    %285 = vector.broadcast %277 : vector<16x1xf32> to vector<16x32xf32>
    %286 = arith.subf %273, %285 : vector<16x32xf32>
    %cst_88 = arith.constant 9.99999974E-6 : f32
    %287 = vector.broadcast %cst_88 : f32 to vector<16x1xf32>
    %288 = arith.addf %284, %287 : vector<16x1xf32>
    %289 = math.rsqrt %288 : vector<16x1xf32>
    %290 = vector.broadcast %289 : vector<16x1xf32> to vector<16x32xf32>
    %291 = arith.mulf %286, %290 : vector<16x32xf32>
    %292 = vector.broadcast %187 : vector<1x32xf32> to vector<16x32xf32>
    %293 = arith.mulf %291, %292 : vector<16x32xf32>
    %294 = vector.broadcast %188 : vector<1x32xf32> to vector<16x32xf32>
    %295 = arith.addf %293, %294 : vector<16x32xf32>
    %cst_89 = arith.constant dense<0.000000e+00> : vector<16x128xf32>
    %296 = tpu.matmul %295, %184, %cst_89 {dimension_numbers = #tpu.dot_dimension_numbers<[1], [0], [0], [1], [0, 0, 1, 1], [], []>} : vector<16x32xf32>, vector<32x128xf32>, vector<16x128xf32> -> vector<16x128xf32>
    %297 = vector.broadcast %189 : vector<1x128xf32> to vector<16x128xf32>
    %298 = arith.addf %296, %297 : vector<16x128xf32>
    %cst_90 = arith.constant 0.000000e+00 : f32
    %299 = vector.broadcast %cst_90 : f32 to vector<16x128xf32>
    %300 = arith.maximumf %298, %299 : vector<16x128xf32>
    %cst_91 = arith.constant dense<0.000000e+00> : vector<16x32xf32>
    %301 = tpu.matmul %300, %178, %cst_91 {dimension_numbers = #tpu.dot_dimension_numbers<[1], [0], [0], [1], [0, 0, 1, 1], [], []>} : vector<16x128xf32>, vector<128x32xf32>, vector<16x32xf32> -> vector<16x32xf32>
    %302 = vector.broadcast %190 : vector<1x32xf32> to vector<16x32xf32>
    %303 = arith.addf %301, %302 : vector<16x32xf32>
    %304 = arith.addf %295, %303 : vector<16x32xf32>
    %cst_92 = arith.constant dense<0.000000e+00> : vector<16xf32>
    %305 = vector.multi_reduction <add>, %304, %cst_92 [1] : vector<16x32xf32> to vector<16xf32>
    %306 = vector.shape_cast %305 : vector<16xf32> to vector<16x1xf32>
    %cst_93 = arith.constant 3.200000e+01 : f32
    %307 = vector.broadcast %cst_93 : f32 to vector<16x1xf32>
    %308 = arith.divf %306, %307 : vector<16x1xf32>
    %309 = vector.broadcast %308 : vector<16x1xf32> to vector<16x32xf32>
    %310 = arith.subf %304, %309 : vector<16x32xf32>
    %311 = arith.mulf %310, %310 : vector<16x32xf32>
    %cst_94 = arith.constant dense<0.000000e+00> : vector<16xf32>
    %312 = vector.multi_reduction <add>, %311, %cst_94 [1] : vector<16x32xf32> to vector<16xf32>
    %313 = vector.shape_cast %312 : vector<16xf32> to vector<16x1xf32>
    %cst_95 = arith.constant 3.200000e+01 : f32
    %314 = vector.broadcast %cst_95 : f32 to vector<16x1xf32>
    %315 = arith.divf %313, %314 : vector<16x1xf32>
    %316 = vector.broadcast %308 : vector<16x1xf32> to vector<16x32xf32>
    %317 = arith.subf %304, %316 : vector<16x32xf32>
    %cst_96 = arith.constant 9.99999974E-6 : f32
    %318 = vector.broadcast %cst_96 : f32 to vector<16x1xf32>
    %319 = arith.addf %315, %318 : vector<16x1xf32>
    %320 = math.rsqrt %319 : vector<16x1xf32>
    %321 = vector.broadcast %320 : vector<16x1xf32> to vector<16x32xf32>
    %322 = arith.mulf %317, %321 : vector<16x32xf32>
    %323 = vector.broadcast %191 : vector<1x32xf32> to vector<16x32xf32>
    %324 = arith.mulf %322, %323 : vector<16x32xf32>
    %325 = vector.broadcast %192 : vector<1x32xf32> to vector<16x32xf32>
    %326 = arith.addf %324, %325 : vector<16x32xf32>
    %c0_97 = arith.constant 0 : index
    %c0_98 = arith.constant 0 : index
    %327 = vector.load %arg5[%c0_97, %c0_98] : memref<16x32xf32, #tpu.memory_space<vmem>>, vector<16x32xf32>
    tpu.vector_store %arg5[%c0_97, %c0_98], %326 {strides = array<i32>} : memref<16x32xf32, #tpu.memory_space<vmem>>, vector<16x32xf32>,
    return
  }
}

</mosaic_0001>

<llo_original>
// kernel: tpu_custom_call.1
$region0: #{tpu_custom_call.1}
  #allocation0 [shape = 'u32[]', space=smem, size = 0x4, offset = 0x4, fixed_abs, tag = 'smem constant byte address 0x4 - core index']
  #allocation1 [shape = 'u32[144,128]{1,0:T(1,128)}', space=vmem, size = 0x12000, scoped, tag = 'internal scratch']
  %s0 = inlined_call_operand.vmem [shape: f32[16,32], index: 0, kind: input, shape index: {}]
  %s1 = inlined_call_operand.vmem [shape: f32[1,16], index: 1, kind: input, shape index: {}]
  %s2 = inlined_call_operand.vmem [shape: f32[2,32,256], index: 2, kind: input, shape index: {}]
  %s3 = inlined_call_operand.vmem [shape: f32[2,128,32], index: 3, kind: input, shape index: {}]
  %s4 = inlined_call_operand.vmem [shape: f32[2,8,128], index: 4, kind: input, shape index: {}]
  %s5 = inlined_call_operand.hbm [shape: f32[16,32], index: 5, kind: output, shape index: {}]
  %s6 = sld [smem:[#allocation0]]
  $region30: #{tpu_custom_call.1} parent=0
    _
  %s8 = ssub.s32 1, %s6
  %s9 = scalar_select 0, %s8, %s6
  $region1: #{tpu_custom_call.1} parent=0
    #allocation2 [shape = 'u8[8192]{0}', space=vmem, size = 0x2000, scoped, tag = 'output window, operand 0, single buffered']
    #allocation3 [shape = 's32[1]{0}', space=sflag, size = 0x4, scoped, tag = 'scoped memory for tpu_custom_call.1']
    %10 = vsyncpa [#allocation3], 0
    // Predicated region
    $region2: #{tpu_custom_call.1} parent=1 // pred_check
      _
    $region3: #{tpu_custom_call.1} parent=1 // pred_check_branch
      %12 = sbr.rel (0) target = $region5
    $region4: #{tpu_custom_call.1} parent=1 // pred_region
      _
    $region5: #{tpu_custom_call.1} parent=1 // pred_fallthru
      _
    // Predicated region
    $region6: #{tpu_custom_call.1} parent=1 // pred_check
      _
    $region7: #{tpu_custom_call.1} parent=1 // pred_check_branch
      %14 = sbr.rel (0) target = $region9
    $region8: #{tpu_custom_call.1} parent=1 // pred_region
      _
    $region9: #{tpu_custom_call.1} parent=1 // pred_fallthru
      _
    // Predicated region
    $region10: #{tpu_custom_call.1} parent=1 // pred_check
      _
    $region11: #{tpu_custom_call.1} parent=1 // pred_check_branch
      %16 = sbr.rel (0) target = $region13
    $region12: #{tpu_custom_call.1} parent=1 // pred_region
      _
    $region13: #{tpu_custom_call.1} parent=1 // pred_fallthru
      _
    // Predicated region
    $region14: #{tpu_custom_call.1} parent=1 // pred_check
      _
    $region15: #{tpu_custom_call.1} parent=1 // pred_check_branch
      %18 = sbr.rel (0) target = $region17
    $region16: #{tpu_custom_call.1} parent=1 // pred_region
      _
    $region17: #{tpu_custom_call.1} parent=1 // pred_fallthru
      _
    // Predicated region
    $region18: #{tpu_custom_call.1} parent=1 // pred_check
      _
    $region19: #{tpu_custom_call.1} parent=1 // pred_check_branch
      %20 = sbr.rel (0) target = $region21
    $region20: #{tpu_custom_call.1} parent=1 // pred_region
      _
    $region21: #{tpu_custom_call.1} parent=1 // pred_fallthru
      _
    %v21 = vld [vmem:[%s0] sm:$0xff]
    %v22 = vld [vmem:[%s0 + $0x8] sm:$0xff]
    %v23 = vlaneseq
    %v24 = vshrl.u32 %v23, 7
    %v25 = vadd.s32 %v24, 8
    %v26 = vcvt.s32.f32 %v24
    %v27 = vcvt.s32.f32 %v25
    %v28 = vlaneseq
    %v29 = vand.u32 %v28, 127
    %v30 = vcvt.s32.f32 %v29
    %v31 = vadd.f32 %v26, 0.5
    %v32 = vadd.f32 %v27, 0.5
    %v33 = vmul.f32 %v31, 0.125
    %v34 = vmul.f32 %v32, 0.125
    %v35 = vfloor.f32 %v33
    %v36 = vfloor.f32 %v34
    %v37 = vadd.f32 %v30, 0.5
    %v38 = vmul.f32 %v37, 0.125
    %v39 = vfloor.f32 %v38
    %v40 = vld [vmem:[%s1] sm:$0x1]
    %vm41 = vcmp.eq.f32.partialorder %v35, %v39
    %vm42 = vcmp.eq.f32.partialorder %v36, %v39
    %v43 = vmul.f32 %v40, -1e+09
    %v45 = vlaneseq
    %v46 = vshrl.u32 %v45, 7
    %v47 = vsub.s32 0, %v46
    %v48 = vrot.slane %v43, %v47
    %v50 = vsel %vm41, %v48, -1e+09
    %v51 = vsel %vm42, %v48, -1e+09
    %v52 = vld [vmem:[%s2] sm:$0xff]
    %v53 = vld [vmem:[%s2 + $0x8] sm:$0xff]
    %v54 = vld [vmem:[%s2 + $0x10] sm:$0xff]
    %v55 = vld [vmem:[%s2 + $0x18] sm:$0xff]
    %v56 = vld [vmem:[%s2 + $0x20] sm:$0xff]
    %v57 = vld [vmem:[%s2 + $0x28] sm:$0xff]
    %v58 = vld [vmem:[%s2 + $0x30] sm:$0xff]
    %v59 = vld [vmem:[%s2 + $0x38] sm:$0xff]
    %v60 = vld [vmem:[%s3] sm:$0xff]
    %v61 = vld [vmem:[%s3 + $0x8] sm:$0xff]
    %v62 = vld [vmem:[%s3 + $0x10] sm:$0xff]
    %v63 = vld [vmem:[%s3 + $0x18] sm:$0xff]
    %v64 = vld [vmem:[%s3 + $0x20] sm:$0xff]
    %v65 = vld [vmem:[%s3 + $0x28] sm:$0xff]
    %v66 = vld [vmem:[%s3 + $0x30] sm:$0xff]
    %v67 = vld [vmem:[%s3 + $0x38] sm:$0xff]
    %v68 = vld [vmem:[%s3 + $0x40] sm:$0xff]
    %v69 = vld [vmem:[%s3 + $0x48] sm:$0xff]
    %v70 = vld [vmem:[%s3 + $0x50] sm:$0xff]
    %v71 = vld [vmem:[%s3 + $0x58] sm:$0xff]
    %v72 = vld [vmem:[%s3 + $0x60] sm:$0xff]
    %v73 = vld [vmem:[%s3 + $0x68] sm:$0xff]
    %v74 = vld [vmem:[%s3 + $0x70] sm:$0xff]
    %v75 = vld [vmem:[%s3 + $0x78] sm:$0xff]
    %v76 = vld [vmem:[%s4] sm:$0xff]
    %v77 = vlaneseq
    %v78 = vshrl.u32 %v77, 7
    %v79 = vsub.s32 0, %v78
    %v80 = vrot.slane %v76, %v79
    %vm81 = vcmask 261120
    %v83 = vsel %vm81, %v21, 0
    %v86 = vsel %vm81, %v22, 0
    %88 = vmatprep.subr.mxu0 0.0
    %89 = vmatpush1.msra.mxu0 %v52
    %90 = vmatprep.subr.mxu0 0.0
    %91 = vmatpush1.msra.mxu0 %v54
    %92 = vmatprep.subr.mxu0 0.0
    %93 = vmatpush1.msra.mxu0 %v56
    %94 = vmatprep.subr.mxu0 0.0
    %95 = vmatpush1.msra.mxu0 %v58
    %96 = vmatprep.subr.mxu0 0.0
    %97 = vmatpush1.msra.mxu0 0.0
    %98 = vmatprep.subr.mxu0 0.0
    %99 = vmatpush1.msra.mxu0 0.0
    %100 = vmatprep.subr.mxu0 0.0
    %101 = vmatpush1.msra.mxu0 0.0
    %102 = vmatprep.subr.mxu0 0.0
    %103 = vmatpush1.msra.mxu0 0.0
    %104 = vmatprep.subr.mxu0 0.0
    %105 = vmatpush1.msra.mxu0 0.0
    %106 = vmatprep.subr.mxu0 0.0
    %107 = vmatpush1.msra.mxu0 0.0
    %108 = vmatprep.subr.mxu0 0.0
    %109 = vmatpush1.msra.mxu0 0.0
    %110 = vmatprep.subr.mxu0 0.0
    %111 = vmatpush1.msra.mxu0 0.0
    %112 = vmatprep.subr.mxu0 0.0
    %113 = vmatpush1.msra.mxu0 0.0
    %114 = vmatprep.subr.mxu0 0.0
    %115 = vmatpush1.msra.mxu0 0.0
    %116 = vmatprep.subr.mxu0 0.0
    %117 = vmatpush1.msra.mxu0 0.0
    %118 = vmatprep.subr.mxu0 0.0
    %119 = vmatpush1.msra.mxu0 0.0
    %120 = vmatprep.subr.mxu0 0.0
    %121 = vmatpush1.msra.mxu0 0.0
    %122 = vmatprep.subr.mxu0 0.0
    %123 = vmatpush1.msra.mxu0 0.0
    %124 = vmatprep.subr.mxu0 0.0
    %125 = vmatpush1.msra.mxu0 0.0
    %126 = vmatprep.subr.mxu0 0.0
    %127 = vmatpush1.msra.mxu0 0.0
    %128 = vmatprep.subr.mxu0 0.0
    %129 = vmatpush1.msra.mxu0 0.0
    %130 = vmatprep.subr.mxu0 0.0
    %131 = vmatpush1.msra.mxu0 0.0
    %132 = vmatprep.subr.mxu0 0.0
    %133 = vmatpush1.msra.mxu0 0.0
    %134 = vmatprep.subr.mxu0 0.0
    %135 = vmatpush1.msra.mxu0 0.0
    %136 = vmatprep.subr.mxu0 0.0
    %137 = vmatpush1.msra.mxu0 0.0
    %138 = vmatprep.subr.mxu0 0.0
    %139 = vmatpush1.msra.mxu0 0.0
    %140 = vmatprep.subr.mxu0 0.0
    %141 = vmatpush1.msra.mxu0 0.0
    %142 = vmatprep.subr.mxu0 0.0
    %143 = vmatpush1.msra.mxu0 0.0
    %144 = vmatprep.subr.mxu0 0.0
    %145 = vmatpush1.msra.mxu0 0.0
    %146 = vmatprep.subr.mxu0 0.0
    %147 = vmatpush1.msra.mxu0 0.0
    %148 = vmatprep.subr.mxu0 0.0
    %149 = vmatpush1.msra.mxu0 0.0
    %150 = vmatprep.subr.mxu0 0.0
    %151 = vmatpush1.msra.mxu0 0.0
    %152 = vmatprep.mubr.f32.mxu0 0.0
    %153 = vmatmul.mubr.f32.gmra.mrb[0].mxu0 %v83
    %v154 = vpop.f32.mrb[0].mxu0
    %v155 = vadd.f32 %v80, %v154
    %v156 = vpop.f32.mrb[0].mxu0
    %157 = vmatprep.mubr.f32.mxu0 0.0
    %158 = vmatmul.mubr.f32.gmra.mrb[0].mxu0 %v86
    %v159 = vpop.f32.mrb[0].mxu0
    %v160 = vadd.f32 %v80, %v159
    %v161 = vpop.f32.mrb[0].mxu0
    %162 = vdwg.mxu0
    %167 = vrot.lane.b32.xlu0 %v52, 64
    %v168 = vpop.permute.xlu0 %167
    %169 = vrot.lane.b32.xlu0 %v54, 64
    %v170 = vpop.permute.xlu0 %169
    %171 = vrot.lane.b32.xlu0 %v56, 64
    %v172 = vpop.permute.xlu0 %171
    %173 = vrot.lane.b32.xlu0 %v58, 64
    %v174 = vpop.permute.xlu0 %173
    %v175 = vsel %vm81, %v168, 0
    %v177 = vsel %vm81, %v170, 0
    %v179 = vsel %vm81, %v172, 0
    %v181 = vsel %vm81, %v174, 0
    %183 = vmatprep.subr.mxu0 0.0
    %184 = vmatpush1.xpose.msra.mxu0 %v83
    %185 = vmatprep.subr.mxu0 0.0
    %186 = vmatpush1.xpose.msra.mxu0 %v86
    %187 = vmatprep.subr.mxu0 0.0
    %188 = vmatpush1.xpose.msra.mxu0 0.0
    %189 = vmatprep.subr.mxu0 0.0
    %190 = vmatpush1.xpose.msra.mxu0 0.0
    %191 = vmatprep.subr.mxu0 0.0
    %192 = vmatpush1.xpose.msra.mxu0 0.0
    %193 = vmatprep.subr.mxu0 0.0
    %194 = vmatpush1.xpose.msra.mxu0 0.0
    %195 = vmatprep.subr.mxu0 0.0
    %196 = vmatpush1.xpose.msra.mxu0 0.0
    %197 = vmatprep.subr.mxu0 0.0
    %198 = vmatpush1.xpose.msra.mxu0 0.0
    %199 = vmatprep.subr.mxu0 0.0
    %200 = vmatpush1.xpose.msra.mxu0 0.0
    %201 = vmatprep.subr.mxu0 0.0
    %202 = vmatpush1.xpose.msra.mxu0 0.0
    %203 = vmatprep.subr.mxu0 0.0
    %204 = vmatpush1.xpose.msra.mxu0 0.0
    %205 = vmatprep.subr.mxu0 0.0
    %206 = vmatpush1.xpose.msra.mxu0 0.0
    %207 = vmatprep.subr.mxu0 0.0
    %208 = vmatpush1.xpose.msra.mxu0 0.0
    %209 = vmatprep.subr.mxu0 0.0
    %210 = vmatpush1.xpose.msra.mxu0 0.0
    %211 = vmatprep.subr.mxu0 0.0
    %212 = vmatpush1.xpose.msra.mxu0 0.0
    %213 = vmatprep.subr.mxu0 0.0
    %214 = vmatpush1.xpose.msra.mxu0 0.0
    %215 = vmatprep.subr.mxu0 0.0
    %216 = vmatpush1.xpose.msra.mxu0 0.0
    %217 = vmatprep.subr.mxu0 0.0
    %218 = vmatpush1.xpose.msra.mxu0 0.0
    %219 = vmatprep.subr.mxu0 0.0
    %220 = vmatpush1.xpose.msra.mxu0 0.0
    %221 = vmatprep.subr.mxu0 0.0
    %222 = vmatpush1.xpose.msra.mxu0 0.0
    %223 = vmatprep.subr.mxu0 0.0
    %224 = vmatpush1.xpose.msra.mxu0 0.0
    %225 = vmatprep.subr.mxu0 0.0
    %226 = vmatpush1.xpose.msra.mxu0 0.0
    %227 = vmatprep.subr.mxu0 0.0
    %228 = vmatpush1.xpose.msra.mxu0 0.0
    %229 = vmatprep.subr.mxu0 0.0
    %230 = vmatpush1.xpose.msra.mxu0 0.0
    %231 = vmatprep.subr.mxu0 0.0
    %232 = vmatpush1.xpose.msra.mxu0 0.0
    %233 = vmatprep.subr.mxu0 0.0
    %234 = vmatpush1.xpose.msra.mxu0 0.0
    %235 = vmatprep.subr.mxu0 0.0
    %236 = vmatpush1.xpose.msra.mxu0 0.0
    %237 = vmatprep.subr.mxu0 0.0
    %238 = vmatpush1.xpose.msra.mxu0 0.0
    %239 = vmatprep.subr.mxu0 0.0
    %240 = vmatpush1.xpose.msra.mxu0 0.0
    %241 = vmatprep.subr.mxu0 0.0
    %242 = vmatpush1.xpose.msra.mxu0 0.0
    %243 = vmatprep.subr.mxu0 0.0
    %244 = vmatpush1.xpose.msra.mxu0 0.0
    %245 = vmatprep.subr.mxu0 0.0
    %246 = vmatpush1.xpose.msra.mxu0 0.0
    %247 = vmatprep.mubr.f32.mxu0 0.0
    %248 = vmatmul.mubr.f32.gmra.mrb[0].mxu0 %v175
    %v249 = vpop.f32.mrb[0].mxu0
    %v250 = vadd.f32 0.0, %v249
    %v251 = vpop.f32.mrb[0].mxu0
    %252 = vmatprep.mubr.f32.mxu0 0.0
    %253 = vmatmul.mubr.f32.gmra.mrb[0].mxu0 %v177
    %v254 = vpop.f32.mrb[0].mxu0
    %v255 = vadd.f32 0.0, %v254
    %v256 = vpop.f32.mrb[0].mxu0
    %257 = vmatprep.mubr.f32.mxu0 0.0
    %258 = vmatmul.mubr.f32.gmra.mrb[0].mxu0 %v179
    %v259 = vpop.f32.mrb[0].mxu0
    %v260 = vadd.f32 0.0, %v259
    %v261 = vpop.f32.mrb[0].mxu0
    %262 = vmatprep.mubr.f32.mxu0 0.0
    %263 = vmatmul.mubr.f32.gmra.mrb[0].mxu0 %v181
    %v264 = vpop.f32.mrb[0].mxu0
    %v265 = vadd.f32 0.0, %v264
    %v266 = vpop.f32.mrb[0].mxu0
    %267 = vdwg.mxu0
    %vm268 = vcmask 64512
    %v270 = vsel %vm268, %v155, 0
    %v273 = vsel %vm268, %v160, 0
    %275 = vmatprep.subr.mxu0 0.0
    %276 = vmatpush1.msra.mxu0 %v250
    %277 = vmatprep.subr.mxu0 0.0
    %278 = vmatpush1.msra.mxu0 0.0
    %279 = vmatprep.subr.mxu0 0.0
    %280 = vmatpush1.msra.mxu0 0.0
    %281 = vmatprep.subr.mxu0 0.0
    %282 = vmatpush1.msra.mxu0 0.0
    %283 = vmatprep.subr.mxu0 0.0
    %284 = vmatpush1.msra.mxu0 0.0
    %285 = vmatprep.subr.mxu0 0.0
    %286 = vmatpush1.msra.mxu0 0.0
    %287 = vmatprep.subr.mxu0 0.0
    %288 = vmatpush1.msra.mxu0 0.0
    %289 = vmatprep.subr.mxu0 0.0
    %290 = vmatpush1.msra.mxu0 0.0
    %291 = vmatprep.subr.mxu0 0.0
    %292 = vmatpush1.msra.mxu0 0.0
    %293 = vmatprep.subr.mxu0 0.0
    %294 = vmatpush1.msra.mxu0 0.0
    %295 = vmatprep.subr.mxu0 0.0
    %296 = vmatpush1.msra.mxu0 0.0
    %297 = vmatprep.subr.mxu0 0.0
    %298 = vmatpush1.msra.mxu0 0.0
    %299 = vmatprep.subr.mxu0 0.0
    %300 = vmatpush1.msra.mxu0 0.0
    %301 = vmatprep.subr.mxu0 0.0
    %302 = vmatpush1.msra.mxu0 0.0
    %303 = vmatprep.subr.mxu0 0.0
    %304 = vmatpush1.msra.mxu0 0.0
    %305 = vmatprep.subr.mxu0 0.0
    %306 = vmatpush1.msra.mxu0 0.0
    %307 = vmatprep.subr.mxu0 0.0
    %308 = vmatpush1.msra.mxu0 0.0
    %309 = vmatprep.subr.mxu0 0.0
    %310 = vmatpush1.msra.mxu0 0.0
    %311 = vmatprep.subr.mxu0 0.0
    %312 = vmatpush1.msra.mxu0 0.0
    %313 = vmatprep.subr.mxu0 0.0
    %314 = vmatpush1.msra.mxu0 0.0
    %315 = vmatprep.subr.mxu0 0.0
    %316 = vmatpush1.msra.mxu0 0.0
    %317 = vmatprep.subr.mxu0 0.0
    %318 = vmatpush1.msra.mxu0 0.0
    %319 = vmatprep.subr.mxu0 0.0
    %320 = vmatpush1.msra.mxu0 0.0
    %321 = vmatprep.subr.mxu0 0.0
    %322 = vmatpush1.msra.mxu0 0.0
    %323 = vmatprep.subr.mxu0 0.0
    %324 = vmatpush1.msra.mxu0 0.0
    %325 = vmatprep.subr.mxu0 0.0
    %326 = vmatpush1.msra.mxu0 0.0
    %327 = vmatprep.subr.mxu0 0.0
    %328 = vmatpush1.msra.mxu0 0.0
    %329 = vmatprep.subr.mxu0 0.0
    %330 = vmatpush1.msra.mxu0 0.0
    %331 = vmatprep.subr.mxu0 0.0
    %332 = vmatpush1.msra.mxu0 0.0
    %333 = vmatprep.subr.mxu0 0.0
    %334 = vmatpush1.msra.mxu0 0.0
    %335 = vmatprep.subr.mxu0 0.0
    %336 = vmatpush1.msra.mxu0 0.0
    %337 = vmatprep.subr.mxu0 0.0
    %338 = vmatpush1.msra.mxu0 0.0
    %339 = vmatprep.mubr.f32.mxu0 0.0
    %340 = vmatmul.mubr.f32.gmra.mrb[0].mxu0 %v270
    %v341 = vpop.f32.mrb[0].mxu0
    %v342 = vadd.f32 %v50, %v341
    %v343 = vpop.f32.mrb[0].mxu0
    %344 = vmatprep.mubr.f32.mxu0 0.0
    %345 = vmatmul.mubr.f32.gmra.mrb[0].mxu0 %v273
    %v346 = vpop.f32.mrb[0].mxu0
    %v347 = vadd.f32 %v51, %v346
    %v348 = vpop.f32.mrb[0].mxu0
    %349 = vdwg.mxu0
    %vm350 = vcmask 130048
    %v351 = vsel %vm350, %v342, -inf
    %352 = vmax.xlane.f32.xlu0 %v351
    %v353 = vpop.xlane.xlu0 %352
    %v354 = vsel %vm350, %v347, -inf
    %355 = vmax.xlane.f32.xlu0 %v354
    %v356 = vpop.xlane.xlu0 %355
    %v357 = vsub.f32 %v342, %v353
    %v358 = vsub.f32 %v347, %v356
    %v359 = vmul.f32 %v357, 1.442695
    %v360 = vpow.pop %v359
    %v361 = vmul.f32 %v358, 1.442695
    %v362 = vpow.pop %v361
    %v363 = vsel %vm350, %v360, 0.0
    %364 = vadd.xlane.f32.xlu0 %v363
    %v365 = vpop.xlane.xlu0 %364
    %v366 = vsel %vm350, %v362, 0.0
    %367 = vadd.xlane.f32.xlu0 %v366
    %v368 = vpop.xlane.xlu0 %367
    %v369 = vrcp.pop %v365
    %v370 = vmul.f32 %v360, %v369
    %v371 = vrcp.pop %v368
    %v372 = vmul.f32 %v362, %v371
    %373 = vrot.lane.b32.xlu0 %v155, 96
    %v374 = vpop.permute.xlu0 %373
    %375 = vrot.lane.b32.xlu0 %v160, 96
    %v376 = vpop.permute.xlu0 %375
    %v380 = vsel %vm350, %v370, 0
    %v383 = vsel %vm350, %v372, 0
    %385 = vmatprep.subr.mxu0 0.0
    %386 = vmatpush1.msra.mxu0 %v374
    %387 = vmatprep.subr.mxu0 0.0
    %388 = vmatpush1.msra.mxu0 %v376
    %389 = vmatprep.subr.mxu0 0.0
    %390 = vmatpush1.msra.mxu0 0.0
    %391 = vmatprep.subr.mxu0 0.0
    %392 = vmatpush1.msra.mxu0 0.0
    %393 = vmatprep.subr.mxu0 0.0
    %394 = vmatpush1.msra.mxu0 0.0
    %395 = vmatprep.subr.mxu0 0.0
    %396 = vmatpush1.msra.mxu0 0.0
    %397 = vmatprep.subr.mxu0 0.0
    %398 = vmatpush1.msra.mxu0 0.0
    %399 = vmatprep.subr.mxu0 0.0
    %400 = vmatpush1.msra.mxu0 0.0
    %401 = vmatprep.subr.mxu0 0.0
    %402 = vmatpush1.msra.mxu0 0.0
    %403 = vmatprep.subr.mxu0 0.0
    %404 = vmatpush1.msra.mxu0 0.0
    %405 = vmatprep.subr.mxu0 0.0
    %406 = vmatpush1.msra.mxu0 0.0
    %407 = vmatprep.subr.mxu0 0.0
    %408 = vmatpush1.msra.mxu0 0.0
    %409 = vmatprep.subr.mxu0 0.0
    %410 = vmatpush1.msra.mxu0 0.0
    %411 = vmatprep.subr.mxu0 0.0
    %412 = vmatpush1.msra.mxu0 0.0
    %413 = vmatprep.subr.mxu0 0.0
    %414 = vmatpush1.msra.mxu0 0.0
    %415 = vmatprep.subr.mxu0 0.0
    %416 = vmatpush1.msra.mxu0 0.0
    %417 = vmatprep.subr.mxu0 0.0
    %418 = vmatpush1.msra.mxu0 0.0
    %419 = vmatprep.subr.mxu0 0.0
    %420 = vmatpush1.msra.mxu0 0.0
    %421 = vmatprep.subr.mxu0 0.0
    %422 = vmatpush1.msra.mxu0 0.0
    %423 = vmatprep.subr.mxu0 0.0
    %424 = vmatpush1.msra.mxu0 0.0
    %425 = vmatprep.subr.mxu0 0.0
    %426 = vmatpush1.msra.mxu0 0.0
    %427 = vmatprep.subr.mxu0 0.0
    %428 = vmatpush1.msra.mxu0 0.0
    %429 = vmatprep.subr.mxu0 0.0
    %430 = vmatpush1.msra.mxu0 0.0
    %431 = vmatprep.subr.mxu0 0.0
    %432 = vmatpush1.msra.mxu0 0.0
    %433 = vmatprep.subr.mxu0 0.0
    %434 = vmatpush1.msra.mxu0 0.0
    %435 = vmatprep.subr.mxu0 0.0
    %436 = vmatpush1.msra.mxu0 0.0
    %437 = vmatprep.subr.mxu0 0.0
    %438 = vmatpush1.msra.mxu0 0.0
    %439 = vmatprep.subr.mxu0 0.0
    %440 = vmatpush1.msra.mxu0 0.0
    %441 = vmatprep.subr.mxu0 0.0
    %442 = vmatpush1.msra.mxu0 0.0
    %443 = vmatprep.subr.mxu0 0.0
    %444 = vmatpush1.msra.mxu0 0.0
    %445 = vmatprep.subr.mxu0 0.0
    %446 = vmatpush1.msra.mxu0 0.0
    %447 = vmatprep.subr.mxu0 0.0
    %448 = vmatpush1.msra.mxu0 0.0
    %449 = vmatprep.mubr.f32.mxu0 0.0
    %450 = vmatmul.mubr.f32.gmra.mrb[0].mxu0 %v380
    %v451 = vpop.f32.mrb[0].mxu0
    %v452 = vadd.f32 0.0, %v451
    %v453 = vpop.f32.mrb[0].mxu0
    %454 = vmatprep.mubr.f32.mxu0 0.0
    %455 = vmatmul.mubr.f32.gmra.mrb[0].mxu0 %v383
    %v456 = vpop.f32.mrb[0].mxu0
    %v457 = vadd.f32 0.0, %v456
    %v458 = vpop.f32.mrb[0].mxu0
    %459 = vdwg.mxu0
    %460 = vrot.lane.b32.xlu0 %v155, 120
    %v461 = vpop.permute.xlu0 %460
    %462 = vrot.lane.b32.xlu0 %v160, 120
    %v463 = vpop.permute.xlu0 %462
    %v464 = vsel %vm268, %v461, 0
    %v466 = vsel %vm268, %v463, 0
    %468 = vmatprep.subr.mxu0 0.0
    %469 = vmatpush1.msra.mxu0 %v255
    %470 = vmatprep.subr.mxu0 0.0
    %471 = vmatpush1.msra.mxu0 0.0
    %472 = vmatprep.subr.mxu0 0.0
    %473 = vmatpush1.msra.mxu0 0.0
    %474 = vmatprep.subr.mxu0 0.0
    %475 = vmatpush1.msra.mxu0 0.0
    %476 = vmatprep.subr.mxu0 0.0
    %477 = vmatpush1.msra.mxu0 0.0
    %478 = vmatprep.subr.mxu0 0.0
    %479 = vmatpush1.msra.mxu0 0.0
    %480 = vmatprep.subr.mxu0 0.0
    %481 = vmatpush1.msra.mxu0 0.0
    %482 = vmatprep.subr.mxu0 0.0
    %483 = vmatpush1.msra.mxu0 0.0
    %484 = vmatprep.subr.mxu0 0.0
    %485 = vmatpush1.msra.mxu0 0.0
    %486 = vmatprep.subr.mxu0 0.0
    %487 = vmatpush1.msra.mxu0 0.0
    %488 = vmatprep.subr.mxu0 0.0
    %489 = vmatpush1.msra.mxu0 0.0
    %490 = vmatprep.subr.mxu0 0.0
    %491 = vmatpush1.msra.mxu0 0.0
    %492 = vmatprep.subr.mxu0 0.0
    %493 = vmatpush1.msra.mxu0 0.0
    %494 = vmatprep.subr.mxu0 0.0
    %495 = vmatpush1.msra.mxu0 0.0
    %496 = vmatprep.subr.mxu0 0.0
    %497 = vmatpush1.msra.mxu0 0.0
    %498 = vmatprep.subr.mxu0 0.0
    %499 = vmatpush1.msra.mxu0 0.0
    %500 = vmatprep.subr.mxu0 0.0
    %501 = vmatpush1.msra.mxu0 0.0
    %502 = vmatprep.subr.mxu0 0.0
    %503 = vmatpush1.msra.mxu0 0.0
    %504 = vmatprep.subr.mxu0 0.0
    %505 = vmatpush1.msra.mxu0 0.0
    %506 = vmatprep.subr.mxu0 0.0
    %507 = vmatpush1.msra.mxu0 0.0
    %508 = vmatprep.subr.mxu0 0.0
    %509 = vmatpush1.msra.mxu0 0.0
    %510 = vmatprep.subr.mxu0 0.0
    %511 = vmatpush1.msra.mxu0 0.0
    %512 = vmatprep.subr.mxu0 0.0
    %513 = vmatpush1.msra.mxu0 0.0
    %514 = vmatprep.subr.mxu0 0.0
    %515 = vmatpush1.msra.mxu0 0.0
    %516 = vmatprep.subr.mxu0 0.0
    %517 = vmatpush1.msra.mxu0 0.0
    %518 = vmatprep.subr.mxu0 0.0
    %519 = vmatpush1.msra.mxu0 0.0
    %520 = vmatprep.subr.mxu0 0.0
    %521 = vmatpush1.msra.mxu0 0.0
    %522 = vmatprep.subr.mxu0 0.0
    %523 = vmatpush1.msra.mxu0 0.0
    %524 = vmatprep.subr.mxu0 0.0
    %525 = vmatpush1.msra.mxu0 0.0
    %526 = vmatprep.subr.mxu0 0.0
    %527 = vmatpush1.msra.mxu0 0.0
    %528 = vmatprep.subr.mxu0 0.0
    %529 = vmatpush1.msra.mxu0 0.0
    %530 = vmatprep.subr.mxu0 0.0
    %531 = vmatpush1.msra.mxu0 0.0
    %532 = vmatprep.mubr.f32.mxu0 0.0
    %533 = vmatmul.mubr.f32.gmra.mrb[0].mxu0 %v464
    %v534 = vpop.f32.mrb[0].mxu0
    %v535 = vadd.f32 %v50, %v534
    %v536 = vpop.f32.mrb[0].mxu0
    %537 = vmatprep.mubr.f32.mxu0 0.0
    %538 = vmatmul.mubr.f32.gmra.mrb[0].mxu0 %v466
    %v539 = vpop.f32.mrb[0].mxu0
    %v540 = vadd.f32 %v51, %v539
    %v541 = vpop.f32.mrb[0].mxu0
    %542 = vdwg.mxu0
    %v543 = vsel %vm350, %v535, -inf
    %544 = vmax.xlane.f32.xlu0 %v543
    %v545 = vpop.xlane.xlu0 %544
    %v546 = vsel %vm350, %v540, -inf
    %547 = vmax.xlane.f32.xlu0 %v546
    %v548 = vpop.xlane.xlu0 %547
    %v549 = vsub.f32 %v535, %v545
    %v550 = vsub.f32 %v540, %v548
    %v551 = vmul.f32 %v549, 1.442695
    %v552 = vpow.pop %v551
    %v553 = vmul.f32 %v550, 1.442695
    %v554 = vpow.pop %v553
    %v555 = vsel %vm350, %v552, 0.0
    %556 = vadd.xlane.f32.xlu0 %v555
    %v557 = vpop.xlane.xlu0 %556
    %v558 = vsel %vm350, %v554, 0.0
    %559 = vadd.xlane.f32.xlu0 %v558
    %v560 = vpop.xlane.xlu0 %559
    %v561 = vrcp.pop %v557
    %v562 = vmul.f32 %v552, %v561
    %v563 = vrcp.pop %v560
    %v564 = vmul.f32 %v554, %v563
    %565 = vrot.lane.b32.xlu0 %v155, 88
    %v566 = vpop.permute.xlu0 %565
    %567 = vrot.lane.b32.xlu0 %v160, 88
    %v568 = vpop.permute.xlu0 %567
    %v572 = vsel %vm350, %v562, 0
    %v575 = vsel %vm350, %v564, 0
    %577 = vmatprep.subr.mxu0 0.0
    %578 = vmatpush1.msra.mxu0 %v566
    %579 = vmatprep.subr.mxu0 0.0
    %580 = vmatpush1.msra.mxu0 %v568
    %581 = vmatprep.subr.mxu0 0.0
    %582 = vmatpush1.msra.mxu0 0.0
    %583 = vmatprep.subr.mxu0 0.0
    %584 = vmatpush1.msra.mxu0 0.0
    %585 = vmatprep.subr.mxu0 0.0
    %586 = vmatpush1.msra.mxu0 0.0
    %587 = vmatprep.subr.mxu0 0.0
    %588 = vmatpush1.msra.mxu0 0.0
    %589 = vmatprep.subr.mxu0 0.0
    %590 = vmatpush1.msra.mxu0 0.0
    %591 = vmatprep.subr.mxu0 0.0
    %592 = vmatpush1.msra.mxu0 0.0
    %593 = vmatprep.subr.mxu0 0.0
    %594 = vmatpush1.msra.mxu0 0.0
    %595 = vmatprep.subr.mxu0 0.0
    %596 = vmatpush1.msra.mxu0 0.0
    %597 = vmatprep.subr.mxu0 0.0
    %598 = vmatpush1.msra.mxu0 0.0
    %599 = vmatprep.subr.mxu0 0.0
    %600 = vmatpush1.msra.mxu0 0.0
    %601 = vmatprep.subr.mxu0 0.0
    %602 = vmatpush1.msra.mxu0 0.0
    %603 = vmatprep.subr.mxu0 0.0
    %604 = vmatpush1.msra.mxu0 0.0
    %605 = vmatprep.subr.mxu0 0.0
    %606 = vmatpush1.msra.mxu0 0.0
    %607 = vmatprep.subr.mxu0 0.0
    %608 = vmatpush1.msra.mxu0 0.0
    %609 = vmatprep.subr.mxu0 0.0
    %610 = vmatpush1.msra.mxu0 0.0
    %611 = vmatprep.subr.mxu0 0.0
    %612 = vmatpush1.msra.mxu0 0.0
    %613 = vmatprep.subr.mxu0 0.0
    %614 = vmatpush1.msra.mxu0 0.0
    %615 = vmatprep.subr.mxu0 0.0
    %616 = vmatpush1.msra.mxu0 0.0
    %617 = vmatprep.subr.mxu0 0.0
    %618 = vmatpush1.msra.mxu0 0.0
    %619 = vmatprep.subr.mxu0 0.0
    %620 = vmatpush1.msra.mxu0 0.0
    %621 = vmatprep.subr.mxu0 0.0
    %622 = vmatpush1.msra.mxu0 0.0
    %623 = vmatprep.subr.mxu0 0.0
    %624 = vmatpush1.msra.mxu0 0.0
    %625 = vmatprep.subr.mxu0 0.0
    %626 = vmatpush1.msra.mxu0 0.0
    %627 = vmatprep.subr.mxu0 0.0
    %628 = vmatpush1.msra.mxu0 0.0
    %629 = vmatprep.subr.mxu0 0.0
    %630 = vmatpush1.msra.mxu0 0.0
    %631 = vmatprep.subr.mxu0 0.0
    %632 = vmatpush1.msra.mxu0 0.0
    %633 = vmatprep.subr.mxu0 0.0
    %634 = vmatpush1.msra.mxu0 0.0
    %635 = vmatprep.subr.mxu0 0.0
    %636 = vmatpush1.msra.mxu0 0.0
    %637 = vmatprep.subr.mxu0 0.0
    %638 = vmatpush1.msra.mxu0 0.0
    %639 = vmatprep.subr.mxu0 0.0
    %640 = vmatpush1.msra.mxu0 0.0
    %641 = vmatprep.mubr.f32.mxu0 0.0
    %642 = vmatmul.mubr.f32.gmra.mrb[0].mxu0 %v572
    %v643 = vpop.f32.mrb[0].mxu0
    %v644 = vadd.f32 0.0, %v643
    %v645 = vpop.f32.mrb[0].mxu0
    %646 = vmatprep.mubr.f32.mxu0 0.0
    %647 = vmatmul.mubr.f32.gmra.mrb[0].mxu0 %v575
    %v648 = vpop.f32.mrb[0].mxu0
    %v649 = vadd.f32 0.0, %v648
    %v650 = vpop.f32.mrb[0].mxu0
    %651 = vdwg.mxu0
    %652 = vrot.lane.b32.xlu0 %v54, 32
    %v653 = vpop.permute.xlu0 %652
    %v656 = vsel %vm268, %v644, 0
    %v659 = vsel %vm268, %v649, 0
    %661 = vmatprep.subr.mxu0 0.0
    %662 = vmatpush1.msra.mxu0 %v653
    %663 = vmatprep.subr.mxu0 0.0
    %664 = vmatpush1.msra.mxu0 0.0
    %665 = vmatprep.subr.mxu0 0.0
    %666 = vmatpush1.msra.mxu0 0.0
    %667 = vmatprep.subr.mxu0 0.0
    %668 = vmatpush1.msra.mxu0 0.0
    %669 = vmatprep.subr.mxu0 0.0
    %670 = vmatpush1.msra.mxu0 0.0
    %671 = vmatprep.subr.mxu0 0.0
    %672 = vmatpush1.msra.mxu0 0.0
    %673 = vmatprep.subr.mxu0 0.0
    %674 = vmatpush1.msra.mxu0 0.0
    %675 = vmatprep.subr.mxu0 0.0
    %676 = vmatpush1.msra.mxu0 0.0
    %677 = vmatprep.subr.mxu0 0.0
    %678 = vmatpush1.msra.mxu0 0.0
    %679 = vmatprep.subr.mxu0 0.0
    %680 = vmatpush1.msra.mxu0 0.0
    %681 = vmatprep.subr.mxu0 0.0
    %682 = vmatpush1.msra.mxu0 0.0
    %683 = vmatprep.subr.mxu0 0.0
    %684 = vmatpush1.msra.mxu0 0.0
    %685 = vmatprep.subr.mxu0 0.0
    %686 = vmatpush1.msra.mxu0 0.0
    %687 = vmatprep.subr.mxu0 0.0
    %688 = vmatpush1.msra.mxu0 0.0
    %689 = vmatprep.subr.mxu0 0.0
    %690 = vmatpush1.msra.mxu0 0.0
    %691 = vmatprep.subr.mxu0 0.0
    %692 = vmatpush1.msra.mxu0 0.0
    %693 = vmatprep.subr.mxu0 0.0
    %694 = vmatpush1.msra.mxu0 0.0
    %695 = vmatprep.subr.mxu0 0.0
    %696 = vmatpush1.msra.mxu0 0.0
    %697 = vmatprep.subr.mxu0 0.0
    %698 = vmatpush1.msra.mxu0 0.0
    %699 = vmatprep.subr.mxu0 0.0
    %700 = vmatpush1.msra.mxu0 0.0
    %701 = vmatprep.subr.mxu0 0.0
    %702 = vmatpush1.msra.mxu0 0.0
    %703 = vmatprep.subr.mxu0 0.0
    %704 = vmatpush1.msra.mxu0 0.0
    %705 = vmatprep.subr.mxu0 0.0
    %706 = vmatpush1.msra.mxu0 0.0
    %707 = vmatprep.subr.mxu0 0.0
    %708 = vmatpush1.msra.mxu0 0.0
    %709 = vmatprep.subr.mxu0 0.0
    %710 = vmatpush1.msra.mxu0 0.0
    %711 = vmatprep.subr.mxu0 0.0
    %712 = vmatpush1.msra.mxu0 0.0
    %713 = vmatprep.subr.mxu0 0.0
    %714 = vmatpush1.msra.mxu0 0.0
    %715 = vmatprep.subr.mxu0 0.0
    %716 = vmatpush1.msra.mxu0 0.0
    %717 = vmatprep.subr.mxu0 0.0
    %718 = vmatpush1.msra.mxu0 0.0
    %719 = vmatprep.subr.mxu0 0.0
    %720 = vmatpush1.msra.mxu0 0.0
    %721 = vmatprep.subr.mxu0 0.0
    %722 = vmatpush1.msra.mxu0 0.0
    %723 = vmatprep.subr.mxu0 0.0
    %724 = vmatpush1.msra.mxu0 0.0
    %725 = vmatprep.mubr.f32.mxu0 0.0
    %726 = vmatmul.mubr.f32.gmra.mrb[0].mxu0 %v656
    %v727 = vpop.f32.mrb[0].mxu0
    %v728 = vadd.f32 0.0, %v727
    %v729 = vpop.f32.mrb[0].mxu0
    %730 = vmatprep.mubr.f32.mxu0 0.0
    %731 = vmatmul.mubr.f32.gmra.mrb[0].mxu0 %v659
    %v732 = vpop.f32.mrb[0].mxu0
    %v733 = vadd.f32 0.0, %v732
    %v734 = vpop.f32.mrb[0].mxu0
    %735 = vdwg.mxu0
    %736 = vrot.lane.b32.xlu0 %v52, 32
    %v737 = vpop.permute.xlu0 %736
    %v740 = vsel %vm268, %v452, 0
    %v743 = vsel %vm268, %v457, 0
    %745 = vmatprep.subr.mxu0 0.0
    %746 = vmatpush1.msra.mxu0 %v737
    %747 = vmatprep.subr.mxu0 0.0
    %748 = vmatpush1.msra.mxu0 0.0
    %749 = vmatprep.subr.mxu0 0.0
    %750 = vmatpush1.msra.mxu0 0.0
    %751 = vmatprep.subr.mxu0 0.0
    %752 = vmatpush1.msra.mxu0 0.0
    %753 = vmatprep.subr.mxu0 0.0
    %754 = vmatpush1.msra.mxu0 0.0
    %755 = vmatprep.subr.mxu0 0.0
    %756 = vmatpush1.msra.mxu0 0.0
    %757 = vmatprep.subr.mxu0 0.0
    %758 = vmatpush1.msra.mxu0 0.0
    %759 = vmatprep.subr.mxu0 0.0
    %760 = vmatpush1.msra.mxu0 0.0
    %761 = vmatprep.subr.mxu0 0.0
    %762 = vmatpush1.msra.mxu0 0.0
    %763 = vmatprep.subr.mxu0 0.0
    %764 = vmatpush1.msra.mxu0 0.0
    %765 = vmatprep.subr.mxu0 0.0
    %766 = vmatpush1.msra.mxu0 0.0
    %767 = vmatprep.subr.mxu0 0.0
    %768 = vmatpush1.msra.mxu0 0.0
    %769 = vmatprep.subr.mxu0 0.0
    %770 = vmatpush1.msra.mxu0 0.0
    %771 = vmatprep.subr.mxu0 0.0
    %772 = vmatpush1.msra.mxu0 0.0
    %773 = vmatprep.subr.mxu0 0.0
    %774 = vmatpush1.msra.mxu0 0.0
    %775 = vmatprep.subr.mxu0 0.0
    %776 = vmatpush1.msra.mxu0 0.0
    %777 = vmatprep.subr.mxu0 0.0
    %778 = vmatpush1.msra.mxu0 0.0
    %779 = vmatprep.subr.mxu0 0.0
    %780 = vmatpush1.msra.mxu0 0.0
    %781 = vmatprep.subr.mxu0 0.0
    %782 = vmatpush1.msra.mxu0 0.0
    %783 = vmatprep.subr.mxu0 0.0
    %784 = vmatpush1.msra.mxu0 0.0
    %785 = vmatprep.subr.mxu0 0.0
    %786 = vmatpush1.msra.mxu0 0.0
    %787 = vmatprep.subr.mxu0 0.0
    %788 = vmatpush1.msra.mxu0 0.0
    %789 = vmatprep.subr.mxu0 0.0
    %790 = vmatpush1.msra.mxu0 0.0
    %791 = vmatprep.subr.mxu0 0.0
    %792 = vmatpush1.msra.mxu0 0.0
    %793 = vmatprep.subr.mxu0 0.0
    %794 = vmatpush1.msra.mxu0 0.0
    %795 = vmatprep.subr.mxu0 0.0
    %796 = vmatpush1.msra.mxu0 0.0
    %797 = vmatprep.subr.mxu0 0.0
    %798 = vmatpush1.msra.mxu0 0.0
    %799 = vmatprep.subr.mxu0 0.0
    %800 = vmatpush1.msra.mxu0 0.0
    %801 = vmatprep.subr.mxu0 0.0
    %802 = vmatpush1.msra.mxu0 0.0
    %803 = vmatprep.subr.mxu0 0.0
    %804 = vmatpush1.msra.mxu0 0.0
    %805 = vmatprep.subr.mxu0 0.0
    %806 = vmatpush1.msra.mxu0 0.0
    %807 = vmatprep.subr.mxu0 0.0
    %808 = vmatpush1.msra.mxu0 0.0
    %809 = vmatprep.mubr.f32.mxu0 0.0
    %810 = vmatmul.mubr.f32.gmra.mrb[0].mxu0 %v740
    %v811 = vpop.f32.mrb[0].mxu0
    %v812 = vadd.f32 %v728, %v811
    %v813 = vpop.f32.mrb[0].mxu0
    %814 = vmatprep.mubr.f32.mxu0 0.0
    %815 = vmatmul.mubr.f32.gmra.mrb[0].mxu0 %v743
    %v816 = vpop.f32.mrb[0].mxu0
    %v817 = vadd.f32 %v733, %v816
    %v818 = vpop.f32.mrb[0].mxu0
    %819 = vdwg.mxu0
    %820 = vrot.lane.b32.xlu0 %v155, 112
    %v821 = vpop.permute.xlu0 %820
    %822 = vrot.lane.b32.xlu0 %v160, 112
    %v823 = vpop.permute.xlu0 %822
    %v824 = vsel %vm268, %v821, 0
    %v826 = vsel %vm268, %v823, 0
    %828 = vmatprep.subr.mxu0 0.0
    %829 = vmatpush1.msra.mxu0 %v260
    %830 = vmatprep.subr.mxu0 0.0
    %831 = vmatpush1.msra.mxu0 0.0
    %832 = vmatprep.subr.mxu0 0.0
    %833 = vmatpush1.msra.mxu0 0.0
    %834 = vmatprep.subr.mxu0 0.0
    %835 = vmatpush1.msra.mxu0 0.0
    %836 = vmatprep.subr.mxu0 0.0
    %837 = vmatpush1.msra.mxu0 0.0
    %838 = vmatprep.subr.mxu0 0.0
    %839 = vmatpush1.msra.mxu0 0.0
    %840 = vmatprep.subr.mxu0 0.0
    %841 = vmatpush1.msra.mxu0 0.0
    %842 = vmatprep.subr.mxu0 0.0
    %843 = vmatpush1.msra.mxu0 0.0
    %844 = vmatprep.subr.mxu0 0.0
    %845 = vmatpush1.msra.mxu0 0.0
    %846 = vmatprep.subr.mxu0 0.0
    %847 = vmatpush1.msra.mxu0 0.0
    %848 = vmatprep.subr.mxu0 0.0
    %849 = vmatpush1.msra.mxu0 0.0
    %850 = vmatprep.subr.mxu0 0.0
    %851 = vmatpush1.msra.mxu0 0.0
    %852 = vmatprep.subr.mxu0 0.0
    %853 = vmatpush1.msra.mxu0 0.0
    %854 = vmatprep.subr.mxu0 0.0
    %855 = vmatpush1.msra.mxu0 0.0
    %856 = vmatprep.subr.mxu0 0.0
    %857 = vmatpush1.msra.mxu0 0.0
    %858 = vmatprep.subr.mxu0 0.0
    %859 = vmatpush1.msra.mxu0 0.0
    %860 = vmatprep.subr.mxu0 0.0
    %861 = vmatpush1.msra.mxu0 0.0
    %862 = vmatprep.subr.mxu0 0.0
    %863 = vmatpush1.msra.mxu0 0.0
    %864 = vmatprep.subr.mxu0 0.0
    %865 = vmatpush1.msra.mxu0 0.0
    %866 = vmatprep.subr.mxu0 0.0
    %867 = vmatpush1.msra.mxu0 0.0
    %868 = vmatprep.subr.mxu0 0.0
    %869 = vmatpush1.msra.mxu0 0.0
    %870 = vmatprep.subr.mxu0 0.0
    %871 = vmatpush1.msra.mxu0 0.0
    %872 = vmatprep.subr.mxu0 0.0
    %873 = vmatpush1.msra.mxu0 0.0
    %874 = vmatprep.subr.mxu0 0.0
    %875 = vmatpush1.msra.mxu0 0.0
    %876 = vmatprep.subr.mxu0 0.0
    %877 = vmatpush1.msra.mxu0 0.0
    %878 = vmatprep.subr.mxu0 0.0
    %879 = vmatpush1.msra.mxu0 0.0
    %880 = vmatprep.subr.mxu0 0.0
    %881 = vmatpush1.msra.mxu0 0.0
    %882 = vmatprep.subr.mxu0 0.0
    %883 = vmatpush1.msra.mxu0 0.0
    %884 = vmatprep.subr.mxu0 0.0
    %885 = vmatpush1.msra.mxu0 0.0
    %886 = vmatprep.subr.mxu0 0.0
    %887 = vmatpush1.msra.mxu0 0.0
    %888 = vmatprep.subr.mxu0 0.0
    %889 = vmatpush1.msra.mxu0 0.0
    %890 = vmatprep.subr.mxu0 0.0
    %891 = vmatpush1.msra.mxu0 0.0
    %892 = vmatprep.mubr.f32.mxu0 0.0
    %893 = vmatmul.mubr.f32.gmra.mrb[0].mxu0 %v824
    %v894 = vpop.f32.mrb[0].mxu0
    %v895 = vadd.f32 %v50, %v894
    %v896 = vpop.f32.mrb[0].mxu0
    %897 = vmatprep.mubr.f32.mxu0 0.0
    %898 = vmatmul.mubr.f32.gmra.mrb[0].mxu0 %v826
    %v899 = vpop.f32.mrb[0].mxu0
    %v900 = vadd.f32 %v51, %v899
    %v901 = vpop.f32.mrb[0].mxu0
    %902 = vdwg.mxu0
    %v903 = vsel %vm350, %v895, -inf
    %904 = vmax.xlane.f32.xlu0 %v903
    %v905 = vpop.xlane.xlu0 %904
    %v906 = vsel %vm350, %v900, -inf
    %907 = vmax.xlane.f32.xlu0 %v906
    %v908 = vpop.xlane.xlu0 %907
    %v909 = vsub.f32 %v895, %v905
    %v910 = vsub.f32 %v900, %v908
    %v911 = vmul.f32 %v909, 1.442695
    %v912 = vpow.pop %v911
    %v913 = vmul.f32 %v910, 1.442695
    %v914 = vpow.pop %v913
    %v915 = vsel %vm350, %v912, 0.0
    %916 = vadd.xlane.f32.xlu0 %v915
    %v917 = vpop.xlane.xlu0 %916
    %v918 = vsel %vm350, %v914, 0.0
    %919 = vadd.xlane.f32.xlu0 %v918
    %v920 = vpop.xlane.xlu0 %919
    %v921 = vrcp.pop %v917
    %v922 = vmul.f32 %v912, %v921
    %v923 = vrcp.pop %v920
    %v924 = vmul.f32 %v914, %v923
    %925 = vrot.lane.b32.xlu0 %v155, 80
    %v926 = vpop.permute.xlu0 %925
    %927 = vrot.lane.b32.xlu0 %v160, 80
    %v928 = vpop.permute.xlu0 %927
    %v932 = vsel %vm350, %v922, 0
    %v935 = vsel %vm350, %v924, 0
    %937 = vmatprep.subr.mxu0 0.0
    %938 = vmatpush1.msra.mxu0 %v926
    %939 = vmatprep.subr.mxu0 0.0
    %940 = vmatpush1.msra.mxu0 %v928
    %941 = vmatprep.subr.mxu0 0.0
    %942 = vmatpush1.msra.mxu0 0.0
    %943 = vmatprep.subr.mxu0 0.0
    %944 = vmatpush1.msra.mxu0 0.0
    %945 = vmatprep.subr.mxu0 0.0
    %946 = vmatpush1.msra.mxu0 0.0
    %947 = vmatprep.subr.mxu0 0.0
    %948 = vmatpush1.msra.mxu0 0.0
    %949 = vmatprep.subr.mxu0 0.0
    %950 = vmatpush1.msra.mxu0 0.0
    %951 = vmatprep.subr.mxu0 0.0
    %952 = vmatpush1.msra.mxu0 0.0
    %953 = vmatprep.subr.mxu0 0.0
    %954 = vmatpush1.msra.mxu0 0.0
    %955 = vmatprep.subr.mxu0 0.0
    %956 = vmatpush1.msra.mxu0 0.0
    %957 = vmatprep.subr.mxu0 0.0
    %958 = vmatpush1.msra.mxu0 0.0
    %959 = vmatprep.subr.mxu0 0.0
    %960 = vmatpush1.msra.mxu0 0.0
    %961 = vmatprep.subr.mxu0 0.0
    %962 = vmatpush1.msra.mxu0 0.0
    %963 = vmatprep.subr.mxu0 0.0
    %964 = vmatpush1.msra.mxu0 0.0
    %965 = vmatprep.subr.mxu0 0.0
    %966 = vmatpush1.msra.mxu0 0.0
    %967 = vmatprep.subr.mxu0 0.0
    %968 = vmatpush1.msra.mxu0 0.0
    %969 = vmatprep.subr.mxu0 0.0
    %970 = vmatpush1.msra.mxu0 0.0
    %971 = vmatprep.subr.mxu0 0.0
    %972 = vmatpush1.msra.mxu0 0.0
    %973 = vmatprep.subr.mxu0 0.0
    %974 = vmatpush1.msra.mxu0 0.0
    %975 = vmatprep.subr.mxu0 0.0
    %976 = vmatpush1.msra.mxu0 0.0
    %977 = vmatprep.subr.mxu0 0.0
    %978 = vmatpush1.msra.mxu0 0.0
    %979 = vmatprep.subr.mxu0 0.0
    %980 = vmatpush1.msra.mxu0 0.0
    %981 = vmatprep.subr.mxu0 0.0
    %982 = vmatpush1.msra.mxu0 0.0
    %983 = vmatprep.subr.mxu0 0.0
    %984 = vmatpush1.msra.mxu0 0.0
    %985 = vmatprep.subr.mxu0 0.0
    %986 = vmatpush1.msra.mxu0 0.0
    %987 = vmatprep.subr.mxu0 0.0
    %988 = vmatpush1.msra.mxu0 0.0
    %989 = vmatprep.subr.mxu0 0.0
    %990 = vmatpush1.msra.mxu0 0.0
    %991 = vmatprep.subr.mxu0 0.0
    %992 = vmatpush1.msra.mxu0 0.0
    %993 = vmatprep.subr.mxu0 0.0
    %994 = vmatpush1.msra.mxu0 0.0
    %995 = vmatprep.subr.mxu0 0.0
    %996 = vmatpush1.msra.mxu0 0.0
    %997 = vmatprep.subr.mxu0 0.0
    %998 = vmatpush1.msra.mxu0 0.0
    %999 = vmatprep.subr.mxu0 0.0
    %1000 = vmatpush1.msra.mxu0 0.0
    %1001 = vmatprep.mubr.f32.mxu0 0.0
    %1002 = vmatmul.mubr.f32.gmra.mrb[0].mxu0 %v932
    %v1003 = vpop.f32.mrb[0].mxu0
    %v1004 = vadd.f32 0.0, %v1003
    %v1005 = vpop.f32.mrb[0].mxu0
    %1006 = vmatprep.mubr.f32.mxu0 0.0
    %1007 = vmatmul.mubr.f32.gmra.mrb[0].mxu0 %v935
    %v1008 = vpop.f32.mrb[0].mxu0
    %v1009 = vadd.f32 0.0, %v1008
    %v1010 = vpop.f32.mrb[0].mxu0
    %1011 = vdwg.mxu0
    %1012 = vrot.lane.b32.xlu0 %v56, 32
    %v1013 = vpop.permute.xlu0 %1012
    %v1016 = vsel %vm268, %v1004, 0
    %v1019 = vsel %vm268, %v1009, 0
    %1021 = vmatprep.subr.mxu0 0.0
    %1022 = vmatpush1.msra.mxu0 %v1013
    %1023 = vmatprep.subr.mxu0 0.0
    %1024 = vmatpush1.msra.mxu0 0.0
    %1025 = vmatprep.subr.mxu0 0.0
    %1026 = vmatpush1.msra.mxu0 0.0
    %1027 = vmatprep.subr.mxu0 0.0
    %1028 = vmatpush1.msra.mxu0 0.0
    %1029 = vmatprep.subr.mxu0 0.0
    %1030 = vmatpush1.msra.mxu0 0.0
    %1031 = vmatprep.subr.mxu0 0.0
    %1032 = vmatpush1.msra.mxu0 0.0
    %1033 = vmatprep.subr.mxu0 0.0
    %1034 = vmatpush1.msra.mxu0 0.0
    %1035 = vmatprep.subr.mxu0 0.0
    %1036 = vmatpush1.msra.mxu0 0.0
    %1037 = vmatprep.subr.mxu0 0.0
    %1038 = vmatpush1.msra.mxu0 0.0
    %1039 = vmatprep.subr.mxu0 0.0
    %1040 = vmatpush1.msra.mxu0 0.0
    %1041 = vmatprep.subr.mxu0 0.0
    %1042 = vmatpush1.msra.mxu0 0.0
    %1043 = vmatprep.subr.mxu0 0.0
    %1044 = vmatpush1.msra.mxu0 0.0
    %1045 = vmatprep.subr.mxu0 0.0
    %1046 = vmatpush1.msra.mxu0 0.0
    %1047 = vmatprep.subr.mxu0 0.0
    %1048 = vmatpush1.msra.mxu0 0.0
    %1049 = vmatprep.subr.mxu0 0.0
    %1050 = vmatpush1.msra.mxu0 0.0
    %1051 = vmatprep.subr.mxu0 0.0
    %1052 = vmatpush1.msra.mxu0 0.0
    %1053 = vmatprep.subr.mxu0 0.0
    %1054 = vmatpush1.msra.mxu0 0.0
    %1055 = vmatprep.subr.mxu0 0.0
    %1056 = vmatpush1.msra.mxu0 0.0
    %1057 = vmatprep.subr.mxu0 0.0
    %1058 = vmatpush1.msra.mxu0 0.0
    %1059 = vmatprep.subr.mxu0 0.0
    %1060 = vmatpush1.msra.mxu0 0.0
    %1061 = vmatprep.subr.mxu0 0.0
    %1062 = vmatpush1.msra.mxu0 0.0
    %1063 = vmatprep.subr.mxu0 0.0
    %1064 = vmatpush1.msra.mxu0 0.0
    %1065 = vmatprep.subr.mxu0 0.0
    %1066 = vmatpush1.msra.mxu0 0.0
    %1067 = vmatprep.subr.mxu0 0.0
    %1068 = vmatpush1.msra.mxu0 0.0
    %1069 = vmatprep.subr.mxu0 0.0
    %1070 = vmatpush1.msra.mxu0 0.0
    %1071 = vmatprep.subr.mxu0 0.0
    %1072 = vmatpush1.msra.mxu0 0.0
    %1073 = vmatprep.subr.mxu0 0.0
    %1074 = vmatpush1.msra.mxu0 0.0
    %1075 = vmatprep.subr.mxu0 0.0
    %1076 = vmatpush1.msra.mxu0 0.0
    %1077 = vmatprep.subr.mxu0 0.0
    %1078 = vmatpush1.msra.mxu0 0.0
    %1079 = vmatprep.subr.mxu0 0.0
    %1080 = vmatpush1.msra.mxu0 0.0
    %1081 = vmatprep.subr.mxu0 0.0
    %1082 = vmatpush1.msra.mxu0 0.0
    %1083 = vmatprep.subr.mxu0 0.0
    %1084 = vmatpush1.msra.mxu0 0.0
    %1085 = vmatprep.mubr.f32.mxu0 0.0
    %1086 = vmatmul.mubr.f32.gmra.mrb[0].mxu0 %v1016
    %v1087 = vpop.f32.mrb[0].mxu0
    %v1088 = vadd.f32 0.0, %v1087
    %v1089 = vpop.f32.mrb[0].mxu0
    %1090 = vmatprep.mubr.f32.mxu0 0.0
    %1091 = vmatmul.mubr.f32.gmra.mrb[0].mxu0 %v1019
    %v1092 = vpop.f32.mrb[0].mxu0
    %v1093 = vadd.f32 0.0, %v1092
    %v1094 = vpop.f32.mrb[0].mxu0
    %1095 = vdwg.mxu0
    %v1096 = vadd.f32 %v812, %v1088
    %v1097 = vadd.f32 %v817, %v1093
    %1098 = vrot.lane.b32.xlu0 %v155, 104
    %v1099 = vpop.permute.xlu0 %1098
    %1100 = vrot.lane.b32.xlu0 %v160, 104
    %v1101 = vpop.permute.xlu0 %1100
    %v1102 = vsel %vm268, %v1099, 0
    %v1104 = vsel %vm268, %v1101, 0
    %1106 = vmatprep.subr.mxu0 0.0
    %1107 = vmatpush1.msra.mxu0 %v265
    %1108 = vmatprep.subr.mxu0 0.0
    %1109 = vmatpush1.msra.mxu0 0.0
    %1110 = vmatprep.subr.mxu0 0.0
    %1111 = vmatpush1.msra.mxu0 0.0
    %1112 = vmatprep.subr.mxu0 0.0
    %1113 = vmatpush1.msra.mxu0 0.0
    %1114 = vmatprep.subr.mxu0 0.0
    %1115 = vmatpush1.msra.mxu0 0.0
    %1116 = vmatprep.subr.mxu0 0.0
    %1117 = vmatpush1.msra.mxu0 0.0
    %1118 = vmatprep.subr.mxu0 0.0
    %1119 = vmatpush1.msra.mxu0 0.0
    %1120 = vmatprep.subr.mxu0 0.0
    %1121 = vmatpush1.msra.mxu0 0.0
    %1122 = vmatprep.subr.mxu0 0.0
    %1123 = vmatpush1.msra.mxu0 0.0
    %1124 = vmatprep.subr.mxu0 0.0
    %1125 = vmatpush1.msra.mxu0 0.0
    %1126 = vmatprep.subr.mxu0 0.0
    %1127 = vmatpush1.msra.mxu0 0.0
    %1128 = vmatprep.subr.mxu0 0.0
    %1129 = vmatpush1.msra.mxu0 0.0
    %1130 = vmatprep.subr.mxu0 0.0
    %1131 = vmatpush1.msra.mxu0 0.0
    %1132 = vmatprep.subr.mxu0 0.0
    %1133 = vmatpush1.msra.mxu0 0.0
    %1134 = vmatprep.subr.mxu0 0.0
    %1135 = vmatpush1.msra.mxu0 0.0
    %1136 = vmatprep.subr.mxu0 0.0
    %1137 = vmatpush1.msra.mxu0 0.0
    %1138 = vmatprep.subr.mxu0 0.0
    %1139 = vmatpush1.msra.mxu0 0.0
    %1140 = vmatprep.subr.mxu0 0.0
    %1141 = vmatpush1.msra.mxu0 0.0
    %1142 = vmatprep.subr.mxu0 0.0
    %1143 = vmatpush1.msra.mxu0 0.0
    %1144 = vmatprep.subr.mxu0 0.0
    %1145 = vmatpush1.msra.mxu0 0.0
    %1146 = vmatprep.subr.mxu0 0.0
    %1147 = vmatpush1.msra.mxu0 0.0
    %1148 = vmatprep.subr.mxu0 0.0
    %1149 = vmatpush1.msra.mxu0 0.0
    %1150 = vmatprep.subr.mxu0 0.0
    %1151 = vmatpush1.msra.mxu0 0.0
    %1152 = vmatprep.subr.mxu0 0.0
    %1153 = vmatpush1.msra.mxu0 0.0
    %1154 = vmatprep.subr.mxu0 0.0
    %1155 = vmatpush1.msra.mxu0 0.0
    %1156 = vmatprep.subr.mxu0 0.0
    %1157 = vmatpush1.msra.mxu0 0.0
    %1158 = vmatprep.subr.mxu0 0.0
    %1159 = vmatpush1.msra.mxu0 0.0
    %1160 = vmatprep.subr.mxu0 0.0
    %1161 = vmatpush1.msra.mxu0 0.0
    %1162 = vmatprep.subr.mxu0 0.0
    %1163 = vmatpush1.msra.mxu0 0.0
    %1164 = vmatprep.subr.mxu0 0.0
    %1165 = vmatpush1.msra.mxu0 0.0
    %1166 = vmatprep.subr.mxu0 0.0
    %1167 = vmatpush1.msra.mxu0 0.0
    %1168 = vmatprep.subr.mxu0 0.0
    %1169 = vmatpush1.msra.mxu0 0.0
    %1170 = vmatprep.mubr.f32.mxu0 0.0
    %1171 = vmatmul.mubr.f32.gmra.mrb[0].mxu0 %v1102
    %v1172 = vpop.f32.mrb[0].mxu0
    %v1173 = vadd.f32 %v50, %v1172
    %v1174 = vpop.f32.mrb[0].mxu0
    %1175 = vmatprep.mubr.f32.mxu0 0.0
    %1176 = vmatmul.mubr.f32.gmra.mrb[0].mxu0 %v1104
    %v1177 = vpop.f32.mrb[0].mxu0
    %v1178 = vadd.f32 %v51, %v1177
    %v1179 = vpop.f32.mrb[0].mxu0
    %1180 = vdwg.mxu0
    %v1181 = vsel %vm350, %v1173, -inf
    %1182 = vmax.xlane.f32.xlu0 %v1181
    %v1183 = vpop.xlane.xlu0 %1182
    %v1184 = vsel %vm350, %v1178, -inf
    %1185 = vmax.xlane.f32.xlu0 %v1184
    %v1186 = vpop.xlane.xlu0 %1185
    %v1187 = vsub.f32 %v1173, %v1183
    %v1188 = vsub.f32 %v1178, %v1186
    %v1189 = vmul.f32 %v1187, 1.442695
    %v1190 = vpow.pop %v1189
    %v1191 = vmul.f32 %v1188, 1.442695
    %v1192 = vpow.pop %v1191
    %v1193 = vsel %vm350, %v1190, 0.0
    %1194 = vadd.xlane.f32.xlu0 %v1193
    %v1195 = vpop.xlane.xlu0 %1194
    %v1196 = vsel %vm350, %v1192, 0.0
    %1197 = vadd.xlane.f32.xlu0 %v1196
    %v1198 = vpop.xlane.xlu0 %1197
    %v1199 = vrcp.pop %v1195
    %v1200 = vmul.f32 %v1190, %v1199
    %v1201 = vrcp.pop %v1198
    %v1202 = vmul.f32 %v1192, %v1201
    %1203 = vrot.lane.b32.xlu0 %v155, 72
    %v1204 = vpop.permute.xlu0 %1203
    %1205 = vrot.lane.b32.xlu0 %v160, 72
    %v1206 = vpop.permute.xlu0 %1205
    %v1210 = vsel %vm350, %v1200, 0
    %v1213 = vsel %vm350, %v1202, 0
    %1215 = vmatprep.subr.mxu0 0.0
    %1216 = vmatpush1.msra.mxu0 %v1204
    %1217 = vmatprep.subr.mxu0 0.0
    %1218 = vmatpush1.msra.mxu0 %v1206
    %1219 = vmatprep.subr.mxu0 0.0
    %1220 = vmatpush1.msra.mxu0 0.0
    %1221 = vmatprep.subr.mxu0 0.0
    %1222 = vmatpush1.msra.mxu0 0.0
    %1223 = vmatprep.subr.mxu0 0.0
    %1224 = vmatpush1.msra.mxu0 0.0
    %1225 = vmatprep.subr.mxu0 0.0
    %1226 = vmatpush1.msra.mxu0 0.0
    %1227 = vmatprep.subr.mxu0 0.0
    %1228 = vmatpush1.msra.mxu0 0.0
    %1229 = vmatprep.subr.mxu0 0.0
    %1230 = vmatpush1.msra.mxu0 0.0
    %1231 = vmatprep.subr.mxu0 0.0
    %1232 = vmatpush1.msra.mxu0 0.0
    %1233 = vmatprep.subr.mxu0 0.0
    %1234 = vmatpush1.msra.mxu0 0.0
    %1235 = vmatprep.subr.mxu0 0.0
    %1236 = vmatpush1.msra.mxu0 0.0
    %1237 = vmatprep.subr.mxu0 0.0
    %1238 = vmatpush1.msra.mxu0 0.0
    %1239 = vmatprep.subr.mxu0 0.0
    %1240 = vmatpush1.msra.mxu0 0.0
    %1241 = vmatprep.subr.mxu0 0.0
    %1242 = vmatpush1.msra.mxu0 0.0
    %1243 = vmatprep.subr.mxu0 0.0
    %1244 = vmatpush1.msra.mxu0 0.0
    %1245 = vmatprep.subr.mxu0 0.0
    %1246 = vmatpush1.msra.mxu0 0.0
    %1247 = vmatprep.subr.mxu0 0.0
    %1248 = vmatpush1.msra.mxu0 0.0
    %1249 = vmatprep.subr.mxu0 0.0
    %1250 = vmatpush1.msra.mxu0 0.0
    %1251 = vmatprep.subr.mxu0 0.0
    %1252 = vmatpush1.msra.mxu0 0.0
    %1253 = vmatprep.subr.mxu0 0.0
    %1254 = vmatpush1.msra.mxu0 0.0
    %1255 = vmatprep.subr.mxu0 0.0
    %1256 = vmatpush1.msra.mxu0 0.0
    %1257 = vmatprep.subr.mxu0 0.0
    %1258 = vmatpush1.msra.mxu0 0.0
    %1259 = vmatprep.subr.mxu0 0.0
    %1260 = vmatpush1.msra.mxu0 0.0
    %1261 = vmatprep.subr.mxu0 0.0
    %1262 = vmatpush1.msra.mxu0 0.0
    %1263 = vmatprep.subr.mxu0 0.0
    %1264 = vmatpush1.msra.mxu0 0.0
    %1265 = vmatprep.subr.mxu0 0.0
    %1266 = vmatpush1.msra.mxu0 0.0
    %1267 = vmatprep.subr.mxu0 0.0
    %1268 = vmatpush1.msra.mxu0 0.0
    %1269 = vmatprep.subr.mxu0 0.0
    %1270 = vmatpush1.msra.mxu0 0.0
    %1271 = vmatprep.subr.mxu0 0.0
    %1272 = vmatpush1.msra.mxu0 0.0
    %1273 = vmatprep.subr.mxu0 0.0
    %1274 = vmatpush1.msra.mxu0 0.0
    %1275 = vmatprep.subr.mxu0 0.0
    %1276 = vmatpush1.msra.mxu0 0.0
    %1277 = vmatprep.subr.mxu0 0.0
    %1278 = vmatpush1.msra.mxu0 0.0
    %1279 = vmatprep.mubr.f32.mxu0 0.0
    %1280 = vmatmul.mubr.f32.gmra.mrb[0].mxu0 %v1210
    %v1281 = vpop.f32.mrb[0].mxu0
    %v1282 = vadd.f32 0.0, %v1281
    %v1283 = vpop.f32.mrb[0].mxu0
    %1284 = vmatprep.mubr.f32.mxu0 0.0
    %1285 = vmatmul.mubr.f32.gmra.mrb[0].mxu0 %v1213
    %v1286 = vpop.f32.mrb[0].mxu0
    %v1287 = vadd.f32 0.0, %v1286
    %v1288 = vpop.f32.mrb[0].mxu0
    %1289 = vdwg.mxu0
    %1290 = vrot.lane.b32.xlu0 %v58, 32
    %v1291 = vpop.permute.xlu0 %1290
    %v1294 = vsel %vm268, %v1282, 0
    %v1297 = vsel %vm268, %v1287, 0
    %1299 = vmatprep.subr.mxu0 0.0
    %1300 = vmatpush1.msra.mxu0 %v1291
    %1301 = vmatprep.subr.mxu0 0.0
    %1302 = vmatpush1.msra.mxu0 0.0
    %1303 = vmatprep.subr.mxu0 0.0
    %1304 = vmatpush1.msra.mxu0 0.0
    %1305 = vmatprep.subr.mxu0 0.0
    %1306 = vmatpush1.msra.mxu0 0.0
    %1307 = vmatprep.subr.mxu0 0.0
    %1308 = vmatpush1.msra.mxu0 0.0
    %1309 = vmatprep.subr.mxu0 0.0
    %1310 = vmatpush1.msra.mxu0 0.0
    %1311 = vmatprep.subr.mxu0 0.0
    %1312 = vmatpush1.msra.mxu0 0.0
    %1313 = vmatprep.subr.mxu0 0.0
    %1314 = vmatpush1.msra.mxu0 0.0
    %1315 = vmatprep.subr.mxu0 0.0
    %1316 = vmatpush1.msra.mxu0 0.0
    %1317 = vmatprep.subr.mxu0 0.0
    %1318 = vmatpush1.msra.mxu0 0.0
    %1319 = vmatprep.subr.mxu0 0.0
    %1320 = vmatpush1.msra.mxu0 0.0
    %1321 = vmatprep.subr.mxu0 0.0
    %1322 = vmatpush1.msra.mxu0 0.0
    %1323 = vmatprep.subr.mxu0 0.0
    %1324 = vmatpush1.msra.mxu0 0.0
    %1325 = vmatprep.subr.mxu0 0.0
    %1326 = vmatpush1.msra.mxu0 0.0
    %1327 = vmatprep.subr.mxu0 0.0
    %1328 = vmatpush1.msra.mxu0 0.0
    %1329 = vmatprep.subr.mxu0 0.0
    %1330 = vmatpush1.msra.mxu0 0.0
    %1331 = vmatprep.subr.mxu0 0.0
    %1332 = vmatpush1.msra.mxu0 0.0
    %1333 = vmatprep.subr.mxu0 0.0
    %1334 = vmatpush1.msra.mxu0 0.0
    %1335 = vmatprep.subr.mxu0 0.0
    %1336 = vmatpush1.msra.mxu0 0.0
    %1337 = vmatprep.subr.mxu0 0.0
    %1338 = vmatpush1.msra.mxu0 0.0
    %1339 = vmatprep.subr.mxu0 0.0
    %1340 = vmatpush1.msra.mxu0 0.0
    %1341 = vmatprep.subr.mxu0 0.0
    %1342 = vmatpush1.msra.mxu0 0.0
    %1343 = vmatprep.subr.mxu0 0.0
    %1344 = vmatpush1.msra.mxu0 0.0
    %1345 = vmatprep.subr.mxu0 0.0
    %1346 = vmatpush1.msra.mxu0 0.0
    %1347 = vmatprep.subr.mxu0 0.0
    %1348 = vmatpush1.msra.mxu0 0.0
    %1349 = vmatprep.subr.mxu0 0.0
    %1350 = vmatpush1.msra.mxu0 0.0
    %1351 = vmatprep.subr.mxu0 0.0
    %1352 = vmatpush1.msra.mxu0 0.0
    %1353 = vmatprep.subr.mxu0 0.0
    %1354 = vmatpush1.msra.mxu0 0.0
    %1355 = vmatprep.subr.mxu0 0.0
    %1356 = vmatpush1.msra.mxu0 0.0
    %1357 = vmatprep.subr.mxu0 0.0
    %1358 = vmatpush1.msra.mxu0 0.0
    %1359 = vmatprep.subr.mxu0 0.0
    %1360 = vmatpush1.msra.mxu0 0.0
    %1361 = vmatprep.subr.mxu0 0.0
    %1362 = vmatpush1.msra.mxu0 0.0
    %1363 = vmatprep.mubr.f32.mxu0 0.0
    %1364 = vmatmul.mubr.f32.gmra.mrb[0].mxu0 %v1294
    %v1365 = vpop.f32.mrb[0].mxu0
    %v1366 = vadd.f32 0.0, %v1365
    %v1367 = vpop.f32.mrb[0].mxu0
    %1368 = vmatprep.mubr.f32.mxu0 0.0
    %1369 = vmatmul.mubr.f32.gmra.mrb[0].mxu0 %v1297
    %v1370 = vpop.f32.mrb[0].mxu0
    %v1371 = vadd.f32 0.0, %v1370
    %v1372 = vpop.f32.mrb[0].mxu0
    %1373 = vdwg.mxu0
    %v1374 = vadd.f32 %v1096, %v1366
    %v1375 = vadd.f32 %v1097, %v1371
    %v1376 = vlaneseq
    %v1377 = vshrl.u32 %v1376, 7
    %v1378 = vsub.s32 1, %v1377
    %v1379 = vrot.slane %v76, %v1378
    %v1380 = vadd.f32 %v1374, %v1379
    %v1381 = vadd.f32 %v1375, %v1379
    %v1382 = vadd.f32 %v21, %v1380
    %v1383 = vadd.f32 %v22, %v1381
    %v1384 = vsel %vm81, %v1382, 0.0
    %1385 = vadd.xlane.f32.xlu0 %v1384
    %v1386 = vpop.xlane.xlu0 %1385
    %v1387 = vsel %vm81, %v1383, 0.0
    %1388 = vadd.xlane.f32.xlu0 %v1387
    %v1389 = vpop.xlane.xlu0 %1388
    %v1390 = vrcp.pop 32.0
    %v1391 = vmul.f32 %v1386, %v1390
    %v1392 = vmul.f32 %v1389, %v1390
    %v1393 = vsub.f32 %v1382, %v1391
    %v1394 = vsub.f32 %v1383, %v1392
    %v1395 = vmul.f32 %v1393, %v1393
    %v1396 = vmul.f32 %v1394, %v1394
    %v1397 = vsel %vm81, %v1395, 0.0
    %1398 = vadd.xlane.f32.xlu0 %v1397
    %v1399 = vpop.xlane.xlu0 %1398
    %v1400 = vsel %vm81, %v1396, 0.0
    %1401 = vadd.xlane.f32.xlu0 %v1400
    %v1402 = vpop.xlane.xlu0 %1401
    %v1403 = vmul.f32 %v1399, %v1390
    %v1404 = vmul.f32 %v1402, %v1390
    %v1405 = vadd.f32 %v1403, 1e-05
    %v1406 = vadd.f32 %v1404, 1e-05
    %v1407 = vrsqrt.pop %v1405
    %v1408 = vrsqrt.pop %v1406
    %v1409 = vmul.f32 %v1393, %v1407
    %v1410 = vmul.f32 %v1394, %v1408
    %v1411 = vlaneseq
    %v1412 = vshrl.u32 %v1411, 7
    %v1413 = vsub.s32 2, %v1412
    %v1414 = vrot.slane %v76, %v1413
    %v1415 = vmul.f32 %v1409, %v1414
    %v1416 = vmul.f32 %v1410, %v1414
    %v1417 = vlaneseq
    %v1418 = vshrl.u32 %v1417, 7
    %v1419 = vsub.s32 3, %v1418
    %v1420 = vrot.slane %v76, %v1419
    %v1421 = vadd.f32 %v1415, %v1420
    %v1422 = vadd.f32 %v1416, %v1420
    %v1423 = vlaneseq
    %v1424 = vshrl.u32 %v1423, 7
    %v1425 = vsub.s32 4, %v1424
    %v1426 = vrot.slane %v76, %v1425
    %v1428 = vsel %vm81, %v1421, 0
    %v1431 = vsel %vm81, %v1422, 0
    %1433 = vmatprep.subr.mxu0 0.0
    %1434 = vmatpush1.msra.mxu0 %v53
    %1435 = vmatprep.subr.mxu0 0.0
    %1436 = vmatpush1.msra.mxu0 %v55
    %1437 = vmatprep.subr.mxu0 0.0
    %1438 = vmatpush1.msra.mxu0 %v57
    %1439 = vmatprep.subr.mxu0 0.0
    %1440 = vmatpush1.msra.mxu0 %v59
    %1441 = vmatprep.subr.mxu0 0.0
    %1442 = vmatpush1.msra.mxu0 0.0
    %1443 = vmatprep.subr.mxu0 0.0
    %1444 = vmatpush1.msra.mxu0 0.0
    %1445 = vmatprep.subr.mxu0 0.0
    %1446 = vmatpush1.msra.mxu0 0.0
    %1447 = vmatprep.subr.mxu0 0.0
    %1448 = vmatpush1.msra.mxu0 0.0
    %1449 = vmatprep.subr.mxu0 0.0
    %1450 = vmatpush1.msra.mxu0 0.0
    %1451 = vmatprep.subr.mxu0 0.0
    %1452 = vmatpush1.msra.mxu0 0.0
    %1453 = vmatprep.subr.mxu0 0.0
    %1454 = vmatpush1.msra.mxu0 0.0
    %1455 = vmatprep.subr.mxu0 0.0
    %1456 = vmatpush1.msra.mxu0 0.0
    %1457 = vmatprep.subr.mxu0 0.0
    %1458 = vmatpush1.msra.mxu0 0.0
    %1459 = vmatprep.subr.mxu0 0.0
    %1460 = vmatpush1.msra.mxu0 0.0
    %1461 = vmatprep.subr.mxu0 0.0
    %1462 = vmatpush1.msra.mxu0 0.0
    %1463 = vmatprep.subr.mxu0 0.0
    %1464 = vmatpush1.msra.mxu0 0.0
    %1465 = vmatprep.subr.mxu0 0.0
    %1466 = vmatpush1.msra.mxu0 0.0
    %1467 = vmatprep.subr.mxu0 0.0
    %1468 = vmatpush1.msra.mxu0 0.0
    %1469 = vmatprep.subr.mxu0 0.0
    %1470 = vmatpush1.msra.mxu0 0.0
    %1471 = vmatprep.subr.mxu0 0.0
    %1472 = vmatpush1.msra.mxu0 0.0
    %1473 = vmatprep.subr.mxu0 0.0
    %1474 = vmatpush1.msra.mxu0 0.0
    %1475 = vmatprep.subr.mxu0 0.0
    %1476 = vmatpush1.msra.mxu0 0.0
    %1477 = vmatprep.subr.mxu0 0.0
    %1478 = vmatpush1.msra.mxu0 0.0
    %1479 = vmatprep.subr.mxu0 0.0
    %1480 = vmatpush1.msra.mxu0 0.0
    %1481 = vmatprep.subr.mxu0 0.0
    %1482 = vmatpush1.msra.mxu0 0.0
    %1483 = vmatprep.subr.mxu0 0.0
    %1484 = vmatpush1.msra.mxu0 0.0
    %1485 = vmatprep.subr.mxu0 0.0
    %1486 = vmatpush1.msra.mxu0 0.0
    %1487 = vmatprep.subr.mxu0 0.0
    %1488 = vmatpush1.msra.mxu0 0.0
    %1489 = vmatprep.subr.mxu0 0.0
    %1490 = vmatpush1.msra.mxu0 0.0
    %1491 = vmatprep.subr.mxu0 0.0
    %1492 = vmatpush1.msra.mxu0 0.0
    %1493 = vmatprep.subr.mxu0 0.0
    %1494 = vmatpush1.msra.mxu0 0.0
    %1495 = vmatprep.subr.mxu0 0.0
    %1496 = vmatpush1.msra.mxu0 0.0
    %1497 = vmatprep.mubr.f32.mxu0 0.0
    %1498 = vmatmul.mubr.f32.gmra.mrb[0].mxu0 %v1428
    %v1499 = vpop.f32.mrb[0].mxu0
    %v1500 = vadd.f32 %v1426, %v1499
    %v1501 = vpop.f32.mrb[0].mxu0
    %1502 = vmatprep.mubr.f32.mxu0 0.0
    %1503 = vmatmul.mubr.f32.gmra.mrb[0].mxu0 %v1431
    %v1504 = vpop.f32.mrb[0].mxu0
    %v1505 = vadd.f32 %v1426, %v1504
    %v1506 = vpop.f32.mrb[0].mxu0
    %1507 = vdwg.mxu0
    %v1508 = vmax.f32 %v1500, 0.0
    %v1509 = vmax.f32 %v1505, 0.0
    %v1510 = vlaneseq
    %v1511 = vshrl.u32 %v1510, 7
    %v1512 = vsub.s32 5, %v1511
    %v1513 = vrot.slane %v76, %v1512
    %1514 = vmatprep.subr.mxu0 0.0
    %1515 = vmatpush1.msra.mxu0 %v60
    %1516 = vmatprep.subr.mxu0 0.0
    %1517 = vmatpush1.msra.mxu0 %v61
    %1518 = vmatprep.subr.mxu0 0.0
    %1519 = vmatpush1.msra.mxu0 %v62
    %1520 = vmatprep.subr.mxu0 0.0
    %1521 = vmatpush1.msra.mxu0 %v63
    %1522 = vmatprep.subr.mxu0 0.0
    %1523 = vmatpush1.msra.mxu0 %v64
    %1524 = vmatprep.subr.mxu0 0.0
    %1525 = vmatpush1.msra.mxu0 %v65
    %1526 = vmatprep.subr.mxu0 0.0
    %1527 = vmatpush1.msra.mxu0 %v66
    %1528 = vmatprep.subr.mxu0 0.0
    %1529 = vmatpush1.msra.mxu0 %v67
    %1530 = vmatprep.subr.mxu0 0.0
    %1531 = vmatpush1.msra.mxu0 %v68
    %1532 = vmatprep.subr.mxu0 0.0
    %1533 = vmatpush1.msra.mxu0 %v69
    %1534 = vmatprep.subr.mxu0 0.0
    %1535 = vmatpush1.msra.mxu0 %v70
    %1536 = vmatprep.subr.mxu0 0.0
    %1537 = vmatpush1.msra.mxu0 %v71
    %1538 = vmatprep.subr.mxu0 0.0
    %1539 = vmatpush1.msra.mxu0 %v72
    %1540 = vmatprep.subr.mxu0 0.0
    %1541 = vmatpush1.msra.mxu0 %v73
    %1542 = vmatprep.subr.mxu0 0.0
    %1543 = vmatpush1.msra.mxu0 %v74
    %1544 = vmatprep.subr.mxu0 0.0
    %1545 = vmatpush1.msra.mxu0 %v75
    %1546 = vmatprep.subr.mxu0 0.0
    %1547 = vmatpush1.msra.mxu0 0.0
    %1548 = vmatprep.subr.mxu0 0.0
    %1549 = vmatpush1.msra.mxu0 0.0
    %1550 = vmatprep.subr.mxu0 0.0
    %1551 = vmatpush1.msra.mxu0 0.0
    %1552 = vmatprep.subr.mxu0 0.0
    %1553 = vmatpush1.msra.mxu0 0.0
    %1554 = vmatprep.subr.mxu0 0.0
    %1555 = vmatpush1.msra.mxu0 0.0
    %1556 = vmatprep.subr.mxu0 0.0
    %1557 = vmatpush1.msra.mxu0 0.0
    %1558 = vmatprep.subr.mxu0 0.0
    %1559 = vmatpush1.msra.mxu0 0.0
    %1560 = vmatprep.subr.mxu0 0.0
    %1561 = vmatpush1.msra.mxu0 0.0
    %1562 = vmatprep.subr.mxu0 0.0
    %1563 = vmatpush1.msra.mxu0 0.0
    %1564 = vmatprep.subr.mxu0 0.0
    %1565 = vmatpush1.msra.mxu0 0.0
    %1566 = vmatprep.subr.mxu0 0.0
    %1567 = vmatpush1.msra.mxu0 0.0
    %1568 = vmatprep.subr.mxu0 0.0
    %1569 = vmatpush1.msra.mxu0 0.0
    %1570 = vmatprep.subr.mxu0 0.0
    %1571 = vmatpush1.msra.mxu0 0.0
    %1572 = vmatprep.subr.mxu0 0.0
    %1573 = vmatpush1.msra.mxu0 0.0
    %1574 = vmatprep.subr.mxu0 0.0
    %1575 = vmatpush1.msra.mxu0 0.0
    %1576 = vmatprep.subr.mxu0 0.0
    %1577 = vmatpush1.msra.mxu0 0.0
    %1578 = vmatprep.mubr.f32.mxu0 0.0
    %1579 = vmatmul.mubr.f32.gmra.mrb[0].mxu0 %v1508
    %v1580 = vpop.f32.mrb[0].mxu0
    %v1581 = vadd.f32 %v1513, %v1580
    %v1582 = vpop.f32.mrb[0].mxu0
    %1583 = vmatprep.mubr.f32.mxu0 0.0
    %1584 = vmatmul.mubr.f32.gmra.mrb[0].mxu0 %v1509
    %v1585 = vpop.f32.mrb[0].mxu0
    %v1586 = vadd.f32 %v1513, %v1585
    %v1587 = vpop.f32.mrb[0].mxu0
    %1588 = vdwg.mxu0
    %v1589 = vadd.f32 %v1421, %v1581
    %v1590 = vadd.f32 %v1422, %v1586
    %v1591 = vsel %vm81, %v1589, 0.0
    %1592 = vadd.xlane.f32.xlu0 %v1591
    %v1593 = vpop.xlane.xlu0 %1592
    %v1594 = vsel %vm81, %v1590, 0.0
    %1595 = vadd.xlane.f32.xlu0 %v1594
    %v1596 = vpop.xlane.xlu0 %1595
    %v1597 = vmul.f32 %v1593, %v1390
    %v1598 = vmul.f32 %v1596, %v1390
    %v1599 = vsub.f32 %v1589, %v1597
    %v1600 = vsub.f32 %v1590, %v1598
    %v1601 = vmul.f32 %v1599, %v1599
    %v1602 = vmul.f32 %v1600, %v1600
    %v1603 = vsel %vm81, %v1601, 0.0
    %1604 = vadd.xlane.f32.xlu0 %v1603
    %v1605 = vpop.xlane.xlu0 %1604
    %v1606 = vsel %vm81, %v1602, 0.0
    %1607 = vadd.xlane.f32.xlu0 %v1606
    %v1608 = vpop.xlane.xlu0 %1607
    %v1609 = vmul.f32 %v1605, %v1390
    %v1610 = vmul.f32 %v1608, %v1390
    %v1611 = vadd.f32 %v1609, 1e-05
    %v1612 = vadd.f32 %v1610, 1e-05
    %v1613 = vrsqrt.pop %v1611
    %v1614 = vrsqrt.pop %v1612
    %v1615 = vmul.f32 %v1599, %v1613
    %v1616 = vmul.f32 %v1600, %v1614
    %v1617 = vlaneseq
    %v1618 = vshrl.u32 %v1617, 7
    %v1619 = vsub.s32 6, %v1618
    %v1620 = vrot.slane %v76, %v1619
    %v1621 = vmul.f32 %v1615, %v1620
    %v1622 = vmul.f32 %v1616, %v1620
    %v1623 = vlaneseq
    %v1624 = vshrl.u32 %v1623, 7
    %v1625 = vsub.s32 7, %v1624
    %v1626 = vrot.slane %v76, %v1625
    %v1627 = vadd.f32 %v1621, %v1626
    %v1628 = vadd.f32 %v1622, %v1626
    %s1629 = scalar_lea.vmem %s2, 64
    %v1630 = vld [vmem:[%s1629] sm:$0xff]
    %v1631 = vld [vmem:[%s1629 + $0x8] sm:$0xff]
    %v1632 = vld [vmem:[%s1629 + $0x10] sm:$0xff]
    %v1633 = vld [vmem:[%s1629 + $0x18] sm:$0xff]
    %v1634 = vld [vmem:[%s1629 + $0x20] sm:$0xff]
    %v1635 = vld [vmem:[%s1629 + $0x28] sm:$0xff]
    %v1636 = vld [vmem:[%s1629 + $0x30] sm:$0xff]
    %v1637 = vld [vmem:[%s1629 + $0x38] sm:$0xff]
    %s1638 = scalar_lea.vmem %s3, 128
    %v1639 = vld [vmem:[%s1638] sm:$0xff]
    %v1640 = vld [vmem:[%s1638 + $0x8] sm:$0xff]
    %v1641 = vld [vmem:[%s1638 + $0x10] sm:$0xff]
    %v1642 = vld [vmem:[%s1638 + $0x18] sm:$0xff]
    %v1643 = vld [vmem:[%s1638 + $0x20] sm:$0xff]
    %v1644 = vld [vmem:[%s1638 + $0x28] sm:$0xff]
    %v1645 = vld [vmem:[%s1638 + $0x30] sm:$0xff]
    %v1646 = vld [vmem:[%s1638 + $0x38] sm:$0xff]
    %v1647 = vld [vmem:[%s1638 + $0x40] sm:$0xff]
    %v1648 = vld [vmem:[%s1638 + $0x48] sm:$0xff]
    %v1649 = vld [vmem:[%s1638 + $0x50] sm:$0xff]
    %v1650 = vld [vmem:[%s1638 + $0x58] sm:$0xff]
    %v1651 = vld [vmem:[%s1638 + $0x60] sm:$0xff]
    %v1652 = vld [vmem:[%s1638 + $0x68] sm:$0xff]
    %v1653 = vld [vmem:[%s1638 + $0x70] sm:$0xff]
    %v1654 = vld [vmem:[%s1638 + $0x78] sm:$0xff]
    %s1655 = scalar_lea.vmem %s4, 8
    %v1656 = vld [vmem:[%s1655] sm:$0xff]
    %v1657 = vlaneseq
    %v1658 = vshrl.u32 %v1657, 7
    %v1659 = vsub.s32 0, %v1658
    %v1660 = vrot.slane %v1656, %v1659
    %v1662 = vsel %vm81, %v1627, 0
    %v1665 = vsel %vm81, %v1628, 0
    %1667 = vmatprep.subr.mxu0 0.0
    %1668 = vmatpush1.msra.mxu0 %v1630
    %1669 = vmatprep.subr.mxu0 0.0
    %1670 = vmatpush1.msra.mxu0 %v1632
    %1671 = vmatprep.subr.mxu0 0.0
    %1672 = vmatpush1.msra.mxu0 %v1634
    %1673 = vmatprep.subr.mxu0 0.0
    %1674 = vmatpush1.msra.mxu0 %v1636
    %1675 = vmatprep.subr.mxu0 0.0
    %1676 = vmatpush1.msra.mxu0 0.0
    %1677 = vmatprep.subr.mxu0 0.0
    %1678 = vmatpush1.msra.mxu0 0.0
    %1679 = vmatprep.subr.mxu0 0.0
    %1680 = vmatpush1.msra.mxu0 0.0
    %1681 = vmatprep.subr.mxu0 0.0
    %1682 = vmatpush1.msra.mxu0 0.0
    %1683 = vmatprep.subr.mxu0 0.0
    %1684 = vmatpush1.msra.mxu0 0.0
    %1685 = vmatprep.subr.mxu0 0.0
    %1686 = vmatpush1.msra.mxu0 0.0
    %1687 = vmatprep.subr.mxu0 0.0
    %1688 = vmatpush1.msra.mxu0 0.0
    %1689 = vmatprep.subr.mxu0 0.0
    %1690 = vmatpush1.msra.mxu0 0.0
    %1691 = vmatprep.subr.mxu0 0.0
    %1692 = vmatpush1.msra.mxu0 0.0
    %1693 = vmatprep.subr.mxu0 0.0
    %1694 = vmatpush1.msra.mxu0 0.0
    %1695 = vmatprep.subr.mxu0 0.0
    %1696 = vmatpush1.msra.mxu0 0.0
    %1697 = vmatprep.subr.mxu0 0.0
    %1698 = vmatpush1.msra.mxu0 0.0
    %1699 = vmatprep.subr.mxu0 0.0
    %1700 = vmatpush1.msra.mxu0 0.0
    %1701 = vmatprep.subr.mxu0 0.0
    %1702 = vmatpush1.msra.mxu0 0.0
    %1703 = vmatprep.subr.mxu0 0.0
    %1704 = vmatpush1.msra.mxu0 0.0
    %1705 = vmatprep.subr.mxu0 0.0
    %1706 = vmatpush1.msra.mxu0 0.0
    %1707 = vmatprep.subr.mxu0 0.0
    %1708 = vmatpush1.msra.mxu0 0.0
    %1709 = vmatprep.subr.mxu0 0.0
    %1710 = vmatpush1.msra.mxu0 0.0
    %1711 = vmatprep.subr.mxu0 0.0
    %1712 = vmatpush1.msra.mxu0 0.0
    %1713 = vmatprep.subr.mxu0 0.0
    %1714 = vmatpush1.msra.mxu0 0.0
    %1715 = vmatprep.subr.mxu0 0.0
    %1716 = vmatpush1.msra.mxu0 0.0
    %1717 = vmatprep.subr.mxu0 0.0
    %1718 = vmatpush1.msra.mxu0 0.0
    %1719 = vmatprep.subr.mxu0 0.0
    %1720 = vmatpush1.msra.mxu0 0.0
    %1721 = vmatprep.subr.mxu0 0.0
    %1722 = vmatpush1.msra.mxu0 0.0
    %1723 = vmatprep.subr.mxu0 0.0
    %1724 = vmatpush1.msra.mxu0 0.0
    %1725 = vmatprep.subr.mxu0 0.0
    %1726 = vmatpush1.msra.mxu0 0.0
    %1727 = vmatprep.subr.mxu0 0.0
    %1728 = vmatpush1.msra.mxu0 0.0
    %1729 = vmatprep.subr.mxu0 0.0
    %1730 = vmatpush1.msra.mxu0 0.0
    %1731 = vmatprep.mubr.f32.mxu0 0.0
    %1732 = vmatmul.mubr.f32.gmra.mrb[0].mxu0 %v1662
    %v1733 = vpop.f32.mrb[0].mxu0
    %v1734 = vadd.f32 %v1660, %v1733
    %v1735 = vpop.f32.mrb[0].mxu0
    %1736 = vmatprep.mubr.f32.mxu0 0.0
    %1737 = vmatmul.mubr.f32.gmra.mrb[0].mxu0 %v1665
    %v1738 = vpop.f32.mrb[0].mxu0
    %v1739 = vadd.f32 %v1660, %v1738
    %v1740 = vpop.f32.mrb[0].mxu0
    %1741 = vdwg.mxu0
    %1746 = vrot.lane.b32.xlu0 %v1630, 64
    %v1747 = vpop.permute.xlu0 %1746
    %1748 = vrot.lane.b32.xlu0 %v1632, 64
    %v1749 = vpop.permute.xlu0 %1748
    %1750 = vrot.lane.b32.xlu0 %v1634, 64
    %v1751 = vpop.permute.xlu0 %1750
    %1752 = vrot.lane.b32.xlu0 %v1636, 64
    %v1753 = vpop.permute.xlu0 %1752
    %v1754 = vsel %vm81, %v1747, 0
    %v1756 = vsel %vm81, %v1749, 0
    %v1758 = vsel %vm81, %v1751, 0
    %v1760 = vsel %vm81, %v1753, 0
    %1762 = vmatprep.subr.mxu0 0.0
    %1763 = vmatpush1.xpose.msra.mxu0 %v1662
    %1764 = vmatprep.subr.mxu0 0.0
    %1765 = vmatpush1.xpose.msra.mxu0 %v1665
    %1766 = vmatprep.subr.mxu0 0.0
    %1767 = vmatpush1.xpose.msra.mxu0 0.0
    %1768 = vmatprep.subr.mxu0 0.0
    %1769 = vmatpush1.xpose.msra.mxu0 0.0
    %1770 = vmatprep.subr.mxu0 0.0
    %1771 = vmatpush1.xpose.msra.mxu0 0.0
    %1772 = vmatprep.subr.mxu0 0.0
    %1773 = vmatpush1.xpose.msra.mxu0 0.0
    %1774 = vmatprep.subr.mxu0 0.0
    %1775 = vmatpush1.xpose.msra.mxu0 0.0
    %1776 = vmatprep.subr.mxu0 0.0
    %1777 = vmatpush1.xpose.msra.mxu0 0.0
    %1778 = vmatprep.subr.mxu0 0.0
    %1779 = vmatpush1.xpose.msra.mxu0 0.0
    %1780 = vmatprep.subr.mxu0 0.0
    %1781 = vmatpush1.xpose.msra.mxu0 0.0
    %1782 = vmatprep.subr.mxu0 0.0
    %1783 = vmatpush1.xpose.msra.mxu0 0.0
    %1784 = vmatprep.subr.mxu0 0.0
    %1785 = vmatpush1.xpose.msra.mxu0 0.0
    %1786 = vmatprep.subr.mxu0 0.0
    %1787 = vmatpush1.xpose.msra.mxu0 0.0
    %1788 = vmatprep.subr.mxu0 0.0
    %1789 = vmatpush1.xpose.msra.mxu0 0.0
    %1790 = vmatprep.subr.mxu0 0.0
    %1791 = vmatpush1.xpose.msra.mxu0 0.0
    %1792 = vmatprep.subr.mxu0 0.0
    %1793 = vmatpush1.xpose.msra.mxu0 0.0
    %1794 = vmatprep.subr.mxu0 0.0
    %1795 = vmatpush1.xpose.msra.mxu0 0.0
    %1796 = vmatprep.subr.mxu0 0.0
    %1797 = vmatpush1.xpose.msra.mxu0 0.0
    %1798 = vmatprep.subr.mxu0 0.0
    %1799 = vmatpush1.xpose.msra.mxu0 0.0
    %1800 = vmatprep.subr.mxu0 0.0
    %1801 = vmatpush1.xpose.msra.mxu0 0.0
    %1802 = vmatprep.subr.mxu0 0.0
    %1803 = vmatpush1.xpose.msra.mxu0 0.0
    %1804 = vmatprep.subr.mxu0 0.0
    %1805 = vmatpush1.xpose.msra.mxu0 0.0
    %1806 = vmatprep.subr.mxu0 0.0
    %1807 = vmatpush1.xpose.msra.mxu0 0.0
    %1808 = vmatprep.subr.mxu0 0.0
    %1809 = vmatpush1.xpose.msra.mxu0 0.0
    %1810 = vmatprep.subr.mxu0 0.0
    %1811 = vmatpush1.xpose.msra.mxu0 0.0
    %1812 = vmatprep.subr.mxu0 0.0
    %1813 = vmatpush1.xpose.msra.mxu0 0.0
    %1814 = vmatprep.subr.mxu0 0.0
    %1815 = vmatpush1.xpose.msra.mxu0 0.0
    %1816 = vmatprep.subr.mxu0 0.0
    %1817 = vmatpush1.xpose.msra.mxu0 0.0
    %1818 = vmatprep.subr.mxu0 0.0
    %1819 = vmatpush1.xpose.msra.mxu0 0.0
    %1820 = vmatprep.subr.mxu0 0.0
    %1821 = vmatpush1.xpose.msra.mxu0 0.0
    %1822 = vmatprep.subr.mxu0 0.0
    %1823 = vmatpush1.xpose.msra.mxu0 0.0
    %1824 = vmatprep.subr.mxu0 0.0
    %1825 = vmatpush1.xpose.msra.mxu0 0.0
    %1826 = vmatprep.mubr.f32.mxu0 0.0
    %1827 = vmatmul.mubr.f32.gmra.mrb[0].mxu0 %v1754
    %v1828 = vpop.f32.mrb[0].mxu0
    %v1829 = vadd.f32 0.0, %v1828
    %v1830 = vpop.f32.mrb[0].mxu0
    %1831 = vmatprep.mubr.f32.mxu0 0.0
    %1832 = vmatmul.mubr.f32.gmra.mrb[0].mxu0 %v1756
    %v1833 = vpop.f32.mrb[0].mxu0
    %v1834 = vadd.f32 0.0, %v1833
    %v1835 = vpop.f32.mrb[0].mxu0
    %1836 = vmatprep.mubr.f32.mxu0 0.0
    %1837 = vmatmul.mubr.f32.gmra.mrb[0].mxu0 %v1758
    %v1838 = vpop.f32.mrb[0].mxu0
    %v1839 = vadd.f32 0.0, %v1838
    %v1840 = vpop.f32.mrb[0].mxu0
    %1841 = vmatprep.mubr.f32.mxu0 0.0
    %1842 = vmatmul.mubr.f32.gmra.mrb[0].mxu0 %v1760
    %v1843 = vpop.f32.mrb[0].mxu0
    %v1844 = vadd.f32 0.0, %v1843
    %v1845 = vpop.f32.mrb[0].mxu0
    %1846 = vdwg.mxu0
    %v1848 = vsel %vm268, %v1734, 0
    %v1851 = vsel %vm268, %v1739, 0
    %1853 = vmatprep.subr.mxu0 0.0
    %1854 = vmatpush1.msra.mxu0 %v1829
    %1855 = vmatprep.subr.mxu0 0.0
    %1856 = vmatpush1.msra.mxu0 0.0
    %1857 = vmatprep.subr.mxu0 0.0
    %1858 = vmatpush1.msra.mxu0 0.0
    %1859 = vmatprep.subr.mxu0 0.0
    %1860 = vmatpush1.msra.mxu0 0.0
    %1861 = vmatprep.subr.mxu0 0.0
    %1862 = vmatpush1.msra.mxu0 0.0
    %1863 = vmatprep.subr.mxu0 0.0
    %1864 = vmatpush1.msra.mxu0 0.0
    %1865 = vmatprep.subr.mxu0 0.0
    %1866 = vmatpush1.msra.mxu0 0.0
    %1867 = vmatprep.subr.mxu0 0.0
    %1868 = vmatpush1.msra.mxu0 0.0
    %1869 = vmatprep.subr.mxu0 0.0
    %1870 = vmatpush1.msra.mxu0 0.0
    %1871 = vmatprep.subr.mxu0 0.0
    %1872 = vmatpush1.msra.mxu0 0.0
    %1873 = vmatprep.subr.mxu0 0.0
    %1874 = vmatpush1.msra.mxu0 0.0
    %1875 = vmatprep.subr.mxu0 0.0
    %1876 = vmatpush1.msra.mxu0 0.0
    %1877 = vmatprep.subr.mxu0 0.0
    %1878 = vmatpush1.msra.mxu0 0.0
    %1879 = vmatprep.subr.mxu0 0.0
    %1880 = vmatpush1.msra.mxu0 0.0
    %1881 = vmatprep.subr.mxu0 0.0
    %1882 = vmatpush1.msra.mxu0 0.0
    %1883 = vmatprep.subr.mxu0 0.0
    %1884 = vmatpush1.msra.mxu0 0.0
    %1885 = vmatprep.subr.mxu0 0.0
    %1886 = vmatpush1.msra.mxu0 0.0
    %1887 = vmatprep.subr.mxu0 0.0
    %1888 = vmatpush1.msra.mxu0 0.0
    %1889 = vmatprep.subr.mxu0 0.0
    %1890 = vmatpush1.msra.mxu0 0.0
    %1891 = vmatprep.subr.mxu0 0.0
    %1892 = vmatpush1.msra.mxu0 0.0
    %1893 = vmatprep.subr.mxu0 0.0
    %1894 = vmatpush1.msra.mxu0 0.0
    %1895 = vmatprep.subr.mxu0 0.0
    %1896 = vmatpush1.msra.mxu0 0.0
    %1897 = vmatprep.subr.mxu0 0.0
    %1898 = vmatpush1.msra.mxu0 0.0
    %1899 = vmatprep.subr.mxu0 0.0
    %1900 = vmatpush1.msra.mxu0 0.0
    %1901 = vmatprep.subr.mxu0 0.0
    %1902 = vmatpush1.msra.mxu0 0.0
    %1903 = vmatprep.subr.mxu0 0.0
    %1904 = vmatpush1.msra.mxu0 0.0
    %1905 = vmatprep.subr.mxu0 0.0
    %1906 = vmatpush1.msra.mxu0 0.0
    %1907 = vmatprep.subr.mxu0 0.0
    %1908 = vmatpush1.msra.mxu0 0.0
    %1909 = vmatprep.subr.mxu0 0.0
    %1910 = vmatpush1.msra.mxu0 0.0
    %1911 = vmatprep.subr.mxu0 0.0
    %1912 = vmatpush1.msra.mxu0 0.0
    %1913 = vmatprep.subr.mxu0 0.0
    %1914 = vmatpush1.msra.mxu0 0.0
    %1915 = vmatprep.subr.mxu0 0.0
    %1916 = vmatpush1.msra.mxu0 0.0
    %1917 = vmatprep.mubr.f32.mxu0 0.0
    %1918 = vmatmul.mubr.f32.gmra.mrb[0].mxu0 %v1848
    %v1919 = vpop.f32.mrb[0].mxu0
    %v1920 = vadd.f32 %v50, %v1919
    %v1921 = vpop.f32.mrb[0].mxu0
    %1922 = vmatprep.mubr.f32.mxu0 0.0
    %1923 = vmatmul.mubr.f32.gmra.mrb[0].mxu0 %v1851
    %v1924 = vpop.f32.mrb[0].mxu0
    %v1925 = vadd.f32 %v51, %v1924
    %v1926 = vpop.f32.mrb[0].mxu0
    %1927 = vdwg.mxu0
    %v1928 = vsel %vm350, %v1920, -inf
    %1929 = vmax.xlane.f32.xlu0 %v1928
    %v1930 = vpop.xlane.xlu0 %1929
    %v1931 = vsel %vm350, %v1925, -inf
    %1932 = vmax.xlane.f32.xlu0 %v1931
    %v1933 = vpop.xlane.xlu0 %1932
    %v1934 = vsub.f32 %v1920, %v1930
    %v1935 = vsub.f32 %v1925, %v1933
    %v1936 = vmul.f32 %v1934, 1.442695
    %v1937 = vpow.pop %v1936
    %v1938 = vmul.f32 %v1935, 1.442695
    %v1939 = vpow.pop %v1938
    %v1940 = vsel %vm350, %v1937, 0.0
    %1941 = vadd.xlane.f32.xlu0 %v1940
    %v1942 = vpop.xlane.xlu0 %1941
    %v1943 = vsel %vm350, %v1939, 0.0
    %1944 = vadd.xlane.f32.xlu0 %v1943
    %v1945 = vpop.xlane.xlu0 %1944
    %v1946 = vrcp.pop %v1942
    %v1947 = vmul.f32 %v1937, %v1946
    %v1948 = vrcp.pop %v1945
    %v1949 = vmul.f32 %v1939, %v1948
    %1950 = vrot.lane.b32.xlu0 %v1734, 96
    %v1951 = vpop.permute.xlu0 %1950
    %1952 = vrot.lane.b32.xlu0 %v1739, 96
    %v1953 = vpop.permute.xlu0 %1952
    %v1957 = vsel %vm350, %v1947, 0
    %v1960 = vsel %vm350, %v1949, 0
    %1962 = vmatprep.subr.mxu0 0.0
    %1963 = vmatpush1.msra.mxu0 %v1951
    %1964 = vmatprep.subr.mxu0 0.0
    %1965 = vmatpush1.msra.mxu0 %v1953
    %1966 = vmatprep.subr.mxu0 0.0
    %1967 = vmatpush1.msra.mxu0 0.0
    %1968 = vmatprep.subr.mxu0 0.0
    %1969 = vmatpush1.msra.mxu0 0.0
    %1970 = vmatprep.subr.mxu0 0.0
    %1971 = vmatpush1.msra.mxu0 0.0
    %1972 = vmatprep.subr.mxu0 0.0
    %1973 = vmatpush1.msra.mxu0 0.0
    %1974 = vmatprep.subr.mxu0 0.0
    %1975 = vmatpush1.msra.mxu0 0.0
    %1976 = vmatprep.subr.mxu0 0.0
    %1977 = vmatpush1.msra.mxu0 0.0
    %1978 = vmatprep.subr.mxu0 0.0
    %1979 = vmatpush1.msra.mxu0 0.0
    %1980 = vmatprep.subr.mxu0 0.0
    %1981 = vmatpush1.msra.mxu0 0.0
    %1982 = vmatprep.subr.mxu0 0.0
    %1983 = vmatpush1.msra.mxu0 0.0
    %1984 = vmatprep.subr.mxu0 0.0
    %1985 = vmatpush1.msra.mxu0 0.0
    %1986 = vmatprep.subr.mxu0 0.0
    %1987 = vmatpush1.msra.mxu0 0.0
    %1988 = vmatprep.subr.mxu0 0.0
    %1989 = vmatpush1.msra.mxu0 0.0
    %1990 = vmatprep.subr.mxu0 0.0
    %1991 = vmatpush1.msra.mxu0 0.0
    %1992 = vmatprep.subr.mxu0 0.0
    %1993 = vmatpush1.msra.mxu0 0.0
    %1994 = vmatprep.subr.mxu0 0.0
    %1995 = vmatpush1.msra.mxu0 0.0
    %1996 = vmatprep.subr.mxu0 0.0
    %1997 = vmatpush1.msra.mxu0 0.0
    %1998 = vmatprep.subr.mxu0 0.0
    %1999 = vmatpush1.msra.mxu0 0.0
    %2000 = vmatprep.subr.mxu0 0.0
    %2001 = vmatpush1.msra.mxu0 0.0
    %2002 = vmatprep.subr.mxu0 0.0
    %2003 = vmatpush1.msra.mxu0 0.0
    %2004 = vmatprep.subr.mxu0 0.0
    %2005 = vmatpush1.msra.mxu0 0.0
    %2006 = vmatprep.subr.mxu0 0.0
    %2007 = vmatpush1.msra.mxu0 0.0
    %2008 = vmatprep.subr.mxu0 0.0
    %2009 = vmatpush1.msra.mxu0 0.0
    %2010 = vmatprep.subr.mxu0 0.0
    %2011 = vmatpush1.msra.mxu0 0.0
    %2012 = vmatprep.subr.mxu0 0.0
    %2013 = vmatpush1.msra.mxu0 0.0
    %2014 = vmatprep.subr.mxu0 0.0
    %2015 = vmatpush1.msra.mxu0 0.0
    %2016 = vmatprep.subr.mxu0 0.0
    %2017 = vmatpush1.msra.mxu0 0.0
    %2018 = vmatprep.subr.mxu0 0.0
    %2019 = vmatpush1.msra.mxu0 0.0
    %2020 = vmatprep.subr.mxu0 0.0
    %2021 = vmatpush1.msra.mxu0 0.0
    %2022 = vmatprep.subr.mxu0 0.0
    %2023 = vmatpush1.msra.mxu0 0.0
    %2024 = vmatprep.subr.mxu0 0.0
    %2025 = vmatpush1.msra.mxu0 0.0
    %2026 = vmatprep.mubr.f32.mxu0 0.0
    %2027 = vmatmul.mubr.f32.gmra.mrb[0].mxu0 %v1957
    %v2028 = vpop.f32.mrb[0].mxu0
    %v2029 = vadd.f32 0.0, %v2028
    %v2030 = vpop.f32.mrb[0].mxu0
    %2031 = vmatprep.mubr.f32.mxu0 0.0
    %2032 = vmatmul.mubr.f32.gmra.mrb[0].mxu0 %v1960
    %v2033 = vpop.f32.mrb[0].mxu0
    %v2034 = vadd.f32 0.0, %v2033
    %v2035 = vpop.f32.mrb[0].mxu0
    %2036 = vdwg.mxu0
    %2037 = vrot.lane.b32.xlu0 %v1734, 120
    %v2038 = vpop.permute.xlu0 %2037
    %2039 = vrot.lane.b32.xlu0 %v1739, 120
    %v2040 = vpop.permute.xlu0 %2039
    %v2041 = vsel %vm268, %v2038, 0
    %v2043 = vsel %vm268, %v2040, 0
    %2045 = vmatprep.subr.mxu0 0.0
    %2046 = vmatpush1.msra.mxu0 %v1834
    %2047 = vmatprep.subr.mxu0 0.0
    %2048 = vmatpush1.msra.mxu0 0.0
    %2049 = vmatprep.subr.mxu0 0.0
    %2050 = vmatpush1.msra.mxu0 0.0
    %2051 = vmatprep.subr.mxu0 0.0
    %2052 = vmatpush1.msra.mxu0 0.0
    %2053 = vmatprep.subr.mxu0 0.0
    %2054 = vmatpush1.msra.mxu0 0.0
    %2055 = vmatprep.subr.mxu0 0.0
    %2056 = vmatpush1.msra.mxu0 0.0
    %2057 = vmatprep.subr.mxu0 0.0
    %2058 = vmatpush1.msra.mxu0 0.0
    %2059 = vmatprep.subr.mxu0 0.0
    %2060 = vmatpush1.msra.mxu0 0.0
    %2061 = vmatprep.subr.mxu0 0.0
    %2062 = vmatpush1.msra.mxu0 0.0
    %2063 = vmatprep.subr.mxu0 0.0
    %2064 = vmatpush1.msra.mxu0 0.0
    %2065 = vmatprep.subr.mxu0 0.0
    %2066 = vmatpush1.msra.mxu0 0.0
    %2067 = vmatprep.subr.mxu0 0.0
    %2068 = vmatpush1.msra.mxu0 0.0
    %2069 = vmatprep.subr.mxu0 0.0
    %2070 = vmatpush1.msra.mxu0 0.0
    %2071 = vmatprep.subr.mxu0 0.0
    %2072 = vmatpush1.msra.mxu0 0.0
    %2073 = vmatprep.subr.mxu0 0.0
    %2074 = vmatpush1.msra.mxu0 0.0
    %2075 = vmatprep.subr.mxu0 0.0
    %2076 = vmatpush1.msra.mxu0 0.0
    %2077 = vmatprep.subr.mxu0 0.0
    %2078 = vmatpush1.msra.mxu0 0.0
    %2079 = vmatprep.subr.mxu0 0.0
    %2080 = vmatpush1.msra.mxu0 0.0
    %2081 = vmatprep.subr.mxu0 0.0
    %2082 = vmatpush1.msra.mxu0 0.0
    %2083 = vmatprep.subr.mxu0 0.0
    %2084 = vmatpush1.msra.mxu0 0.0
    %2085 = vmatprep.subr.mxu0 0.0
    %2086 = vmatpush1.msra.mxu0 0.0
    %2087 = vmatprep.subr.mxu0 0.0
    %2088 = vmatpush1.msra.mxu0 0.0
    %2089 = vmatprep.subr.mxu0 0.0
    %2090 = vmatpush1.msra.mxu0 0.0
    %2091 = vmatprep.subr.mxu0 0.0
    %2092 = vmatpush1.msra.mxu0 0.0
    %2093 = vmatprep.subr.mxu0 0.0
    %2094 = vmatpush1.msra.mxu0 0.0
    %2095 = vmatprep.subr.mxu0 0.0
    %2096 = vmatpush1.msra.mxu0 0.0
    %2097 = vmatprep.subr.mxu0 0.0
    %2098 = vmatpush1.msra.mxu0 0.0
    %2099 = vmatprep.subr.mxu0 0.0
    %2100 = vmatpush1.msra.mxu0 0.0
    %2101 = vmatprep.subr.mxu0 0.0
    %2102 = vmatpush1.msra.mxu0 0.0
    %2103 = vmatprep.subr.mxu0 0.0
    %2104 = vmatpush1.msra.mxu0 0.0
    %2105 = vmatprep.subr.mxu0 0.0
    %2106 = vmatpush1.msra.mxu0 0.0
    %2107 = vmatprep.subr.mxu0 0.0
    %2108 = vmatpush1.msra.mxu0 0.0
    %2109 = vmatprep.mubr.f32.mxu0 0.0
    %2110 = vmatmul.mubr.f32.gmra.mrb[0].mxu0 %v2041
    %v2111 = vpop.f32.mrb[0].mxu0
    %v2112 = vadd.f32 %v50, %v2111
    %v2113 = vpop.f32.mrb[0].mxu0
    %2114 = vmatprep.mubr.f32.mxu0 0.0
    %2115 = vmatmul.mubr.f32.gmra.mrb[0].mxu0 %v2043
    %v2116 = vpop.f32.mrb[0].mxu0
    %v2117 = vadd.f32 %v51, %v2116
    %v2118 = vpop.f32.mrb[0].mxu0
    %2119 = vdwg.mxu0
    %v2120 = vsel %vm350, %v2112, -inf
    %2121 = vmax.xlane.f32.xlu0 %v2120
    %v2122 = vpop.xlane.xlu0 %2121
    %v2123 = vsel %vm350, %v2117, -inf
    %2124 = vmax.xlane.f32.xlu0 %v2123
    %v2125 = vpop.xlane.xlu0 %2124
    %v2126 = vsub.f32 %v2112, %v2122
    %v2127 = vsub.f32 %v2117, %v2125
    %v2128 = vmul.f32 %v2126, 1.442695
    %v2129 = vpow.pop %v2128
    %v2130 = vmul.f32 %v2127, 1.442695
    %v2131 = vpow.pop %v2130
    %v2132 = vsel %vm350, %v2129, 0.0
    %2133 = vadd.xlane.f32.xlu0 %v2132
    %v2134 = vpop.xlane.xlu0 %2133
    %v2135 = vsel %vm350, %v2131, 0.0
    %2136 = vadd.xlane.f32.xlu0 %v2135
    %v2137 = vpop.xlane.xlu0 %2136
    %v2138 = vrcp.pop %v2134
    %v2139 = vmul.f32 %v2129, %v2138
    %v2140 = vrcp.pop %v2137
    %v2141 = vmul.f32 %v2131, %v2140
    %2142 = vrot.lane.b32.xlu0 %v1734, 88
    %v2143 = vpop.permute.xlu0 %2142
    %2144 = vrot.lane.b32.xlu0 %v1739, 88
    %v2145 = vpop.permute.xlu0 %2144
    %v2149 = vsel %vm350, %v2139, 0
    %v2152 = vsel %vm350, %v2141, 0
    %2154 = vmatprep.subr.mxu0 0.0
    %2155 = vmatpush1.msra.mxu0 %v2143
    %2156 = vmatprep.subr.mxu0 0.0
    %2157 = vmatpush1.msra.mxu0 %v2145
    %2158 = vmatprep.subr.mxu0 0.0
    %2159 = vmatpush1.msra.mxu0 0.0
    %2160 = vmatprep.subr.mxu0 0.0
    %2161 = vmatpush1.msra.mxu0 0.0
    %2162 = vmatprep.subr.mxu0 0.0
    %2163 = vmatpush1.msra.mxu0 0.0
    %2164 = vmatprep.subr.mxu0 0.0
    %2165 = vmatpush1.msra.mxu0 0.0
    %2166 = vmatprep.subr.mxu0 0.0
    %2167 = vmatpush1.msra.mxu0 0.0
    %2168 = vmatprep.subr.mxu0 0.0
    %2169 = vmatpush1.msra.mxu0 0.0
    %2170 = vmatprep.subr.mxu0 0.0
    %2171 = vmatpush1.msra.mxu0 0.0
    %2172 = vmatprep.subr.mxu0 0.0
    %2173 = vmatpush1.msra.mxu0 0.0
    %2174 = vmatprep.subr.mxu0 0.0
    %2175 = vmatpush1.msra.mxu0 0.0
    %2176 = vmatprep.subr.mxu0 0.0
    %2177 = vmatpush1.msra.mxu0 0.0
    %2178 = vmatprep.subr.mxu0 0.0
    %2179 = vmatpush1.msra.mxu0 0.0
    %2180 = vmatprep.subr.mxu0 0.0
    %2181 = vmatpush1.msra.mxu0 0.0
    %2182 = vmatprep.subr.mxu0 0.0
    %2183 = vmatpush1.msra.mxu0 0.0
    %2184 = vmatprep.subr.mxu0 0.0
    %2185 = vmatpush1.msra.mxu0 0.0
    %2186 = vmatprep.subr.mxu0 0.0
    %2187 = vmatpush1.msra.mxu0 0.0
    %2188 = vmatprep.subr.mxu0 0.0
    %2189 = vmatpush1.msra.mxu0 0.0
    %2190 = vmatprep.subr.mxu0 0.0
    %2191 = vmatpush1.msra.mxu0 0.0
    %2192 = vmatprep.subr.mxu0 0.0
    %2193 = vmatpush1.msra.mxu0 0.0
    %2194 = vmatprep.subr.mxu0 0.0
    %2195 = vmatpush1.msra.mxu0 0.0
    %2196 = vmatprep.subr.mxu0 0.0
    %2197 = vmatpush1.msra.mxu0 0.0
    %2198 = vmatprep.subr.mxu0 0.0
    %2199 = vmatpush1.msra.mxu0 0.0
    %2200 = vmatprep.subr.mxu0 0.0
    %2201 = vmatpush1.msra.mxu0 0.0
    %2202 = vmatprep.subr.mxu0 0.0
    %2203 = vmatpush1.msra.mxu0 0.0
    %2204 = vmatprep.subr.mxu0 0.0
    %2205 = vmatpush1.msra.mxu0 0.0
    %2206 = vmatprep.subr.mxu0 0.0
    %2207 = vmatpush1.msra.mxu0 0.0
    %2208 = vmatprep.subr.mxu0 0.0
    %2209 = vmatpush1.msra.mxu0 0.0
    %2210 = vmatprep.subr.mxu0 0.0
    %2211 = vmatpush1.msra.mxu0 0.0
    %2212 = vmatprep.subr.mxu0 0.0
    %2213 = vmatpush1.msra.mxu0 0.0
    %2214 = vmatprep.subr.mxu0 0.0
    %2215 = vmatpush1.msra.mxu0 0.0
    %2216 = vmatprep.subr.mxu0 0.0
    %2217 = vmatpush1.msra.mxu0 0.0
    %2218 = vmatprep.mubr.f32.mxu0 0.0
    %2219 = vmatmul.mubr.f32.gmra.mrb[0].mxu0 %v2149
    %v2220 = vpop.f32.mrb[0].mxu0
    %v2221 = vadd.f32 0.0, %v2220
    %v2222 = vpop.f32.mrb[0].mxu0
    %2223 = vmatprep.mubr.f32.mxu0 0.0
    %2224 = vmatmul.mubr.f32.gmra.mrb[0].mxu0 %v2152
    %v2225 = vpop.f32.mrb[0].mxu0
    %v2226 = vadd.f32 0.0, %v2225
    %v2227 = vpop.f32.mrb[0].mxu0
    %2228 = vdwg.mxu0
    %2229 = vrot.lane.b32.xlu0 %v1632, 32
    %v2230 = vpop.permute.xlu0 %2229
    %v2233 = vsel %vm268, %v2221, 0
    %v2236 = vsel %vm268, %v2226, 0
    %2238 = vmatprep.subr.mxu0 0.0
    %2239 = vmatpush1.msra.mxu0 %v2230
    %2240 = vmatprep.subr.mxu0 0.0
    %2241 = vmatpush1.msra.mxu0 0.0
    %2242 = vmatprep.subr.mxu0 0.0
    %2243 = vmatpush1.msra.mxu0 0.0
    %2244 = vmatprep.subr.mxu0 0.0
    %2245 = vmatpush1.msra.mxu0 0.0
    %2246 = vmatprep.subr.mxu0 0.0
    %2247 = vmatpush1.msra.mxu0 0.0
    %2248 = vmatprep.subr.mxu0 0.0
    %2249 = vmatpush1.msra.mxu0 0.0
    %2250 = vmatprep.subr.mxu0 0.0
    %2251 = vmatpush1.msra.mxu0 0.0
    %2252 = vmatprep.subr.mxu0 0.0
    %2253 = vmatpush1.msra.mxu0 0.0
    %2254 = vmatprep.subr.mxu0 0.0
    %2255 = vmatpush1.msra.mxu0 0.0
    %2256 = vmatprep.subr.mxu0 0.0
    %2257 = vmatpush1.msra.mxu0 0.0
    %2258 = vmatprep.subr.mxu0 0.0
    %2259 = vmatpush1.msra.mxu0 0.0
    %2260 = vmatprep.subr.mxu0 0.0
    %2261 = vmatpush1.msra.mxu0 0.0
    %2262 = vmatprep.subr.mxu0 0.0
    %2263 = vmatpush1.msra.mxu0 0.0
    %2264 = vmatprep.subr.mxu0 0.0
    %2265 = vmatpush1.msra.mxu0 0.0
    %2266 = vmatprep.subr.mxu0 0.0
    %2267 = vmatpush1.msra.mxu0 0.0
    %2268 = vmatprep.subr.mxu0 0.0
    %2269 = vmatpush1.msra.mxu0 0.0
    %2270 = vmatprep.subr.mxu0 0.0
    %2271 = vmatpush1.msra.mxu0 0.0
    %2272 = vmatprep.subr.mxu0 0.0
    %2273 = vmatpush1.msra.mxu0 0.0
    %2274 = vmatprep.subr.mxu0 0.0
    %2275 = vmatpush1.msra.mxu0 0.0
    %2276 = vmatprep.subr.mxu0 0.0
    %2277 = vmatpush1.msra.mxu0 0.0
    %2278 = vmatprep.subr.mxu0 0.0
    %2279 = vmatpush1.msra.mxu0 0.0
    %2280 = vmatprep.subr.mxu0 0.0
    %2281 = vmatpush1.msra.mxu0 0.0
    %2282 = vmatprep.subr.mxu0 0.0
    %2283 = vmatpush1.msra.mxu0 0.0
    %2284 = vmatprep.subr.mxu0 0.0
    %2285 = vmatpush1.msra.mxu0 0.0
    %2286 = vmatprep.subr.mxu0 0.0
    %2287 = vmatpush1.msra.mxu0 0.0
    %2288 = vmatprep.subr.mxu0 0.0
    %2289 = vmatpush1.msra.mxu0 0.0
    %2290 = vmatprep.subr.mxu0 0.0
    %2291 = vmatpush1.msra.mxu0 0.0
    %2292 = vmatprep.subr.mxu0 0.0
    %2293 = vmatpush1.msra.mxu0 0.0
    %2294 = vmatprep.subr.mxu0 0.0
    %2295 = vmatpush1.msra.mxu0 0.0
    %2296 = vmatprep.subr.mxu0 0.0
    %2297 = vmatpush1.msra.mxu0 0.0
    %2298 = vmatprep.subr.mxu0 0.0
    %2299 = vmatpush1.msra.mxu0 0.0
    %2300 = vmatprep.subr.mxu0 0.0
    %2301 = vmatpush1.msra.mxu0 0.0
    %2302 = vmatprep.mubr.f32.mxu0 0.0
    %2303 = vmatmul.mubr.f32.gmra.mrb[0].mxu0 %v2233
    %v2304 = vpop.f32.mrb[0].mxu0
    %v2305 = vadd.f32 0.0, %v2304
    %v2306 = vpop.f32.mrb[0].mxu0
    %2307 = vmatprep.mubr.f32.mxu0 0.0
    %2308 = vmatmul.mubr.f32.gmra.mrb[0].mxu0 %v2236
    %v2309 = vpop.f32.mrb[0].mxu0
    %v2310 = vadd.f32 0.0, %v2309
    %v2311 = vpop.f32.mrb[0].mxu0
    %2312 = vdwg.mxu0
    %2313 = vrot.lane.b32.xlu0 %v1630, 32
    %v2314 = vpop.permute.xlu0 %2313
    %v2317 = vsel %vm268, %v2029, 0
    %v2320 = vsel %vm268, %v2034, 0
    %2322 = vmatprep.subr.mxu0 0.0
    %2323 = vmatpush1.msra.mxu0 %v2314
    %2324 = vmatprep.subr.mxu0 0.0
    %2325 = vmatpush1.msra.mxu0 0.0
    %2326 = vmatprep.subr.mxu0 0.0
    %2327 = vmatpush1.msra.mxu0 0.0
    %2328 = vmatprep.subr.mxu0 0.0
    %2329 = vmatpush1.msra.mxu0 0.0
    %2330 = vmatprep.subr.mxu0 0.0
    %2331 = vmatpush1.msra.mxu0 0.0
    %2332 = vmatprep.subr.mxu0 0.0
    %2333 = vmatpush1.msra.mxu0 0.0
    %2334 = vmatprep.subr.mxu0 0.0
    %2335 = vmatpush1.msra.mxu0 0.0
    %2336 = vmatprep.subr.mxu0 0.0
    %2337 = vmatpush1.msra.mxu0 0.0
    %2338 = vmatprep.subr.mxu0 0.0
    %2339 = vmatpush1.msra.mxu0 0.0
    %2340 = vmatprep.subr.mxu0 0.0
    %2341 = vmatpush1.msra.mxu0 0.0
    %2342 = vmatprep.subr.mxu0 0.0
    %2343 = vmatpush1.msra.mxu0 0.0
    %2344 = vmatprep.subr.mxu0 0.0
    %2345 = vmatpush1.msra.mxu0 0.0
    %2346 = vmatprep.subr.mxu0 0.0
    %2347 = vmatpush1.msra.mxu0 0.0
    %2348 = vmatprep.subr.mxu0 0.0
    %2349 = vmatpush1.msra.mxu0 0.0
    %2350 = vmatprep.subr.mxu0 0.0
    %2351 = vmatpush1.msra.mxu0 0.0
    %2352 = vmatprep.subr.mxu0 0.0
    %2353 = vmatpush1.msra.mxu0 0.0
    %2354 = vmatprep.subr.mxu0 0.0
    %2355 = vmatpush1.msra.mxu0 0.0
    %2356 = vmatprep.subr.mxu0 0.0
    %2357 = vmatpush1.msra.mxu0 0.0
    %2358 = vmatprep.subr.mxu0 0.0
    %2359 = vmatpush1.msra.mxu0 0.0
    %2360 = vmatprep.subr.mxu0 0.0
    %2361 = vmatpush1.msra.mxu0 0.0
    %2362 = vmatprep.subr.mxu0 0.0
    %2363 = vmatpush1.msra.mxu0 0.0
    %2364 = vmatprep.subr.mxu0 0.0
    %2365 = vmatpush1.msra.mxu0 0.0
    %2366 = vmatprep.subr.mxu0 0.0
    %2367 = vmatpush1.msra.mxu0 0.0
    %2368 = vmatprep.subr.mxu0 0.0
    %2369 = vmatpush1.msra.mxu0 0.0
    %2370 = vmatprep.subr.mxu0 0.0
    %2371 = vmatpush1.msra.mxu0 0.0
    %2372 = vmatprep.subr.mxu0 0.0
    %2373 = vmatpush1.msra.mxu0 0.0
    %2374 = vmatprep.subr.mxu0 0.0
    %2375 = vmatpush1.msra.mxu0 0.0
    %2376 = vmatprep.subr.mxu0 0.0
    %2377 = vmatpush1.msra.mxu0 0.0
    %2378 = vmatprep.subr.mxu0 0.0
    %2379 = vmatpush1.msra.mxu0 0.0
    %2380 = vmatprep.subr.mxu0 0.0
    %2381 = vmatpush1.msra.mxu0 0.0
    %2382 = vmatprep.subr.mxu0 0.0
    %2383 = vmatpush1.msra.mxu0 0.0
    %2384 = vmatprep.subr.mxu0 0.0
    %2385 = vmatpush1.msra.mxu0 0.0
    %2386 = vmatprep.mubr.f32.mxu0 0.0
    %2387 = vmatmul.mubr.f32.gmra.mrb[0].mxu0 %v2317
    %v2388 = vpop.f32.mrb[0].mxu0
    %v2389 = vadd.f32 %v2305, %v2388
    %v2390 = vpop.f32.mrb[0].mxu0
    %2391 = vmatprep.mubr.f32.mxu0 0.0
    %2392 = vmatmul.mubr.f32.gmra.mrb[0].mxu0 %v2320
    %v2393 = vpop.f32.mrb[0].mxu0
    %v2394 = vadd.f32 %v2310, %v2393
    %v2395 = vpop.f32.mrb[0].mxu0
    %2396 = vdwg.mxu0
    %2397 = vrot.lane.b32.xlu0 %v1734, 112
    %v2398 = vpop.permute.xlu0 %2397
    %2399 = vrot.lane.b32.xlu0 %v1739, 112
    %v2400 = vpop.permute.xlu0 %2399
    %v2401 = vsel %vm268, %v2398, 0
    %v2403 = vsel %vm268, %v2400, 0
    %2405 = vmatprep.subr.mxu0 0.0
    %2406 = vmatpush1.msra.mxu0 %v1839
    %2407 = vmatprep.subr.mxu0 0.0
    %2408 = vmatpush1.msra.mxu0 0.0
    %2409 = vmatprep.subr.mxu0 0.0
    %2410 = vmatpush1.msra.mxu0 0.0
    %2411 = vmatprep.subr.mxu0 0.0
    %2412 = vmatpush1.msra.mxu0 0.0
    %2413 = vmatprep.subr.mxu0 0.0
    %2414 = vmatpush1.msra.mxu0 0.0
    %2415 = vmatprep.subr.mxu0 0.0
    %2416 = vmatpush1.msra.mxu0 0.0
    %2417 = vmatprep.subr.mxu0 0.0
    %2418 = vmatpush1.msra.mxu0 0.0
    %2419 = vmatprep.subr.mxu0 0.0
    %2420 = vmatpush1.msra.mxu0 0.0
    %2421 = vmatprep.subr.mxu0 0.0
    %2422 = vmatpush1.msra.mxu0 0.0
    %2423 = vmatprep.subr.mxu0 0.0
    %2424 = vmatpush1.msra.mxu0 0.0
    %2425 = vmatprep.subr.mxu0 0.0
    %2426 = vmatpush1.msra.mxu0 0.0
    %2427 = vmatprep.subr.mxu0 0.0
    %2428 = vmatpush1.msra.mxu0 0.0
    %2429 = vmatprep.subr.mxu0 0.0
    %2430 = vmatpush1.msra.mxu0 0.0
    %2431 = vmatprep.subr.mxu0 0.0
    %2432 = vmatpush1.msra.mxu0 0.0
    %2433 = vmatprep.subr.mxu0 0.0
    %2434 = vmatpush1.msra.mxu0 0.0
    %2435 = vmatprep.subr.mxu0 0.0
    %2436 = vmatpush1.msra.mxu0 0.0
    %2437 = vmatprep.subr.mxu0 0.0
    %2438 = vmatpush1.msra.mxu0 0.0
    %2439 = vmatprep.subr.mxu0 0.0
    %2440 = vmatpush1.msra.mxu0 0.0
    %2441 = vmatprep.subr.mxu0 0.0
    %2442 = vmatpush1.msra.mxu0 0.0
    %2443 = vmatprep.subr.mxu0 0.0
    %2444 = vmatpush1.msra.mxu0 0.0
    %2445 = vmatprep.subr.mxu0 0.0
    %2446 = vmatpush1.msra.mxu0 0.0
    %2447 = vmatprep.subr.mxu0 0.0
    %2448 = vmatpush1.msra.mxu0 0.0
    %2449 = vmatprep.subr.mxu0 0.0
    %2450 = vmatpush1.msra.mxu0 0.0
    %2451 = vmatprep.subr.mxu0 0.0
    %2452 = vmatpush1.msra.mxu0 0.0
    %2453 = vmatprep.subr.mxu0 0.0
    %2454 = vmatpush1.msra.mxu0 0.0
    %2455 = vmatprep.subr.mxu0 0.0
    %2456 = vmatpush1.msra.mxu0 0.0
    %2457 = vmatprep.subr.mxu0 0.0
    %2458 = vmatpush1.msra.mxu0 0.0
    %2459 = vmatprep.subr.mxu0 0.0
    %2460 = vmatpush1.msra.mxu0 0.0
    %2461 = vmatprep.subr.mxu0 0.0
    %2462 = vmatpush1.msra.mxu0 0.0
    %2463 = vmatprep.subr.mxu0 0.0
    %2464 = vmatpush1.msra.mxu0 0.0
    %2465 = vmatprep.subr.mxu0 0.0
    %2466 = vmatpush1.msra.mxu0 0.0
    %2467 = vmatprep.subr.mxu0 0.0
    %2468 = vmatpush1.msra.mxu0 0.0
    %2469 = vmatprep.mubr.f32.mxu0 0.0
    %2470 = vmatmul.mubr.f32.gmra.mrb[0].mxu0 %v2401
    %v2471 = vpop.f32.mrb[0].mxu0
    %v2472 = vadd.f32 %v50, %v2471
    %v2473 = vpop.f32.mrb[0].mxu0
    %2474 = vmatprep.mubr.f32.mxu0 0.0
    %2475 = vmatmul.mubr.f32.gmra.mrb[0].mxu0 %v2403
    %v2476 = vpop.f32.mrb[0].mxu0
    %v2477 = vadd.f32 %v51, %v2476
    %v2478 = vpop.f32.mrb[0].mxu0
    %2479 = vdwg.mxu0
    %v2480 = vsel %vm350, %v2472, -inf
    %2481 = vmax.xlane.f32.xlu0 %v2480
    %v2482 = vpop.xlane.xlu0 %2481
    %v2483 = vsel %vm350, %v2477, -inf
    %2484 = vmax.xlane.f32.xlu0 %v2483
    %v2485 = vpop.xlane.xlu0 %2484
    %v2486 = vsub.f32 %v2472, %v2482
    %v2487 = vsub.f32 %v2477, %v2485
    %v2488 = vmul.f32 %v2486, 1.442695
    %v2489 = vpow.pop %v2488
    %v2490 = vmul.f32 %v2487, 1.442695
    %v2491 = vpow.pop %v2490
    %v2492 = vsel %vm350, %v2489, 0.0
    %2493 = vadd.xlane.f32.xlu0 %v2492
    %v2494 = vpop.xlane.xlu0 %2493
    %v2495 = vsel %vm350, %v2491, 0.0
    %2496 = vadd.xlane.f32.xlu0 %v2495
    %v2497 = vpop.xlane.xlu0 %2496
    %v2498 = vrcp.pop %v2494
    %v2499 = vmul.f32 %v2489, %v2498
    %v2500 = vrcp.pop %v2497
    %v2501 = vmul.f32 %v2491, %v2500
    %2502 = vrot.lane.b32.xlu0 %v1734, 80
    %v2503 = vpop.permute.xlu0 %2502
    %2504 = vrot.lane.b32.xlu0 %v1739, 80
    %v2505 = vpop.permute.xlu0 %2504
    %v2509 = vsel %vm350, %v2499, 0
    %v2512 = vsel %vm350, %v2501, 0
    %2514 = vmatprep.subr.mxu0 0.0
    %2515 = vmatpush1.msra.mxu0 %v2503
    %2516 = vmatprep.subr.mxu0 0.0
    %2517 = vmatpush1.msra.mxu0 %v2505
    %2518 = vmatprep.subr.mxu0 0.0
    %2519 = vmatpush1.msra.mxu0 0.0
    %2520 = vmatprep.subr.mxu0 0.0
    %2521 = vmatpush1.msra.mxu0 0.0
    %2522 = vmatprep.subr.mxu0 0.0
    %2523 = vmatpush1.msra.mxu0 0.0
    %2524 = vmatprep.subr.mxu0 0.0
    %2525 = vmatpush1.msra.mxu0 0.0
    %2526 = vmatprep.subr.mxu0 0.0
    %2527 = vmatpush1.msra.mxu0 0.0
    %2528 = vmatprep.subr.mxu0 0.0
    %2529 = vmatpush1.msra.mxu0 0.0
    %2530 = vmatprep.subr.mxu0 0.0
    %2531 = vmatpush1.msra.mxu0 0.0
    %2532 = vmatprep.subr.mxu0 0.0
    %2533 = vmatpush1.msra.mxu0 0.0
    %2534 = vmatprep.subr.mxu0 0.0
    %2535 = vmatpush1.msra.mxu0 0.0
    %2536 = vmatprep.subr.mxu0 0.0
    %2537 = vmatpush1.msra.mxu0 0.0
    %2538 = vmatprep.subr.mxu0 0.0
    %2539 = vmatpush1.msra.mxu0 0.0
    %2540 = vmatprep.subr.mxu0 0.0
    %2541 = vmatpush1.msra.mxu0 0.0
    %2542 = vmatprep.subr.mxu0 0.0
    %2543 = vmatpush1.msra.mxu0 0.0
    %2544 = vmatprep.subr.mxu0 0.0
    %2545 = vmatpush1.msra.mxu0 0.0
    %2546 = vmatprep.subr.mxu0 0.0
    %2547 = vmatpush1.msra.mxu0 0.0
    %2548 = vmatprep.subr.mxu0 0.0
    %2549 = vmatpush1.msra.mxu0 0.0
    %2550 = vmatprep.subr.mxu0 0.0
    %2551 = vmatpush1.msra.mxu0 0.0
    %2552 = vmatprep.subr.mxu0 0.0
    %2553 = vmatpush1.msra.mxu0 0.0
    %2554 = vmatprep.subr.mxu0 0.0
    %2555 = vmatpush1.msra.mxu0 0.0
    %2556 = vmatprep.subr.mxu0 0.0
    %2557 = vmatpush1.msra.mxu0 0.0
    %2558 = vmatprep.subr.mxu0 0.0
    %2559 = vmatpush1.msra.mxu0 0.0
    %2560 = vmatprep.subr.mxu0 0.0
    %2561 = vmatpush1.msra.mxu0 0.0
    %2562 = vmatprep.subr.mxu0 0.0
    %2563 = vmatpush1.msra.mxu0 0.0
    %2564 = vmatprep.subr.mxu0 0.0
    %2565 = vmatpush1.msra.mxu0 0.0
    %2566 = vmatprep.subr.mxu0 0.0
    %2567 = vmatpush1.msra.mxu0 0.0
    %2568 = vmatprep.subr.mxu0 0.0
    %2569 = vmatpush1.msra.mxu0 0.0
    %2570 = vmatprep.subr.mxu0 0.0
    %2571 = vmatpush1.msra.mxu0 0.0
    %2572 = vmatprep.subr.mxu0 0.0
    %2573 = vmatpush1.msra.mxu0 0.0
    %2574 = vmatprep.subr.mxu0 0.0
    %2575 = vmatpush1.msra.mxu0 0.0
    %2576 = vmatprep.subr.mxu0 0.0
    %2577 = vmatpush1.msra.mxu0 0.0
    %2578 = vmatprep.mubr.f32.mxu0 0.0
    %2579 = vmatmul.mubr.f32.gmra.mrb[0].mxu0 %v2509
    %v2580 = vpop.f32.mrb[0].mxu0
    %v2581 = vadd.f32 0.0, %v2580
    %v2582 = vpop.f32.mrb[0].mxu0
    %2583 = vmatprep.mubr.f32.mxu0 0.0
    %2584 = vmatmul.mubr.f32.gmra.mrb[0].mxu0 %v2512
    %v2585 = vpop.f32.mrb[0].mxu0
    %v2586 = vadd.f32 0.0, %v2585
    %v2587 = vpop.f32.mrb[0].mxu0
    %2588 = vdwg.mxu0
    %2589 = vrot.lane.b32.xlu0 %v1634, 32
    %v2590 = vpop.permute.xlu0 %2589
    %v2593 = vsel %vm268, %v2581, 0
    %v2596 = vsel %vm268, %v2586, 0
    %2598 = vmatprep.subr.mxu0 0.0
    %2599 = vmatpush1.msra.mxu0 %v2590
    %2600 = vmatprep.subr.mxu0 0.0
    %2601 = vmatpush1.msra.mxu0 0.0
    %2602 = vmatprep.subr.mxu0 0.0
    %2603 = vmatpush1.msra.mxu0 0.0
    %2604 = vmatprep.subr.mxu0 0.0
    %2605 = vmatpush1.msra.mxu0 0.0
    %2606 = vmatprep.subr.mxu0 0.0
    %2607 = vmatpush1.msra.mxu0 0.0
    %2608 = vmatprep.subr.mxu0 0.0
    %2609 = vmatpush1.msra.mxu0 0.0
    %2610 = vmatprep.subr.mxu0 0.0
    %2611 = vmatpush1.msra.mxu0 0.0
    %2612 = vmatprep.subr.mxu0 0.0
    %2613 = vmatpush1.msra.mxu0 0.0
    %2614 = vmatprep.subr.mxu0 0.0
    %2615 = vmatpush1.msra.mxu0 0.0
    %2616 = vmatprep.subr.mxu0 0.0
    %2617 = vmatpush1.msra.mxu0 0.0
    %2618 = vmatprep.subr.mxu0 0.0
    %2619 = vmatpush1.msra.mxu0 0.0
    %2620 = vmatprep.subr.mxu0 0.0
    %2621 = vmatpush1.msra.mxu0 0.0
    %2622 = vmatprep.subr.mxu0 0.0
    %2623 = vmatpush1.msra.mxu0 0.0
    %2624 = vmatprep.subr.mxu0 0.0
    %2625 = vmatpush1.msra.mxu0 0.0
    %2626 = vmatprep.subr.mxu0 0.0
    %2627 = vmatpush1.msra.mxu0 0.0
    %2628 = vmatprep.subr.mxu0 0.0
    %2629 = vmatpush1.msra.mxu0 0.0
    %2630 = vmatprep.subr.mxu0 0.0
    %2631 = vmatpush1.msra.mxu0 0.0
    %2632 = vmatprep.subr.mxu0 0.0
    %2633 = vmatpush1.msra.mxu0 0.0
    %2634 = vmatprep.subr.mxu0 0.0
    %2635 = vmatpush1.msra.mxu0 0.0
    %2636 = vmatprep.subr.mxu0 0.0
    %2637 = vmatpush1.msra.mxu0 0.0
    %2638 = vmatprep.subr.mxu0 0.0
    %2639 = vmatpush1.msra.mxu0 0.0
    %2640 = vmatprep.subr.mxu0 0.0
    %2641 = vmatpush1.msra.mxu0 0.0
    %2642 = vmatprep.subr.mxu0 0.0
    %2643 = vmatpush1.msra.mxu0 0.0
    %2644 = vmatprep.subr.mxu0 0.0
    %2645 = vmatpush1.msra.mxu0 0.0
    %2646 = vmatprep.subr.mxu0 0.0
    %2647 = vmatpush1.msra.mxu0 0.0
    %2648 = vmatprep.subr.mxu0 0.0
    %2649 = vmatpush1.msra.mxu0 0.0
    %2650 = vmatprep.subr.mxu0 0.0
    %2651 = vmatpush1.msra.mxu0 0.0
    %2652 = vmatprep.subr.mxu0 0.0
    %2653 = vmatpush1.msra.mxu0 0.0
    %2654 = vmatprep.subr.mxu0 0.0
    %2655 = vmatpush1.msra.mxu0 0.0
    %2656 = vmatprep.subr.mxu0 0.0
    %2657 = vmatpush1.msra.mxu0 0.0
    %2658 = vmatprep.subr.mxu0 0.0
    %2659 = vmatpush1.msra.mxu0 0.0
    %2660 = vmatprep.subr.mxu0 0.0
    %2661 = vmatpush1.msra.mxu0 0.0
    %2662 = vmatprep.mubr.f32.mxu0 0.0
    %2663 = vmatmul.mubr.f32.gmra.mrb[0].mxu0 %v2593
    %v2664 = vpop.f32.mrb[0].mxu0
    %v2665 = vadd.f32 0.0, %v2664
    %v2666 = vpop.f32.mrb[0].mxu0
    %2667 = vmatprep.mubr.f32.mxu0 0.0
    %2668 = vmatmul.mubr.f32.gmra.mrb[0].mxu0 %v2596
    %v2669 = vpop.f32.mrb[0].mxu0
    %v2670 = vadd.f32 0.0, %v2669
    %v2671 = vpop.f32.mrb[0].mxu0
    %2672 = vdwg.mxu0
    %v2673 = vadd.f32 %v2389, %v2665
    %v2674 = vadd.f32 %v2394, %v2670
    %2675 = vrot.lane.b32.xlu0 %v1734, 104
    %v2676 = vpop.permute.xlu0 %2675
    %2677 = vrot.lane.b32.xlu0 %v1739, 104
    %v2678 = vpop.permute.xlu0 %2677
    %v2679 = vsel %vm268, %v2676, 0
    %v2681 = vsel %vm268, %v2678, 0
    %2683 = vmatprep.subr.mxu0 0.0
    %2684 = vmatpush1.msra.mxu0 %v1844
    %2685 = vmatprep.subr.mxu0 0.0
    %2686 = vmatpush1.msra.mxu0 0.0
    %2687 = vmatprep.subr.mxu0 0.0
    %2688 = vmatpush1.msra.mxu0 0.0
    %2689 = vmatprep.subr.mxu0 0.0
    %2690 = vmatpush1.msra.mxu0 0.0
    %2691 = vmatprep.subr.mxu0 0.0
    %2692 = vmatpush1.msra.mxu0 0.0
    %2693 = vmatprep.subr.mxu0 0.0
    %2694 = vmatpush1.msra.mxu0 0.0
    %2695 = vmatprep.subr.mxu0 0.0
    %2696 = vmatpush1.msra.mxu0 0.0
    %2697 = vmatprep.subr.mxu0 0.0
    %2698 = vmatpush1.msra.mxu0 0.0
    %2699 = vmatprep.subr.mxu0 0.0
    %2700 = vmatpush1.msra.mxu0 0.0
    %2701 = vmatprep.subr.mxu0 0.0
    %2702 = vmatpush1.msra.mxu0 0.0
    %2703 = vmatprep.subr.mxu0 0.0
    %2704 = vmatpush1.msra.mxu0 0.0
    %2705 = vmatprep.subr.mxu0 0.0
    %2706 = vmatpush1.msra.mxu0 0.0
    %2707 = vmatprep.subr.mxu0 0.0
    %2708 = vmatpush1.msra.mxu0 0.0
    %2709 = vmatprep.subr.mxu0 0.0
    %2710 = vmatpush1.msra.mxu0 0.0
    %2711 = vmatprep.subr.mxu0 0.0
    %2712 = vmatpush1.msra.mxu0 0.0
    %2713 = vmatprep.subr.mxu0 0.0
    %2714 = vmatpush1.msra.mxu0 0.0
    %2715 = vmatprep.subr.mxu0 0.0
    %2716 = vmatpush1.msra.mxu0 0.0
    %2717 = vmatprep.subr.mxu0 0.0
    %2718 = vmatpush1.msra.mxu0 0.0
    %2719 = vmatprep.subr.mxu0 0.0
    %2720 = vmatpush1.msra.mxu0 0.0
    %2721 = vmatprep.subr.mxu0 0.0
    %2722 = vmatpush1.msra.mxu0 0.0
    %2723 = vmatprep.subr.mxu0 0.0
    %2724 = vmatpush1.msra.mxu0 0.0
    %2725 = vmatprep.subr.mxu0 0.0
    %2726 = vmatpush1.msra.mxu0 0.0
    %2727 = vmatprep.subr.mxu0 0.0
    %2728 = vmatpush1.msra.mxu0 0.0
    %2729 = vmatprep.subr.mxu0 0.0
    %2730 = vmatpush1.msra.mxu0 0.0
    %2731 = vmatprep.subr.mxu0 0.0
    %2732 = vmatpush1.msra.mxu0 0.0
    %2733 = vmatprep.subr.mxu0 0.0
    %2734 = vmatpush1.msra.mxu0 0.0
    %2735 = vmatprep.subr.mxu0 0.0
    %2736 = vmatpush1.msra.mxu0 0.0
    %2737 = vmatprep.subr.mxu0 0.0
    %2738 = vmatpush1.msra.mxu0 0.0
    %2739 = vmatprep.subr.mxu0 0.0
    %2740 = vmatpush1.msra.mxu0 0.0
    %2741 = vmatprep.subr.mxu0 0.0
    %2742 = vmatpush1.msra.mxu0 0.0
    %2743 = vmatprep.subr.mxu0 0.0
    %2744 = vmatpush1.msra.mxu0 0.0
    %2745 = vmatprep.subr.mxu0 0.0
    %2746 = vmatpush1.msra.mxu0 0.0
    %2747 = vmatprep.mubr.f32.mxu0 0.0
    %2748 = vmatmul.mubr.f32.gmra.mrb[0].mxu0 %v2679
    %v2749 = vpop.f32.mrb[0].mxu0
    %v2750 = vadd.f32 %v50, %v2749
    %v2751 = vpop.f32.mrb[0].mxu0
    %2752 = vmatprep.mubr.f32.mxu0 0.0
    %2753 = vmatmul.mubr.f32.gmra.mrb[0].mxu0 %v2681
    %v2754 = vpop.f32.mrb[0].mxu0
    %v2755 = vadd.f32 %v51, %v2754
    %v2756 = vpop.f32.mrb[0].mxu0
    %2757 = vdwg.mxu0
    %v2758 = vsel %vm350, %v2750, -inf
    %2759 = vmax.xlane.f32.xlu0 %v2758
    %v2760 = vpop.xlane.xlu0 %2759
    %v2761 = vsel %vm350, %v2755, -inf
    %2762 = vmax.xlane.f32.xlu0 %v2761
    %v2763 = vpop.xlane.xlu0 %2762
    %v2764 = vsub.f32 %v2750, %v2760
    %v2765 = vsub.f32 %v2755, %v2763
    %v2766 = vmul.f32 %v2764, 1.442695
    %v2767 = vpow.pop %v2766
    %v2768 = vmul.f32 %v2765, 1.442695
    %v2769 = vpow.pop %v2768
    %v2770 = vsel %vm350, %v2767, 0.0
    %2771 = vadd.xlane.f32.xlu0 %v2770
    %v2772 = vpop.xlane.xlu0 %2771
    %v2773 = vsel %vm350, %v2769, 0.0
    %2774 = vadd.xlane.f32.xlu0 %v2773
    %v2775 = vpop.xlane.xlu0 %2774
    %v2776 = vrcp.pop %v2772
    %v2777 = vmul.f32 %v2767, %v2776
    %v2778 = vrcp.pop %v2775
    %v2779 = vmul.f32 %v2769, %v2778
    %2780 = vrot.lane.b32.xlu0 %v1734, 72
    %v2781 = vpop.permute.xlu0 %2780
    %2782 = vrot.lane.b32.xlu0 %v1739, 72
    %v2783 = vpop.permute.xlu0 %2782
    %v2787 = vsel %vm350, %v2777, 0
    %v2790 = vsel %vm350, %v2779, 0
    %2792 = vmatprep.subr.mxu0 0.0
    %2793 = vmatpush1.msra.mxu0 %v2781
    %2794 = vmatprep.subr.mxu0 0.0
    %2795 = vmatpush1.msra.mxu0 %v2783
    %2796 = vmatprep.subr.mxu0 0.0
    %2797 = vmatpush1.msra.mxu0 0.0
    %2798 = vmatprep.subr.mxu0 0.0
    %2799 = vmatpush1.msra.mxu0 0.0
    %2800 = vmatprep.subr.mxu0 0.0
    %2801 = vmatpush1.msra.mxu0 0.0
    %2802 = vmatprep.subr.mxu0 0.0
    %2803 = vmatpush1.msra.mxu0 0.0
    %2804 = vmatprep.subr.mxu0 0.0
    %2805 = vmatpush1.msra.mxu0 0.0
    %2806 = vmatprep.subr.mxu0 0.0
    %2807 = vmatpush1.msra.mxu0 0.0
    %2808 = vmatprep.subr.mxu0 0.0
    %2809 = vmatpush1.msra.mxu0 0.0
    %2810 = vmatprep.subr.mxu0 0.0
    %2811 = vmatpush1.msra.mxu0 0.0
    %2812 = vmatprep.subr.mxu0 0.0
    %2813 = vmatpush1.msra.mxu0 0.0
    %2814 = vmatprep.subr.mxu0 0.0
    %2815 = vmatpush1.msra.mxu0 0.0
    %2816 = vmatprep.subr.mxu0 0.0
    %2817 = vmatpush1.msra.mxu0 0.0
    %2818 = vmatprep.subr.mxu0 0.0
    %2819 = vmatpush1.msra.mxu0 0.0
    %2820 = vmatprep.subr.mxu0 0.0
    %2821 = vmatpush1.msra.mxu0 0.0
    %2822 = vmatprep.subr.mxu0 0.0
    %2823 = vmatpush1.msra.mxu0 0.0
    %2824 = vmatprep.subr.mxu0 0.0
    %2825 = vmatpush1.msra.mxu0 0.0
    %2826 = vmatprep.subr.mxu0 0.0
    %2827 = vmatpush1.msra.mxu0 0.0
    %2828 = vmatprep.subr.mxu0 0.0
    %2829 = vmatpush1.msra.mxu0 0.0
    %2830 = vmatprep.subr.mxu0 0.0
    %2831 = vmatpush1.msra.mxu0 0.0
    %2832 = vmatprep.subr.mxu0 0.0
    %2833 = vmatpush1.msra.mxu0 0.0
    %2834 = vmatprep.subr.mxu0 0.0
    %2835 = vmatpush1.msra.mxu0 0.0
    %2836 = vmatprep.subr.mxu0 0.0
    %2837 = vmatpush1.msra.mxu0 0.0
    %2838 = vmatprep.subr.mxu0 0.0
    %2839 = vmatpush1.msra.mxu0 0.0
    %2840 = vmatprep.subr.mxu0 0.0
    %2841 = vmatpush1.msra.mxu0 0.0
    %2842 = vmatprep.subr.mxu0 0.0
    %2843 = vmatpush1.msra.mxu0 0.0
    %2844 = vmatprep.subr.mxu0 0.0
    %2845 = vmatpush1.msra.mxu0 0.0
    %2846 = vmatprep.subr.mxu0 0.0
    %2847 = vmatpush1.msra.mxu0 0.0
    %2848 = vmatprep.subr.mxu0 0.0
    %2849 = vmatpush1.msra.mxu0 0.0
    %2850 = vmatprep.subr.mxu0 0.0
    %2851 = vmatpush1.msra.mxu0 0.0
    %2852 = vmatprep.subr.mxu0 0.0
    %2853 = vmatpush1.msra.mxu0 0.0
    %2854 = vmatprep.subr.mxu0 0.0
    %2855 = vmatpush1.msra.mxu0 0.0
    %2856 = vmatprep.mubr.f32.mxu0 0.0
    %2857 = vmatmul.mubr.f32.gmra.mrb[0].mxu0 %v2787
    %v2858 = vpop.f32.mrb[0].mxu0
    %v2859 = vadd.f32 0.0, %v2858
    %v2860 = vpop.f32.mrb[0].mxu0
    %2861 = vmatprep.mubr.f32.mxu0 0.0
    %2862 = vmatmul.mubr.f32.gmra.mrb[0].mxu0 %v2790
    %v2863 = vpop.f32.mrb[0].mxu0
    %v2864 = vadd.f32 0.0, %v2863
    %v2865 = vpop.f32.mrb[0].mxu0
    %2866 = vdwg.mxu0
    %2867 = vrot.lane.b32.xlu0 %v1636, 32
    %v2868 = vpop.permute.xlu0 %2867
    %v2871 = vsel %vm268, %v2859, 0
    %v2874 = vsel %vm268, %v2864, 0
    %2876 = vmatprep.subr.mxu0 0.0
    %2877 = vmatpush1.msra.mxu0 %v2868
    %2878 = vmatprep.subr.mxu0 0.0
    %2879 = vmatpush1.msra.mxu0 0.0
    %2880 = vmatprep.subr.mxu0 0.0
    %2881 = vmatpush1.msra.mxu0 0.0
    %2882 = vmatprep.subr.mxu0 0.0
    %2883 = vmatpush1.msra.mxu0 0.0
    %2884 = vmatprep.subr.mxu0 0.0
    %2885 = vmatpush1.msra.mxu0 0.0
    %2886 = vmatprep.subr.mxu0 0.0
    %2887 = vmatpush1.msra.mxu0 0.0
    %2888 = vmatprep.subr.mxu0 0.0
    %2889 = vmatpush1.msra.mxu0 0.0
    %2890 = vmatprep.subr.mxu0 0.0
    %2891 = vmatpush1.msra.mxu0 0.0
    %2892 = vmatprep.subr.mxu0 0.0
    %2893 = vmatpush1.msra.mxu0 0.0
    %2894 = vmatprep.subr.mxu0 0.0
    %2895 = vmatpush1.msra.mxu0 0.0
    %2896 = vmatprep.subr.mxu0 0.0
    %2897 = vmatpush1.msra.mxu0 0.0
    %2898 = vmatprep.subr.mxu0 0.0
    %2899 = vmatpush1.msra.mxu0 0.0
    %2900 = vmatprep.subr.mxu0 0.0
    %2901 = vmatpush1.msra.mxu0 0.0
    %2902 = vmatprep.subr.mxu0 0.0
    %2903 = vmatpush1.msra.mxu0 0.0
    %2904 = vmatprep.subr.mxu0 0.0
    %2905 = vmatpush1.msra.mxu0 0.0
    %2906 = vmatprep.subr.mxu0 0.0
    %2907 = vmatpush1.msra.mxu0 0.0
    %2908 = vmatprep.subr.mxu0 0.0
    %2909 = vmatpush1.msra.mxu0 0.0
    %2910 = vmatprep.subr.mxu0 0.0
    %2911 = vmatpush1.msra.mxu0 0.0
    %2912 = vmatprep.subr.mxu0 0.0
    %2913 = vmatpush1.msra.mxu0 0.0
    %2914 = vmatprep.subr.mxu0 0.0
    %2915 = vmatpush1.msra.mxu0 0.0
    %2916 = vmatprep.subr.mxu0 0.0
    %2917 = vmatpush1.msra.mxu0 0.0
    %2918 = vmatprep.subr.mxu0 0.0
    %2919 = vmatpush1.msra.mxu0 0.0
    %2920 = vmatprep.subr.mxu0 0.0
    %2921 = vmatpush1.msra.mxu0 0.0
    %2922 = vmatprep.subr.mxu0 0.0
    %2923 = vmatpush1.msra.mxu0 0.0
    %2924 = vmatprep.subr.mxu0 0.0
    %2925 = vmatpush1.msra.mxu0 0.0
    %2926 = vmatprep.subr.mxu0 0.0
    %2927 = vmatpush1.msra.mxu0 0.0
    %2928 = vmatprep.subr.mxu0 0.0
    %2929 = vmatpush1.msra.mxu0 0.0
    %2930 = vmatprep.subr.mxu0 0.0
    %2931 = vmatpush1.msra.mxu0 0.0
    %2932 = vmatprep.subr.mxu0 0.0
    %2933 = vmatpush1.msra.mxu0 0.0
    %2934 = vmatprep.subr.mxu0 0.0
    %2935 = vmatpush1.msra.mxu0 0.0
    %2936 = vmatprep.subr.mxu0 0.0
    %2937 = vmatpush1.msra.mxu0 0.0
    %2938 = vmatprep.subr.mxu0 0.0
    %2939 = vmatpush1.msra.mxu0 0.0
    %2940 = vmatprep.mubr.f32.mxu0 0.0
    %2941 = vmatmul.mubr.f32.gmra.mrb[0].mxu0 %v2871
    %v2942 = vpop.f32.mrb[0].mxu0
    %v2943 = vadd.f32 0.0, %v2942
    %v2944 = vpop.f32.mrb[0].mxu0
    %2945 = vmatprep.mubr.f32.mxu0 0.0
    %2946 = vmatmul.mubr.f32.gmra.mrb[0].mxu0 %v2874
    %v2947 = vpop.f32.mrb[0].mxu0
    %v2948 = vadd.f32 0.0, %v2947
    %v2949 = vpop.f32.mrb[0].mxu0
    %2950 = vdwg.mxu0
    %v2951 = vadd.f32 %v2673, %v2943
    %v2952 = vadd.f32 %v2674, %v2948
    %v2953 = vlaneseq
    %v2954 = vshrl.u32 %v2953, 7
    %v2955 = vsub.s32 1, %v2954
    %v2956 = vrot.slane %v1656, %v2955
    %v2957 = vadd.f32 %v2951, %v2956
    %v2958 = vadd.f32 %v2952, %v2956
    %v2959 = vadd.f32 %v1627, %v2957
    %v2960 = vadd.f32 %v1628, %v2958
    %v2961 = vsel %vm81, %v2959, 0.0
    %2962 = vadd.xlane.f32.xlu0 %v2961
    %v2963 = vpop.xlane.xlu0 %2962
    %v2964 = vsel %vm81, %v2960, 0.0
    %2965 = vadd.xlane.f32.xlu0 %v2964
    %v2966 = vpop.xlane.xlu0 %2965
    %v2967 = vmul.f32 %v2963, %v1390
    %v2968 = vmul.f32 %v2966, %v1390
    %v2969 = vsub.f32 %v2959, %v2967
    %v2970 = vsub.f32 %v2960, %v2968
    %v2971 = vmul.f32 %v2969, %v2969
    %v2972 = vmul.f32 %v2970, %v2970
    %v2973 = vsel %vm81, %v2971, 0.0
    %2974 = vadd.xlane.f32.xlu0 %v2973
    %v2975 = vpop.xlane.xlu0 %2974
    %v2976 = vsel %vm81, %v2972, 0.0
    %2977 = vadd.xlane.f32.xlu0 %v2976
    %v2978 = vpop.xlane.xlu0 %2977
    %v2979 = vmul.f32 %v2975, %v1390
    %v2980 = vmul.f32 %v2978, %v1390
    %v2981 = vadd.f32 %v2979, 1e-05
    %v2982 = vadd.f32 %v2980, 1e-05
    %v2983 = vrsqrt.pop %v2981
    %v2984 = vrsqrt.pop %v2982
    %v2985 = vmul.f32 %v2969, %v2983
    %v2986 = vmul.f32 %v2970, %v2984
    %v2987 = vlaneseq
    %v2988 = vshrl.u32 %v2987, 7
    %v2989 = vsub.s32 2, %v2988
    %v2990 = vrot.slane %v1656, %v2989
    %v2991 = vmul.f32 %v2985, %v2990
    %v2992 = vmul.f32 %v2986, %v2990
    %v2993 = vlaneseq
    %v2994 = vshrl.u32 %v2993, 7
    %v2995 = vsub.s32 3, %v2994
    %v2996 = vrot.slane %v1656, %v2995
    %v2997 = vadd.f32 %v2991, %v2996
    %v2998 = vadd.f32 %v2992, %v2996
    %v2999 = vlaneseq
    %v3000 = vshrl.u32 %v2999, 7
    %v3001 = vsub.s32 4, %v3000
    %v3002 = vrot.slane %v1656, %v3001
    %v3004 = vsel %vm81, %v2997, 0
    %v3007 = vsel %vm81, %v2998, 0
    %3009 = vmatprep.subr.mxu0 0.0
    %3010 = vmatpush1.msra.mxu0 %v1631
    %3011 = vmatprep.subr.mxu0 0.0
    %3012 = vmatpush1.msra.mxu0 %v1633
    %3013 = vmatprep.subr.mxu0 0.0
    %3014 = vmatpush1.msra.mxu0 %v1635
    %3015 = vmatprep.subr.mxu0 0.0
    %3016 = vmatpush1.msra.mxu0 %v1637
    %3017 = vmatprep.subr.mxu0 0.0
    %3018 = vmatpush1.msra.mxu0 0.0
    %3019 = vmatprep.subr.mxu0 0.0
    %3020 = vmatpush1.msra.mxu0 0.0
    %3021 = vmatprep.subr.mxu0 0.0
    %3022 = vmatpush1.msra.mxu0 0.0
    %3023 = vmatprep.subr.mxu0 0.0
    %3024 = vmatpush1.msra.mxu0 0.0
    %3025 = vmatprep.subr.mxu0 0.0
    %3026 = vmatpush1.msra.mxu0 0.0
    %3027 = vmatprep.subr.mxu0 0.0
    %3028 = vmatpush1.msra.mxu0 0.0
    %3029 = vmatprep.subr.mxu0 0.0
    %3030 = vmatpush1.msra.mxu0 0.0
    %3031 = vmatprep.subr.mxu0 0.0
    %3032 = vmatpush1.msra.mxu0 0.0
    %3033 = vmatprep.subr.mxu0 0.0
    %3034 = vmatpush1.msra.mxu0 0.0
    %3035 = vmatprep.subr.mxu0 0.0
    %3036 = vmatpush1.msra.mxu0 0.0
    %3037 = vmatprep.subr.mxu0 0.0
    %3038 = vmatpush1.msra.mxu0 0.0
    %3039 = vmatprep.subr.mxu0 0.0
    %3040 = vmatpush1.msra.mxu0 0.0
    %3041 = vmatprep.subr.mxu0 0.0
    %3042 = vmatpush1.msra.mxu0 0.0
    %3043 = vmatprep.subr.mxu0 0.0
    %3044 = vmatpush1.msra.mxu0 0.0
    %3045 = vmatprep.subr.mxu0 0.0
    %3046 = vmatpush1.msra.mxu0 0.0
    %3047 = vmatprep.subr.mxu0 0.0
    %3048 = vmatpush1.msra.mxu0 0.0
    %3049 = vmatprep.subr.mxu0 0.0
    %3050 = vmatpush1.msra.mxu0 0.0
    %3051 = vmatprep.subr.mxu0 0.0
    %3052 = vmatpush1.msra.mxu0 0.0
    %3053 = vmatprep.subr.mxu0 0.0
    %3054 = vmatpush1.msra.mxu0 0.0
    %3055 = vmatprep.subr.mxu0 0.0
    %3056 = vmatpush1.msra.mxu0 0.0
    %3057 = vmatprep.subr.mxu0 0.0
    %3058 = vmatpush1.msra.mxu0 0.0
    %3059 = vmatprep.subr.mxu0 0.0
    %3060 = vmatpush1.msra.mxu0 0.0
    %3061 = vmatprep.subr.mxu0 0.0
    %3062 = vmatpush1.msra.mxu0 0.0
    %3063 = vmatprep.subr.mxu0 0.0
    %3064 = vmatpush1.msra.mxu0 0.0
    %3065 = vmatprep.subr.mxu0 0.0
    %3066 = vmatpush1.msra.mxu0 0.0
    %3067 = vmatprep.subr.mxu0 0.0
    %3068 = vmatpush1.msra.mxu0 0.0
    %3069 = vmatprep.subr.mxu0 0.0
    %3070 = vmatpush1.msra.mxu0 0.0
    %3071 = vmatprep.subr.mxu0 0.0
    %3072 = vmatpush1.msra.mxu0 0.0
    %3073 = vmatprep.mubr.f32.mxu0 0.0
    %3074 = vmatmul.mubr.f32.gmra.mrb[0].mxu0 %v3004
    %v3075 = vpop.f32.mrb[0].mxu0
    %v3076 = vadd.f32 %v3002, %v3075
    %v3077 = vpop.f32.mrb[0].mxu0
    %3078 = vmatprep.mubr.f32.mxu0 0.0
    %3079 = vmatmul.mubr.f32.gmra.mrb[0].mxu0 %v3007
    %v3080 = vpop.f32.mrb[0].mxu0
    %v3081 = vadd.f32 %v3002, %v3080
    %v3082 = vpop.f32.mrb[0].mxu0
    %3083 = vdwg.mxu0
    %v3084 = vmax.f32 %v3076, 0.0
    %v3085 = vmax.f32 %v3081, 0.0
    %v3086 = vlaneseq
    %v3087 = vshrl.u32 %v3086, 7
    %v3088 = vsub.s32 5, %v3087
    %v3089 = vrot.slane %v1656, %v3088
    %3090 = vmatprep.subr.mxu0 0.0
    %3091 = vmatpush1.msra.mxu0 %v1639
    %3092 = vmatprep.subr.mxu0 0.0
    %3093 = vmatpush1.msra.mxu0 %v1640
    %3094 = vmatprep.subr.mxu0 0.0
    %3095 = vmatpush1.msra.mxu0 %v1641
    %3096 = vmatprep.subr.mxu0 0.0
    %3097 = vmatpush1.msra.mxu0 %v1642
    %3098 = vmatprep.subr.mxu0 0.0
    %3099 = vmatpush1.msra.mxu0 %v1643
    %3100 = vmatprep.subr.mxu0 0.0
    %3101 = vmatpush1.msra.mxu0 %v1644
    %3102 = vmatprep.subr.mxu0 0.0
    %3103 = vmatpush1.msra.mxu0 %v1645
    %3104 = vmatprep.subr.mxu0 0.0
    %3105 = vmatpush1.msra.mxu0 %v1646
    %3106 = vmatprep.subr.mxu0 0.0
    %3107 = vmatpush1.msra.mxu0 %v1647
    %3108 = vmatprep.subr.mxu0 0.0
    %3109 = vmatpush1.msra.mxu0 %v1648
    %3110 = vmatprep.subr.mxu0 0.0
    %3111 = vmatpush1.msra.mxu0 %v1649
    %3112 = vmatprep.subr.mxu0 0.0
    %3113 = vmatpush1.msra.mxu0 %v1650
    %3114 = vmatprep.subr.mxu0 0.0
    %3115 = vmatpush1.msra.mxu0 %v1651
    %3116 = vmatprep.subr.mxu0 0.0
    %3117 = vmatpush1.msra.mxu0 %v1652
    %3118 = vmatprep.subr.mxu0 0.0
    %3119 = vmatpush1.msra.mxu0 %v1653
    %3120 = vmatprep.subr.mxu0 0.0
    %3121 = vmatpush1.msra.mxu0 %v1654
    %3122 = vmatprep.subr.mxu0 0.0
    %3123 = vmatpush1.msra.mxu0 0.0
    %3124 = vmatprep.subr.mxu0 0.0
    %3125 = vmatpush1.msra.mxu0 0.0
    %3126 = vmatprep.subr.mxu0 0.0
    %3127 = vmatpush1.msra.mxu0 0.0
    %3128 = vmatprep.subr.mxu0 0.0
    %3129 = vmatpush1.msra.mxu0 0.0
    %3130 = vmatprep.subr.mxu0 0.0
    %3131 = vmatpush1.msra.mxu0 0.0
    %3132 = vmatprep.subr.mxu0 0.0
    %3133 = vmatpush1.msra.mxu0 0.0
    %3134 = vmatprep.subr.mxu0 0.0
    %3135 = vmatpush1.msra.mxu0 0.0
    %3136 = vmatprep.subr.mxu0 0.0
    %3137 = vmatpush1.msra.mxu0 0.0
    %3138 = vmatprep.subr.mxu0 0.0
    %3139 = vmatpush1.msra.mxu0 0.0
    %3140 = vmatprep.subr.mxu0 0.0
    %3141 = vmatpush1.msra.mxu0 0.0
    %3142 = vmatprep.subr.mxu0 0.0
    %3143 = vmatpush1.msra.mxu0 0.0
    %3144 = vmatprep.subr.mxu0 0.0
    %3145 = vmatpush1.msra.mxu0 0.0
    %3146 = vmatprep.subr.mxu0 0.0
    %3147 = vmatpush1.msra.mxu0 0.0
    %3148 = vmatprep.subr.mxu0 0.0
    %3149 = vmatpush1.msra.mxu0 0.0
    %3150 = vmatprep.subr.mxu0 0.0
    %3151 = vmatpush1.msra.mxu0 0.0
    %3152 = vmatprep.subr.mxu0 0.0
    %3153 = vmatpush1.msra.mxu0 0.0
    %3154 = vmatprep.mubr.f32.mxu0 0.0
    %3155 = vmatmul.mubr.f32.gmra.mrb[0].mxu0 %v3084
    %v3156 = vpop.f32.mrb[0].mxu0
    %v3157 = vadd.f32 %v3089, %v3156
    %v3158 = vpop.f32.mrb[0].mxu0
    %3159 = vmatprep.mubr.f32.mxu0 0.0
    %3160 = vmatmul.mubr.f32.gmra.mrb[0].mxu0 %v3085
    %v3161 = vpop.f32.mrb[0].mxu0
    %v3162 = vadd.f32 %v3089, %v3161
    %v3163 = vpop.f32.mrb[0].mxu0
    %3164 = vdwg.mxu0
    %v3165 = vadd.f32 %v2997, %v3157
    %v3166 = vadd.f32 %v2998, %v3162
    %v3167 = vsel %vm81, %v3165, 0.0
    %3168 = vadd.xlane.f32.xlu0 %v3167
    %v3169 = vpop.xlane.xlu0 %3168
    %v3170 = vsel %vm81, %v3166, 0.0
    %3171 = vadd.xlane.f32.xlu0 %v3170
    %v3172 = vpop.xlane.xlu0 %3171
    %v3173 = vmul.f32 %v3169, %v1390
    %v3174 = vmul.f32 %v3172, %v1390
    %v3175 = vsub.f32 %v3165, %v3173
    %v3176 = vsub.f32 %v3166, %v3174
    %v3177 = vmul.f32 %v3175, %v3175
    %v3178 = vmul.f32 %v3176, %v3176
    %v3179 = vsel %vm81, %v3177, 0.0
    %3180 = vadd.xlane.f32.xlu0 %v3179
    %v3181 = vpop.xlane.xlu0 %3180
    %v3182 = vsel %vm81, %v3178, 0.0
    %3183 = vadd.xlane.f32.xlu0 %v3182
    %v3184 = vpop.xlane.xlu0 %3183
    %v3185 = vmul.f32 %v3181, %v1390
    %v3186 = vmul.f32 %v3184, %v1390
    %v3187 = vadd.f32 %v3185, 1e-05
    %v3188 = vadd.f32 %v3186, 1e-05
    %v3189 = vrsqrt.pop %v3187
    %v3190 = vrsqrt.pop %v3188
    %v3191 = vmul.f32 %v3175, %v3189
    %v3192 = vmul.f32 %v3176, %v3190
    %v3193 = vlaneseq
    %v3194 = vshrl.u32 %v3193, 7
    %v3195 = vsub.s32 6, %v3194
    %v3196 = vrot.slane %v1656, %v3195
    %v3197 = vmul.f32 %v3191, %v3196
    %v3198 = vmul.f32 %v3192, %v3196
    %v3199 = vlaneseq
    %v3200 = vshrl.u32 %v3199, 7
    %v3201 = vsub.s32 7, %v3200
    %v3202 = vrot.slane %v1656, %v3201
    %v3203 = vadd.f32 %v3197, %v3202
    %v3204 = vadd.f32 %v3198, %v3202
    %3205 = vst.msk [vmem:[#allocation2] sm:$0xff] %vm81, %v3203
    %3206 = vst.msk [vmem:[#allocation2 + $0x8] sm:$0xff] %vm81, %v3204
    // Predicated region
    $region22: #{tpu_custom_call.1} parent=1 // pred_check
      _
    $region23: #{tpu_custom_call.1} parent=1 // pred_check_branch
      %3208 = sbr.rel (0) target = $region25
    $region24: #{tpu_custom_call.1} parent=1 // pred_region
      %s3210 = ssub.s32 256, 256
      %3211 = vsyncadd [#allocation3], %s3210
      %s3212 = sshll.u32 [#allocation2], 4
      %s3213 = int_to_ptr.vmem [resolvable:$true] %s3212
      %3218 = dma.vmem_to_hbm [thread:$0]  %s3213, 256, %s5, [#allocation3], 128, 128, 8
    $region25: #{tpu_custom_call.1} parent=1 // pred_fallthru
      _
    // Predicated region
    $region26: #{tpu_custom_call.1} parent=1 // pred_check
      _
    $region27: #{tpu_custom_call.1} parent=1 // pred_check_branch
      %3220 = sbr.rel (0) target = $region29
    $region28: #{tpu_custom_call.1} parent=1 // pred_region
      %3221 = dma.done [#allocation3], 256
    $region29: #{tpu_custom_call.1} parent=1 // pred_fallthru
      _
    %3222 = vsyncpa [#allocation3], 1

</llo_original>
